<compile_context>
chip_gen: v6e
topology: v6e:2x2x1
jax: 0.10.0
libtpu: 0.0.40
codegen_flags: <defaults>
</compile_context>

<pallas_src>
import functools

import jax
import jax.numpy as jnp
import numpy as np
from jax.experimental import pallas as pl
from jax.experimental.pallas import tpu as pltpu

EPS = 1e-5
# Scoped-VMEM cap: above v5e's 16 MiB default, below v7x's 64 MiB physical.
# The per-tile working set here is far smaller; this only raises the ceiling.
_VMEM_LIMIT_BYTES = 48 * 1024 * 1024


# --------------------------- in-kernel helpers ---------------------------
def _zero_pad_into(pad_ref, interior):
    """Write `interior` into pad_ref[:, 1:-1, 1:-1, :]; zero ONLY the halo."""
    tn, hp, wp, cc = pad_ref.shape
    dt = pad_ref.dtype
    pad_ref[:, 0:1, :, :] = jnp.zeros((tn, 1, wp, cc), dt)
    pad_ref[:, hp - 1:hp, :, :] = jnp.zeros((tn, 1, wp, cc), dt)
    pad_ref[:, :, 0:1, :] = jnp.zeros((tn, hp, 1, cc), dt)
    pad_ref[:, :, wp - 1:wp, :] = jnp.zeros((tn, hp, 1, cc), dt)
    pad_ref[:, 1:hp - 1, 1:wp - 1, :] = interior.astype(dt)


def _conv3x3_im2col(pad_ref, w_ref, out_h, out_w, stride):
    """3x3 conv over the padded scratch as ONE MXU matmul (im2col, K=9*Cin)."""
    tn, _, _, cc = pad_ref.shape
    m = tn * out_h * out_w
    taps = []
    for kh in range(3):
        for kw in range(3):
            if stride == 1:
                t = pad_ref[:, kh:kh + out_h, kw:kw + out_w, :]
            else:
                # Strided reads straight from the padded scratch: no dense
                # over-compute and no subsample gather for stride > 1.
                t = pad_ref[:, pl.ds(kh, out_h, stride=stride),
                            pl.ds(kw, out_w, stride=stride), :]
            taps.append(t.reshape(m, cc))
    patch = jnp.concatenate(taps, axis=-1)                 # (m, 9*Cin), f32
    return jnp.dot(patch.astype(jnp.bfloat16), w_ref[...],
                   preferred_element_type=jnp.float32)     # (m, Cout), f32


def _partial_stats(y2d):
    """One-pass BN partials for this tile: (sum, sum_sq) per channel."""
    return (jnp.sum(y2d, axis=0, keepdims=True),
            jnp.sum(y2d * y2d, axis=0, keepdims=True))


def _bn_scale_shift(stats_ref, gb_ref, count):
    """Fold full-batch one-pass stats into per-channel affine y*a + b."""
    tot = jnp.sum(stats_ref[...], axis=0)           # (2, C): [sum; sum_sq]
    inv_n = 1.0 / count
    mean = tot[0:1, :] * inv_n
    var = tot[1:2, :] * inv_n - mean * mean          # biased, like PyTorch
    a = gb_ref[0:1, :] * jax.lax.rsqrt(var + EPS)
    b = gb_ref[1:2, :] - mean * a
    return a, b


# ------------------------------- kernels ---------------------------------
def _stage1_kernel(x_ref, w_ref, *refs, stride, has_proj):
    if has_proj:
        y1_ref, ys_ref, s1_ref, ss_ref, pad_ref = refs
    else:
        y1_ref, s1_ref, pad_ref = refs
    tn, ho, wo, c = y1_ref.shape

    _zero_pad_into(pad_ref, x_ref[...])
    # conv1 and (if present) the 1x1 projection shortcut in ONE matmul: the
    # shortcut weights live in output columns [C:2C) on the centre tap.
    y_all = _conv3x3_im2col(pad_ref, w_ref, ho, wo, stride)

    y1 = y_all[:, :c]
    y1_ref[...] = y1.reshape(tn, ho, wo, c)
    s, sq = _partial_stats(y1)
    s1_ref[0, 0:1, :] = s
    s1_ref[0, 1:2, :] = sq
    if has_proj:
        ys = y_all[:, c:]
        ys_ref[...] = ys.reshape(tn, ho, wo, c)
        s, sq = _partial_stats(ys)
        ss_ref[0, 0:1, :] = s
        ss_ref[0, 1:2, :] = sq


def _stage2_kernel(y1_ref, s1_ref, gb1_ref, w2_ref, y2_ref, s2_ref, pad_ref, *,
                   count):
    tn, ho, wo, c = y1_ref.shape
    m = tn * ho * wo
    a1, b1 = _bn_scale_shift(s1_ref, gb1_ref, count)
    h1 = jnp.maximum(y1_ref[...].reshape(m, c) * a1 + b1, 0.0)   # BN1 + ReLU
    _zero_pad_into(pad_ref, h1.reshape(tn, ho, wo, c))
    y2 = _conv3x3_im2col(pad_ref, w2_ref, ho, wo, 1)
    y2_ref[...] = y2.reshape(tn, ho, wo, c)
    s, sq = _partial_stats(y2)
    s2_ref[0, 0:1, :] = s
    s2_ref[0, 1:2, :] = sq


def _stage3_kernel(y2_ref, s2_ref, gb2_ref, *refs, count, has_proj):
    if has_proj:
        ys_ref, ss_ref, gbs_ref, o_ref = refs
    else:
        x_ref, o_ref = refs
    tn, ho, wo, c = y2_ref.shape
    m = tn * ho * wo
    a2, b2 = _bn_scale_shift(s2_ref, gb2_ref, count)
    out = y2_ref[...].reshape(m, c) * a2 + b2
    if has_proj:
        a_s, b_s = _bn_scale_shift(ss_ref, gbs_ref, count)
        out = out + ys_ref[...].reshape(m, c) * a_s + b_s
    else:
        out = out + x_ref[...].reshape(m, c)
    o_ref[...] = jnp.maximum(out, 0.0).reshape(tn, ho, wo, c)


# ------------------------------- wrapper ----------------------------------
def basic_block_nhwc(x, params, stride=1, block_n=1):
    """BasicBlock forward, NHWC in / NHWC out (preferred TPU layout)."""
    n, h, w, cin = x.shape
    c = params['w1'].shape[-1]
    # PyTorch output size for k=3/pad=1 (and k=1/pad=0) convs at `stride`.
    ho = (h - 1) // stride + 1
    wo = (w - 1) // stride + 1
    has_proj = (stride != 1) or (cin != c)
    assert n % block_n == 0, "batch must be divisible by the batch tile"
    tn, g = block_n, n // block_n
    count = n * ho * wo                         # full-batch BN element count

    f32, bf16 = jnp.float32, jnp.bfloat16
    x = x.astype(f32)
    w1 = params['w1'].reshape(9 * cin, c).astype(f32)   # rows: (kh*3+kw)*Cin+ci
    if has_proj:
        # Fuse the 1x1 projection shortcut into conv1's matmul: its weights go
        # on the centre tap (kh=kw=1 -> rows [4*Cin, 5*Cin)), columns [C, 2C).
        ws_rows = jnp.zeros((9 * cin, c), f32).at[4 * cin:5 * cin, :].set(
            params['ws'].astype(f32))
        w_s1 = jnp.concatenate([w1, ws_rows], axis=1).astype(bf16)
    else:
        w_s1 = w1.astype(bf16)
    w2 = params['w2'].reshape(9 * c, c).astype(bf16)
    gb1 = jnp.stack([params['g1'], params['b1']]).astype(f32)    # (2, C)
    gb2 = jnp.stack([params['g2'], params['b2']]).astype(f32)

    cparams = pltpu.CompilerParams(dimension_semantics=("parallel",),
                                   vmem_limit_bytes=_VMEM_LIMIT_BYTES)
    blk_x = pl.BlockSpec((tn, h, w, cin), lambda i: (i, 0, 0, 0))
    blk_y = pl.BlockSpec((tn, ho, wo, c), lambda i: (i, 0, 0, 0))
    blk_s = pl.BlockSpec((1, 2, c), lambda i: (i, 0, 0))

    def full(shape):
        return pl.BlockSpec(shape, lambda i: (0,) * len(shape))

    act_shape = jax.ShapeDtypeStruct((n, ho, wo, c), f32)
    stat_shape = jax.ShapeDtypeStruct((g, 2, c), f32)

    # ---- stage 1: conv1 (+ fused 1x1 shortcut) + partial BN stats ----
    if has_proj:
        out_shape1 = (act_shape, act_shape, stat_shape, stat_shape)
        out_specs1 = (blk_y, blk_y, blk_s, blk_s)
    else:
        out_shape1 = (act_shape, stat_shape)
        out_specs1 = (blk_y, blk_s)
    stage1 = pl.pallas_call(
        functools.partial(_stage1_kernel, stride=stride, has_proj=has_proj),
        grid=(g,),
        in_specs=[blk_x, full(w_s1.shape)],
        out_specs=out_specs1,
        out_shape=out_shape1,
        scratch_shapes=[pltpu.VMEM((tn, h + 2, w + 2, cin), f32)],
        compiler_params=cparams,
    )
    if has_proj:
        y1, ys, s1, ss = stage1(x, w_s1)
    else:
        y1, s1 = stage1(x, w_s1)

    # ---- stage 2: BN1 + ReLU + conv2 + partial BN2 stats ----
    y2, s2 = pl.pallas_call(
        functools.partial(_stage2_kernel, count=count),
        grid=(g,),
        in_specs=[blk_y, full((g, 2, c)), full((2, c)), full((9 * c, c))],
        out_specs=(blk_y, blk_s),
        out_shape=(act_shape, stat_shape),
        scratch_shapes=[pltpu.VMEM((tn, ho + 2, wo + 2, c), f32)],
        compiler_params=cparams,
    )(y1, s1, gb1, w2)

    # ---- stage 3: BN2 + shortcut(+BN) + add + ReLU ----
    if has_proj:
        gbs = jnp.stack([params['gs'], params['bs']]).astype(f32)
        in_specs3 = [blk_y, full((g, 2, c)), full((2, c)),
                     blk_y, full((g, 2, c)), full((2, c))]
        args3 = (y2, s2, gb2, ys, ss, gbs)
    else:  # identity path: no dummy projection tensors are passed at all
        in_specs3 = [blk_y, full((g, 2, c)), full((2, c)), blk_x]
        args3 = (y2, s2, gb2, x)
    out = pl.pallas_call(
        functools.partial(_stage3_kernel, count=count, has_proj=has_proj),
        grid=(g,),
        in_specs=in_specs3,
        out_specs=blk_y,
        out_shape=act_shape,
        compiler_params=cparams,
    )(*args3)
    return out


@functools.partial(jax.jit, static_argnames=("stride", "block_n"))
def basic_block(x_nchw, params, stride=1, block_n=1):
    """PyTorch-parity wrapper: NCHW in / NCHW out."""
    # TODO(synk): in a full ResNet keep activations NHWC end-to-end (call
    # basic_block_nhwc directly) instead of transposing per block.
    x = jnp.transpose(x_nchw, (0, 2, 3, 1))
    out = basic_block_nhwc(x, params, stride=stride, block_n=block_n)
    return jnp.transpose(out, (0, 3, 1, 2))


# ---------------- pure-JAX reference (for verification) ----------------
def _bn_ref(y, g, b):
    mu = jnp.mean(y, axis=(0, 1, 2), keepdims=True)
    var = jnp.mean((y - mu) ** 2, axis=(0, 1, 2), keepdims=True)
    return (y - mu) * jax.lax.rsqrt(var + EPS) * g + b


def basic_block_ref(x_nchw, params, stride=1, matmul_dtype=jnp.float32):
    """Reference with PyTorch semantics.  matmul_dtype=bfloat16 rounds the
    conv inputs exactly like the kernel's MXU path (f32 accumulation)."""
    x = jnp.transpose(x_nchw, (0, 2, 3, 1)).astype(jnp.float32)
    dn = ('NHWC', 'HWIO', 'NHWC')

    def conv(lhs, rhs, s, pad):
        return jax.lax.conv_general_dilated(
            lhs.astype(matmul_dtype), rhs.astype(matmul_dtype), (s, s), pad,
            dimension_numbers=dn, preferred_element_type=jnp.float32)

    y1 = conv(x, params['w1'], stride, [(1, 1), (1, 1)])
    h1 = jax.nn.relu(_bn_ref(y1, params['g1'], params['b1']))
    y2 = conv(h1, params['w2'], 1, [(1, 1), (1, 1)])
    h2 = _bn_ref(y2, params['g2'], params['b2'])
    cin, c = x.shape[-1], params['w1'].shape[-1]
    if stride != 1 or cin != c:
        ys = conv(x, params['ws'].reshape(1, 1, cin, c), stride,
                  [(0, 0), (0, 0)])
        sc = _bn_ref(ys, params['gs'], params['bs'])
    else:
        sc = x
    out = jax.nn.relu(h2 + sc)
    return jnp.transpose(out, (0, 3, 1, 2))


def init_params(key, in_planes, planes):
    ks = jax.random.split(key, 8)
    p = {}
    p['w1'] = jax.random.normal(ks[0], (3, 3, in_planes, planes),
                                jnp.float32) / np.sqrt(9.0 * in_planes)
    p['g1'] = jax.random.uniform(ks[1], (planes,), jnp.float32, 0.5, 1.5)
    p['b1'] = 0.1 * jax.random.normal(ks[2], (planes,), jnp.float32)
    p['w2'] = jax.random.normal(ks[3], (3, 3, planes, planes),
                                jnp.float32) / np.sqrt(9.0 * planes)
    p['g2'] = jax.random.uniform(ks[4], (planes,), jnp.float32, 0.5, 1.5)
    p['b2'] = 0.1 * jax.random.normal(ks[5], (planes,), jnp.float32)
    p['ws'] = jax.random.normal(ks[6], (in_planes, planes),
                                jnp.float32) / np.sqrt(float(in_planes))
    p['gs'] = jax.random.uniform(ks[7], (planes,), jnp.float32, 0.5, 1.5)
    p['bs'] = jnp.zeros((planes,), jnp.float32)
    return p


if __name__ == "__main__":
    key = jax.random.PRNGKey(0)
    kx1, kp1, kx2, kp2 = jax.random.split(key, 4)

    # Case 1: projection shortcut (in_planes != planes), stride 1.
    N, Cin, H, W, planes = 2, 4, 16, 16, 8
    x1 = jax.random.normal(kx1, (N, Cin, H, W), jnp.float32)
    p1 = init_params(kp1, Cin, planes)
    out1 = jax.block_until_ready(basic_block(x1, p1, stride=1))
    assert out1.shape == (N, planes, H, W)
    # strict check vs a reference that rounds conv inputs to bf16 like the MXU
    np.testing.assert_allclose(
        np.asarray(out1),
        np.asarray(basic_block_ref(x1, p1, stride=1,
                                   matmul_dtype=jnp.bfloat16)),
        atol=5e-3, rtol=5e-3)
    # loose sanity check vs the pure-f32 PyTorch-semantics reference
    np.testing.assert_allclose(
        np.asarray(out1), np.asarray(basic_block_ref(x1, p1, stride=1)),
        atol=1e-1, rtol=1e-1)

    # Case 2: identity shortcut (in_planes == planes), stride 1.
    x2 = jax.random.normal(kx2, (N, planes, H, W), jnp.float32)
    p2 = init_params(kp2, planes, planes)
    out2 = jax.block_until_ready(basic_block(x2, p2, stride=1))
    assert out2.shape == (N, planes, H, W)
    np.testing.assert_allclose(
        np.asarray(out2),
        np.asarray(basic_block_ref(x2, p2, stride=1,
                                   matmul_dtype=jnp.bfloat16)),
        atol=5e-3, rtol=5e-3)

    print("KERNEL_OK")
</pallas_src>

<mosaic_0001>
module attributes {stable_mosaic.version = 11 : i64} {
  func.func @_stage1_kernel(%arg0: i32, %arg1: memref<1x16x16x4xf32, #tpu.memory_space<vmem>>, %arg2: memref<36x16xbf16, #tpu.memory_space<vmem>>, %arg3: memref<1x16x16x8xf32, #tpu.memory_space<vmem>>, %arg4: memref<1x16x16x8xf32, #tpu.memory_space<vmem>>, %arg5: memref<1x2x8xf32, #tpu.memory_space<vmem>>, %arg6: memref<1x2x8xf32, #tpu.memory_space<vmem>>, %arg7: memref<1x18x18x4xf32, #tpu.memory_space<vmem>>) attributes {dimension_semantics = [#tpu.dimension_semantics<parallel>], iteration_bounds = array<i64: 2>, scalar_prefetch = 0 : i64, scratch_operands = 1 : i64, tpu.core_type = #tpu.core_type<tc>, window_params = [{transform_indices = @transform_0, window_bounds = array<i64: 1, 16, 16, 4>}, {pipeline_mode = #tpu.pipeline_mode<synchronous>, transform_indices = @transform_1, window_bounds = array<i64: 36, 16>}, {transform_indices = @transform_2, window_bounds = array<i64: 1, 16, 16, 8>}, {transform_indices = @transform_3, window_bounds = array<i64: 1, 16, 16, 8>}, {transform_indices = @transform_4, window_bounds = array<i64: 1, 2, 8>}, {transform_indices = @transform_5, window_bounds = array<i64: 1, 2, 8>}]} {
    %c0 = arith.constant 0 : index
    %c0_0 = arith.constant 0 : index
    %c0_1 = arith.constant 0 : index
    %c0_2 = arith.constant 0 : index
    %0 = vector.load %arg1[%c0, %c0_0, %c0_1, %c0_2] : memref<1x16x16x4xf32, #tpu.memory_space<vmem>>, vector<1x16x16x4xf32>
    %cst = arith.constant 0.000000e+00 : f32
    %1 = vector.broadcast %cst : f32 to vector<1x1x18x4xf32>
    %c0_3 = arith.constant 0 : index
    %c0_4 = arith.constant 0 : index
    %c0_5 = arith.constant 0 : index
    %c0_6 = arith.constant 0 : index
    %2 = vector.load %arg7[%c0_3, %c0_4, %c0_5, %c0_6] : memref<1x18x18x4xf32, #tpu.memory_space<vmem>>, vector<1x1x18x4xf32>
    tpu.vector_store %arg7[%c0_3, %c0_4, %c0_5, %c0_6], %1 {strides = array<i32>} : memref<1x18x18x4xf32, #tpu.memory_space<vmem>>, vector<1x1x18x4xf32>,
    %cst_7 = arith.constant 0.000000e+00 : f32
    %3 = vector.broadcast %cst_7 : f32 to vector<1x1x18x4xf32>
    %c0_8 = arith.constant 0 : index
    %c17 = arith.constant 17 : index
    %c0_9 = arith.constant 0 : index
    %c0_10 = arith.constant 0 : index
    %4 = vector.load %arg7[%c0_8, %c17, %c0_9, %c0_10] : memref<1x18x18x4xf32, #tpu.memory_space<vmem>>, vector<1x1x18x4xf32>
    tpu.vector_store %arg7[%c0_8, %c17, %c0_9, %c0_10], %3 {strides = array<i32>} : memref<1x18x18x4xf32, #tpu.memory_space<vmem>>, vector<1x1x18x4xf32>,
    %cst_11 = arith.constant 0.000000e+00 : f32
    %5 = vector.broadcast %cst_11 : f32 to vector<1x18x1x4xf32>
    %c0_12 = arith.constant 0 : index
    %c0_13 = arith.constant 0 : index
    %c0_14 = arith.constant 0 : index
    %c0_15 = arith.constant 0 : index
    %6 = vector.load %arg7[%c0_12, %c0_13, %c0_14, %c0_15] : memref<1x18x18x4xf32, #tpu.memory_space<vmem>>, vector<1x18x1x4xf32>
    tpu.vector_store %arg7[%c0_12, %c0_13, %c0_14, %c0_15], %5 {strides = array<i32>} : memref<1x18x18x4xf32, #tpu.memory_space<vmem>>, vector<1x18x1x4xf32>,
    %cst_16 = arith.constant 0.000000e+00 : f32
    %7 = vector.broadcast %cst_16 : f32 to vector<1x18x1x4xf32>
    %c0_17 = arith.constant 0 : index
    %c0_18 = arith.constant 0 : index
    %c17_19 = arith.constant 17 : index
    %c0_20 = arith.constant 0 : index
    %8 = vector.load %arg7[%c0_17, %c0_18, %c17_19, %c0_20] : memref<1x18x18x4xf32, #tpu.memory_space<vmem>>, vector<1x18x1x4xf32>
    tpu.vector_store %arg7[%c0_17, %c0_18, %c17_19, %c0_20], %7 {strides = array<i32>} : memref<1x18x18x4xf32, #tpu.memory_space<vmem>>, vector<1x18x1x4xf32>,
    %c0_21 = arith.constant 0 : index
    %c1 = arith.constant 1 : index
    %c1_22 = arith.constant 1 : index
    %c0_23 = arith.constant 0 : index
    %9 = vector.load %arg7[%c0_21, %c1, %c1_22, %c0_23] : memref<1x18x18x4xf32, #tpu.memory_space<vmem>>, vector<1x16x16x4xf32>
    tpu.vector_store %arg7[%c0_21, %c1, %c1_22, %c0_23], %0 {strides = array<i32>} : memref<1x18x18x4xf32, #tpu.memory_space<vmem>>, vector<1x16x16x4xf32>,
    %c0_24 = arith.constant 0 : index
    %c0_25 = arith.constant 0 : index
    %c0_26 = arith.constant 0 : index
    %c0_27 = arith.constant 0 : index
    %10 = vector.load %arg7[%c0_24, %c0_25, %c0_26, %c0_27] : memref<1x18x18x4xf32, #tpu.memory_space<vmem>>, vector<1x16x16x4xf32>
    %11 = vector.shape_cast %10 : vector<1x16x16x4xf32> to vector<256x4xf32>
    %c0_28 = arith.constant 0 : index
    %c0_29 = arith.constant 0 : index
    %c1_30 = arith.constant 1 : index
    %c0_31 = arith.constant 0 : index
    %12 = vector.load %arg7[%c0_28, %c0_29, %c1_30, %c0_31] : memref<1x18x18x4xf32, #tpu.memory_space<vmem>>, vector<1x16x16x4xf32>
    %13 = vector.shape_cast %12 : vector<1x16x16x4xf32> to vector<256x4xf32>
    %c0_32 = arith.constant 0 : index
    %c0_33 = arith.constant 0 : index
    %c2 = arith.constant 2 : index
    %c0_34 = arith.constant 0 : index
    %14 = vector.load %arg7[%c0_32, %c0_33, %c2, %c0_34] : memref<1x18x18x4xf32, #tpu.memory_space<vmem>>, vector<1x16x16x4xf32>
    %15 = vector.shape_cast %14 : vector<1x16x16x4xf32> to vector<256x4xf32>
    %c0_35 = arith.constant 0 : index
    %c1_36 = arith.constant 1 : index
    %c0_37 = arith.constant 0 : index
    %c0_38 = arith.constant 0 : index
    %16 = vector.load %arg7[%c0_35, %c1_36, %c0_37, %c0_38] : memref<1x18x18x4xf32, #tpu.memory_space<vmem>>, vector<1x16x16x4xf32>
    %17 = vector.shape_cast %16 : vector<1x16x16x4xf32> to vector<256x4xf32>
    %c0_39 = arith.constant 0 : index
    %c1_40 = arith.constant 1 : index
    %c1_41 = arith.constant 1 : index
    %c0_42 = arith.constant 0 : index
    %18 = vector.load %arg7[%c0_39, %c1_40, %c1_41, %c0_42] : memref<1x18x18x4xf32, #tpu.memory_space<vmem>>, vector<1x16x16x4xf32>
    %19 = vector.shape_cast %18 : vector<1x16x16x4xf32> to vector<256x4xf32>
    %c0_43 = arith.constant 0 : index
    %c1_44 = arith.constant 1 : index
    %c2_45 = arith.constant 2 : index
    %c0_46 = arith.constant 0 : index
    %20 = vector.load %arg7[%c0_43, %c1_44, %c2_45, %c0_46] : memref<1x18x18x4xf32, #tpu.memory_space<vmem>>, vector<1x16x16x4xf32>
    %21 = vector.shape_cast %20 : vector<1x16x16x4xf32> to vector<256x4xf32>
    %c0_47 = arith.constant 0 : index
    %c2_48 = arith.constant 2 : index
    %c0_49 = arith.constant 0 : index
    %c0_50 = arith.constant 0 : index
    %22 = vector.load %arg7[%c0_47, %c2_48, %c0_49, %c0_50] : memref<1x18x18x4xf32, #tpu.memory_space<vmem>>, vector<1x16x16x4xf32>
    %23 = vector.shape_cast %22 : vector<1x16x16x4xf32> to vector<256x4xf32>
    %c0_51 = arith.constant 0 : index
    %c2_52 = arith.constant 2 : index
    %c1_53 = arith.constant 1 : index
    %c0_54 = arith.constant 0 : index
    %24 = vector.load %arg7[%c0_51, %c2_52, %c1_53, %c0_54] : memref<1x18x18x4xf32, #tpu.memory_space<vmem>>, vector<1x16x16x4xf32>
    %25 = vector.shape_cast %24 : vector<1x16x16x4xf32> to vector<256x4xf32>
    %c0_55 = arith.constant 0 : index
    %c2_56 = arith.constant 2 : index
    %c2_57 = arith.constant 2 : index
    %c0_58 = arith.constant 0 : index
    %26 = vector.load %arg7[%c0_55, %c2_56, %c2_57, %c0_58] : memref<1x18x18x4xf32, #tpu.memory_space<vmem>>, vector<1x16x16x4xf32>
    %27 = vector.shape_cast %26 : vector<1x16x16x4xf32> to vector<256x4xf32>
    %28 = tpu.concatenate %11, %13, %15, %17, %19, %21, %23, %25, %27 in 1 : vector<256x4xf32>, vector<256x4xf32>, vector<256x4xf32>, vector<256x4xf32>, vector<256x4xf32>, vector<256x4xf32>, vector<256x4xf32>, vector<256x4xf32>, vector<256x4xf32> -> vector<256x36xf32>
    %29 = arith.truncf %28 : vector<256x36xf32> to vector<256x36xbf16>
    %c0_59 = arith.constant 0 : index
    %c0_60 = arith.constant 0 : index
    %30 = vector.load %arg2[%c0_59, %c0_60] : memref<36x16xbf16, #tpu.memory_space<vmem>>, vector<36x16xbf16>
    %cst_61 = arith.constant dense<0.000000e+00> : vector<256x16xf32>
    %31 = tpu.matmul %29, %30, %cst_61 {dimension_numbers = #tpu.dot_dimension_numbers<[1], [0], [0], [1], [0, 0, 1, 1], [], []>} : vector<256x36xbf16>, vector<36x16xbf16>, vector<256x16xf32> -> vector<256x16xf32>
    %32 = vector.extract_strided_slice %31 {offsets = [0, 0], sizes = [256, 8], strides = [1, 1]} : vector<256x16xf32> to vector<256x8xf32>
    %33 = vector.shape_cast %32 : vector<256x8xf32> to vector<1x16x16x8xf32>
    %c0_62 = arith.constant 0 : index
    %c0_63 = arith.constant 0 : index
    %c0_64 = arith.constant 0 : index
    %c0_65 = arith.constant 0 : index
    %34 = vector.load %arg3[%c0_62, %c0_63, %c0_64, %c0_65] : memref<1x16x16x8xf32, #tpu.memory_space<vmem>>, vector<1x16x16x8xf32>
    tpu.vector_store %arg3[%c0_62, %c0_63, %c0_64, %c0_65], %33 {strides = array<i32>} : memref<1x16x16x8xf32, #tpu.memory_space<vmem>>, vector<1x16x16x8xf32>,
    %cst_66 = arith.constant dense<0.000000e+00> : vector<8xf32>
    %35 = vector.multi_reduction <add>, %32, %cst_66 [0] : vector<256x8xf32> to vector<8xf32>
    %36 = vector.shape_cast %35 : vector<8xf32> to vector<1x8xf32>
    %37 = arith.mulf %32, %32 : vector<256x8xf32>
    %cst_67 = arith.constant dense<0.000000e+00> : vector<8xf32>
    %38 = vector.multi_reduction <add>, %37, %cst_67 [0] : vector<256x8xf32> to vector<8xf32>
    %39 = vector.shape_cast %38 : vector<8xf32> to vector<1x8xf32>
    %c0_68 = arith.constant 0 : index
    %c0_69 = arith.constant 0 : index
    %c0_70 = arith.constant 0 : index
    %40 = vector.load %arg5[%c0_68, %c0_69, %c0_70] : memref<1x2x8xf32, #tpu.memory_space<vmem>>, vector<1x1x8xf32>
    %41 = vector.shape_cast %40 : vector<1x1x8xf32> to vector<1x8xf32>
    %42 = vector.shape_cast %36 : vector<1x8xf32> to vector<1x1x8xf32>
    tpu.vector_store %arg5[%c0_68, %c0_69, %c0_70], %42 {strides = array<i32>} : memref<1x2x8xf32, #tpu.memory_space<vmem>>, vector<1x1x8xf32>,
    %c0_71 = arith.constant 0 : index
    %c1_72 = arith.constant 1 : index
    %c0_73 = arith.constant 0 : index
    %43 = vector.load %arg5[%c0_71, %c1_72, %c0_73] : memref<1x2x8xf32, #tpu.memory_space<vmem>>, vector<1x1x8xf32>
    %44 = vector.shape_cast %43 : vector<1x1x8xf32> to vector<1x8xf32>
    %45 = vector.shape_cast %39 : vector<1x8xf32> to vector<1x1x8xf32>
    tpu.vector_store %arg5[%c0_71, %c1_72, %c0_73], %45 {strides = array<i32>} : memref<1x2x8xf32, #tpu.memory_space<vmem>>, vector<1x1x8xf32>,
    %46 = vector.extract_strided_slice %31 {offsets = [0, 8], sizes = [256, 8], strides = [1, 1]} : vector<256x16xf32> to vector<256x8xf32>
    %47 = vector.shape_cast %46 : vector<256x8xf32> to vector<1x16x16x8xf32>
    %c0_74 = arith.constant 0 : index
    %c0_75 = arith.constant 0 : index
    %c0_76 = arith.constant 0 : index
    %c0_77 = arith.constant 0 : index
    %48 = vector.load %arg4[%c0_74, %c0_75, %c0_76, %c0_77] : memref<1x16x16x8xf32, #tpu.memory_space<vmem>>, vector<1x16x16x8xf32>
    tpu.vector_store %arg4[%c0_74, %c0_75, %c0_76, %c0_77], %47 {strides = array<i32>} : memref<1x16x16x8xf32, #tpu.memory_space<vmem>>, vector<1x16x16x8xf32>,
    %cst_78 = arith.constant dense<0.000000e+00> : vector<8xf32>
    %49 = vector.multi_reduction <add>, %46, %cst_78 [0] : vector<256x8xf32> to vector<8xf32>
    %50 = vector.shape_cast %49 : vector<8xf32> to vector<1x8xf32>
    %51 = arith.mulf %46, %46 : vector<256x8xf32>
    %cst_79 = arith.constant dense<0.000000e+00> : vector<8xf32>
    %52 = vector.multi_reduction <add>, %51, %cst_79 [0] : vector<256x8xf32> to vector<8xf32>
    %53 = vector.shape_cast %52 : vector<8xf32> to vector<1x8xf32>
    %c0_80 = arith.constant 0 : index
    %c0_81 = arith.constant 0 : index
    %c0_82 = arith.constant 0 : index
    %54 = vector.load %arg6[%c0_80, %c0_81, %c0_82] : memref<1x2x8xf32, #tpu.memory_space<vmem>>, vector<1x1x8xf32>
    %55 = vector.shape_cast %54 : vector<1x1x8xf32> to vector<1x8xf32>
    %56 = vector.shape_cast %50 : vector<1x8xf32> to vector<1x1x8xf32>
    tpu.vector_store %arg6[%c0_80, %c0_81, %c0_82], %56 {strides = array<i32>} : memref<1x2x8xf32, #tpu.memory_space<vmem>>, vector<1x1x8xf32>,
    %c0_83 = arith.constant 0 : index
    %c1_84 = arith.constant 1 : index
    %c0_85 = arith.constant 0 : index
    %57 = vector.load %arg6[%c0_83, %c1_84, %c0_85] : memref<1x2x8xf32, #tpu.memory_space<vmem>>, vector<1x1x8xf32>
    %58 = vector.shape_cast %57 : vector<1x1x8xf32> to vector<1x8xf32>
    %59 = vector.shape_cast %53 : vector<1x8xf32> to vector<1x1x8xf32>
    tpu.vector_store %arg6[%c0_83, %c1_84, %c0_85], %59 {strides = array<i32>} : memref<1x2x8xf32, #tpu.memory_space<vmem>>, vector<1x1x8xf32>,
    return
  }
  func.func @transform_0(%arg0: i32) -> (i32, i32, i32, i32) {
    %c0_i32 = arith.constant 0 : i32
    %c0_i32_0 = arith.constant 0 : i32
    %c0_i32_1 = arith.constant 0 : i32
    %c0_i32_2 = arith.constant 0 : i32
    return %arg0, %c0_i32, %c0_i32_0, %c0_i32_1 : i32, i32, i32, i32
  }
  func.func @transform_1(%arg0: i32) -> (i32, i32) {
    %c0_i32 = arith.constant 0 : i32
    %c0_i32_0 = arith.constant 0 : i32
    %c0_i32_1 = arith.constant 0 : i32
    return %c0_i32, %c0_i32_0 : i32, i32
  }
  func.func @transform_2(%arg0: i32) -> (i32, i32, i32, i32) {
    %c0_i32 = arith.constant 0 : i32
    %c0_i32_0 = arith.constant 0 : i32
    %c0_i32_1 = arith.constant 0 : i32
    %c0_i32_2 = arith.constant 0 : i32
    return %arg0, %c0_i32, %c0_i32_0, %c0_i32_1 : i32, i32, i32, i32
  }
  func.func @transform_3(%arg0: i32) -> (i32, i32, i32, i32) {
    %c0_i32 = arith.constant 0 : i32
    %c0_i32_0 = arith.constant 0 : i32
    %c0_i32_1 = arith.constant 0 : i32
    %c0_i32_2 = arith.constant 0 : i32
    return %arg0, %c0_i32, %c0_i32_0, %c0_i32_1 : i32, i32, i32, i32
  }
  func.func @transform_4(%arg0: i32) -> (i32, i32, i32) {
    %c0_i32 = arith.constant 0 : i32
    %c0_i32_0 = arith.constant 0 : i32
    %c0_i32_1 = arith.constant 0 : i32
    return %arg0, %c0_i32, %c0_i32_0 : i32, i32, i32
  }
  func.func @transform_5(%arg0: i32) -> (i32, i32, i32) {
    %c0_i32 = arith.constant 0 : i32
    %c0_i32_0 = arith.constant 0 : i32
    %c0_i32_1 = arith.constant 0 : i32
    return %arg0, %c0_i32, %c0_i32_0 : i32, i32, i32
  }
}

module attributes {stable_mosaic.version = 11 : i64} {
  func.func @_stage2_kernel(%arg0: i32, %arg1: memref<1x16x16x8xf32, #tpu.memory_space<vmem>>, %arg2: memref<2x2x8xf32, #tpu.memory_space<vmem>>, %arg3: memref<2x8xf32, #tpu.memory_space<vmem>>, %arg4: memref<72x8xbf16, #tpu.memory_space<vmem>>, %arg5: memref<1x16x16x8xf32, #tpu.memory_space<vmem>>, %arg6: memref<1x2x8xf32, #tpu.memory_space<vmem>>, %arg7: memref<1x18x18x8xf32, #tpu.memory_space<vmem>>) attributes {dimension_semantics = [#tpu.dimension_semantics<parallel>], iteration_bounds = array<i64: 2>, scalar_prefetch = 0 : i64, scratch_operands = 1 : i64, tpu.core_type = #tpu.core_type<tc>, window_params = [{transform_indices = @transform_0, window_bounds = array<i64: 1, 16, 16, 8>}, {pipeline_mode = #tpu.pipeline_mode<synchronous>, transform_indices = @transform_1, window_bounds = array<i64: 2, 2, 8>}, {pipeline_mode = #tpu.pipeline_mode<synchronous>, transform_indices = @transform_2, window_bounds = array<i64: 2, 8>}, {pipeline_mode = #tpu.pipeline_mode<synchronous>, transform_indices = @transform_3, window_bounds = array<i64: 72, 8>}, {transform_indices = @transform_4, window_bounds = array<i64: 1, 16, 16, 8>}, {transform_indices = @transform_5, window_bounds = array<i64: 1, 2, 8>}]} {
    %c0 = arith.constant 0 : index
    %c0_0 = arith.constant 0 : index
    %c0_1 = arith.constant 0 : index
    %0 = vector.load %arg2[%c0, %c0_0, %c0_1] : memref<2x2x8xf32, #tpu.memory_space<vmem>>, vector<2x2x8xf32>
    %cst = arith.constant dense<0.000000e+00> : vector<2x8xf32>
    %1 = vector.multi_reduction <add>, %0, %cst [0] : vector<2x2x8xf32> to vector<2x8xf32>
    %2 = vector.extract_strided_slice %1 {offsets = [0, 0], sizes = [1, 8], strides = [1, 1]} : vector<2x8xf32> to vector<1x8xf32>
    %cst_2 = arith.constant 0.001953125 : f32
    %3 = vector.broadcast %cst_2 : f32 to vector<1x8xf32>
    %4 = arith.mulf %2, %3 : vector<1x8xf32>
    %5 = vector.extract_strided_slice %1 {offsets = [1, 0], sizes = [1, 8], strides = [1, 1]} : vector<2x8xf32> to vector<1x8xf32>
    %cst_3 = arith.constant 0.001953125 : f32
    %6 = vector.broadcast %cst_3 : f32 to vector<1x8xf32>
    %7 = arith.mulf %5, %6 : vector<1x8xf32>
    %8 = arith.mulf %4, %4 : vector<1x8xf32>
    %9 = arith.subf %7, %8 : vector<1x8xf32>
    %c0_4 = arith.constant 0 : index
    %c0_5 = arith.constant 0 : index
    %10 = vector.load %arg3[%c0_4, %c0_5] : memref<2x8xf32, #tpu.memory_space<vmem>>, vector<1x8xf32>
    %cst_6 = arith.constant 9.99999974E-6 : f32
    %11 = vector.broadcast %cst_6 : f32 to vector<1x8xf32>
    %12 = arith.addf %9, %11 : vector<1x8xf32>
    %13 = math.rsqrt %12 : vector<1x8xf32>
    %14 = arith.mulf %10, %13 : vector<1x8xf32>
    %c1 = arith.constant 1 : index
    %c0_7 = arith.constant 0 : index
    %15 = vector.load %arg3[%c1, %c0_7] : memref<2x8xf32, #tpu.memory_space<vmem>>, vector<1x8xf32>
    %16 = arith.mulf %4, %14 : vector<1x8xf32>
    %17 = arith.subf %15, %16 : vector<1x8xf32>
    %c0_8 = arith.constant 0 : index
    %c0_9 = arith.constant 0 : index
    %c0_10 = arith.constant 0 : index
    %c0_11 = arith.constant 0 : index
    %18 = vector.load %arg1[%c0_8, %c0_9, %c0_10, %c0_11] : memref<1x16x16x8xf32, #tpu.memory_space<vmem>>, vector<1x16x16x8xf32>
    %19 = vector.shape_cast %18 : vector<1x16x16x8xf32> to vector<256x8xf32>
    %20 = vector.broadcast %14 : vector<1x8xf32> to vector<256x8xf32>
    %21 = arith.mulf %19, %20 : vector<256x8xf32>
    %22 = vector.broadcast %17 : vector<1x8xf32> to vector<256x8xf32>
    %23 = arith.addf %21, %22 : vector<256x8xf32>
    %cst_12 = arith.constant 0.000000e+00 : f32
    %24 = vector.broadcast %cst_12 : f32 to vector<256x8xf32>
    %25 = arith.maximumf %23, %24 : vector<256x8xf32>
    %26 = vector.shape_cast %25 : vector<256x8xf32> to vector<1x16x16x8xf32>
    %cst_13 = arith.constant 0.000000e+00 : f32
    %27 = vector.broadcast %cst_13 : f32 to vector<1x1x18x8xf32>
    %c0_14 = arith.constant 0 : index
    %c0_15 = arith.constant 0 : index
    %c0_16 = arith.constant 0 : index
    %c0_17 = arith.constant 0 : index
    %28 = vector.load %arg7[%c0_14, %c0_15, %c0_16, %c0_17] : memref<1x18x18x8xf32, #tpu.memory_space<vmem>>, vector<1x1x18x8xf32>
    tpu.vector_store %arg7[%c0_14, %c0_15, %c0_16, %c0_17], %27 {strides = array<i32>} : memref<1x18x18x8xf32, #tpu.memory_space<vmem>>, vector<1x1x18x8xf32>,
    %cst_18 = arith.constant 0.000000e+00 : f32
    %29 = vector.broadcast %cst_18 : f32 to vector<1x1x18x8xf32>
    %c0_19 = arith.constant 0 : index
    %c17 = arith.constant 17 : index
    %c0_20 = arith.constant 0 : index
    %c0_21 = arith.constant 0 : index
    %30 = vector.load %arg7[%c0_19, %c17, %c0_20, %c0_21] : memref<1x18x18x8xf32, #tpu.memory_space<vmem>>, vector<1x1x18x8xf32>
    tpu.vector_store %arg7[%c0_19, %c17, %c0_20, %c0_21], %29 {strides = array<i32>} : memref<1x18x18x8xf32, #tpu.memory_space<vmem>>, vector<1x1x18x8xf32>,
    %cst_22 = arith.constant 0.000000e+00 : f32
    %31 = vector.broadcast %cst_22 : f32 to vector<1x18x1x8xf32>
    %c0_23 = arith.constant 0 : index
    %c0_24 = arith.constant 0 : index
    %c0_25 = arith.constant 0 : index
    %c0_26 = arith.constant 0 : index
    %32 = vector.load %arg7[%c0_23, %c0_24, %c0_25, %c0_26] : memref<1x18x18x8xf32, #tpu.memory_space<vmem>>, vector<1x18x1x8xf32>
    tpu.vector_store %arg7[%c0_23, %c0_24, %c0_25, %c0_26], %31 {strides = array<i32>} : memref<1x18x18x8xf32, #tpu.memory_space<vmem>>, vector<1x18x1x8xf32>,
    %cst_27 = arith.constant 0.000000e+00 : f32
    %33 = vector.broadcast %cst_27 : f32 to vector<1x18x1x8xf32>
    %c0_28 = arith.constant 0 : index
    %c0_29 = arith.constant 0 : index
    %c17_30 = arith.constant 17 : index
    %c0_31 = arith.constant 0 : index
    %34 = vector.load %arg7[%c0_28, %c0_29, %c17_30, %c0_31] : memref<1x18x18x8xf32, #tpu.memory_space<vmem>>, vector<1x18x1x8xf32>
    tpu.vector_store %arg7[%c0_28, %c0_29, %c17_30, %c0_31], %33 {strides = array<i32>} : memref<1x18x18x8xf32, #tpu.memory_space<vmem>>, vector<1x18x1x8xf32>,
    %c0_32 = arith.constant 0 : index
    %c1_33 = arith.constant 1 : index
    %c1_34 = arith.constant 1 : index
    %c0_35 = arith.constant 0 : index
    %35 = vector.load %arg7[%c0_32, %c1_33, %c1_34, %c0_35] : memref<1x18x18x8xf32, #tpu.memory_space<vmem>>, vector<1x16x16x8xf32>
    tpu.vector_store %arg7[%c0_32, %c1_33, %c1_34, %c0_35], %26 {strides = array<i32>} : memref<1x18x18x8xf32, #tpu.memory_space<vmem>>, vector<1x16x16x8xf32>,
    %c0_36 = arith.constant 0 : index
    %c0_37 = arith.constant 0 : index
    %c0_38 = arith.constant 0 : index
    %c0_39 = arith.constant 0 : index
    %36 = vector.load %arg7[%c0_36, %c0_37, %c0_38, %c0_39] : memref<1x18x18x8xf32, #tpu.memory_space<vmem>>, vector<1x16x16x8xf32>
    %37 = vector.shape_cast %36 : vector<1x16x16x8xf32> to vector<256x8xf32>
    %c0_40 = arith.constant 0 : index
    %c0_41 = arith.constant 0 : index
    %c1_42 = arith.constant 1 : index
    %c0_43 = arith.constant 0 : index
    %38 = vector.load %arg7[%c0_40, %c0_41, %c1_42, %c0_43] : memref<1x18x18x8xf32, #tpu.memory_space<vmem>>, vector<1x16x16x8xf32>
    %39 = vector.shape_cast %38 : vector<1x16x16x8xf32> to vector<256x8xf32>
    %c0_44 = arith.constant 0 : index
    %c0_45 = arith.constant 0 : index
    %c2 = arith.constant 2 : index
    %c0_46 = arith.constant 0 : index
    %40 = vector.load %arg7[%c0_44, %c0_45, %c2, %c0_46] : memref<1x18x18x8xf32, #tpu.memory_space<vmem>>, vector<1x16x16x8xf32>
    %41 = vector.shape_cast %40 : vector<1x16x16x8xf32> to vector<256x8xf32>
    %c0_47 = arith.constant 0 : index
    %c1_48 = arith.constant 1 : index
    %c0_49 = arith.constant 0 : index
    %c0_50 = arith.constant 0 : index
    %42 = vector.load %arg7[%c0_47, %c1_48, %c0_49, %c0_50] : memref<1x18x18x8xf32, #tpu.memory_space<vmem>>, vector<1x16x16x8xf32>
    %43 = vector.shape_cast %42 : vector<1x16x16x8xf32> to vector<256x8xf32>
    %c0_51 = arith.constant 0 : index
    %c1_52 = arith.constant 1 : index
    %c1_53 = arith.constant 1 : index
    %c0_54 = arith.constant 0 : index
    %44 = vector.load %arg7[%c0_51, %c1_52, %c1_53, %c0_54] : memref<1x18x18x8xf32, #tpu.memory_space<vmem>>, vector<1x16x16x8xf32>
    %45 = vector.shape_cast %44 : vector<1x16x16x8xf32> to vector<256x8xf32>
    %c0_55 = arith.constant 0 : index
    %c1_56 = arith.constant 1 : index
    %c2_57 = arith.constant 2 : index
    %c0_58 = arith.constant 0 : index
    %46 = vector.load %arg7[%c0_55, %c1_56, %c2_57, %c0_58] : memref<1x18x18x8xf32, #tpu.memory_space<vmem>>, vector<1x16x16x8xf32>
    %47 = vector.shape_cast %46 : vector<1x16x16x8xf32> to vector<256x8xf32>
    %c0_59 = arith.constant 0 : index
    %c2_60 = arith.constant 2 : index
    %c0_61 = arith.constant 0 : index
    %c0_62 = arith.constant 0 : index
    %48 = vector.load %arg7[%c0_59, %c2_60, %c0_61, %c0_62] : memref<1x18x18x8xf32, #tpu.memory_space<vmem>>, vector<1x16x16x8xf32>
    %49 = vector.shape_cast %48 : vector<1x16x16x8xf32> to vector<256x8xf32>
    %c0_63 = arith.constant 0 : index
    %c2_64 = arith.constant 2 : index
    %c1_65 = arith.constant 1 : index
    %c0_66 = arith.constant 0 : index
    %50 = vector.load %arg7[%c0_63, %c2_64, %c1_65, %c0_66] : memref<1x18x18x8xf32, #tpu.memory_space<vmem>>, vector<1x16x16x8xf32>
    %51 = vector.shape_cast %50 : vector<1x16x16x8xf32> to vector<256x8xf32>
    %c0_67 = arith.constant 0 : index
    %c2_68 = arith.constant 2 : index
    %c2_69 = arith.constant 2 : index
    %c0_70 = arith.constant 0 : index
    %52 = vector.load %arg7[%c0_67, %c2_68, %c2_69, %c0_70] : memref<1x18x18x8xf32, #tpu.memory_space<vmem>>, vector<1x16x16x8xf32>
    %53 = vector.shape_cast %52 : vector<1x16x16x8xf32> to vector<256x8xf32>
    %54 = tpu.concatenate %37, %39, %41, %43, %45, %47, %49, %51, %53 in 1 : vector<256x8xf32>, vector<256x8xf32>, vector<256x8xf32>, vector<256x8xf32>, vector<256x8xf32>, vector<256x8xf32>, vector<256x8xf32>, vector<256x8xf32>, vector<256x8xf32> -> vector<256x72xf32>
    %55 = arith.truncf %54 : vector<256x72xf32> to vector<256x72xbf16>
    %c0_71 = arith.constant 0 : index
    %c0_72 = arith.constant 0 : index
    %56 = vector.load %arg4[%c0_71, %c0_72] : memref<72x8xbf16, #tpu.memory_space<vmem>>, vector<72x8xbf16>
    %cst_73 = arith.constant dense<0.000000e+00> : vector<256x8xf32>
    %57 = tpu.matmul %55, %56, %cst_73 {dimension_numbers = #tpu.dot_dimension_numbers<[1], [0], [0], [1], [0, 0, 1, 1], [], []>} : vector<256x72xbf16>, vector<72x8xbf16>, vector<256x8xf32> -> vector<256x8xf32>
    %58 = vector.shape_cast %57 : vector<256x8xf32> to vector<1x16x16x8xf32>
    %c0_74 = arith.constant 0 : index
    %c0_75 = arith.constant 0 : index
    %c0_76 = arith.constant 0 : index
    %c0_77 = arith.constant 0 : index
    %59 = vector.load %arg5[%c0_74, %c0_75, %c0_76, %c0_77] : memref<1x16x16x8xf32, #tpu.memory_space<vmem>>, vector<1x16x16x8xf32>
    tpu.vector_store %arg5[%c0_74, %c0_75, %c0_76, %c0_77], %58 {strides = array<i32>} : memref<1x16x16x8xf32, #tpu.memory_space<vmem>>, vector<1x16x16x8xf32>,
    %cst_78 = arith.constant dense<0.000000e+00> : vector<8xf32>
    %60 = vector.multi_reduction <add>, %57, %cst_78 [0] : vector<256x8xf32> to vector<8xf32>
    %61 = vector.shape_cast %60 : vector<8xf32> to vector<1x8xf32>
    %62 = arith.mulf %57, %57 : vector<256x8xf32>
    %cst_79 = arith.constant dense<0.000000e+00> : vector<8xf32>
    %63 = vector.multi_reduction <add>, %62, %cst_79 [0] : vector<256x8xf32> to vector<8xf32>
    %64 = vector.shape_cast %63 : vector<8xf32> to vector<1x8xf32>
    %c0_80 = arith.constant 0 : index
    %c0_81 = arith.constant 0 : index
    %c0_82 = arith.constant 0 : index
    %65 = vector.load %arg6[%c0_80, %c0_81, %c0_82] : memref<1x2x8xf32, #tpu.memory_space<vmem>>, vector<1x1x8xf32>
    %66 = vector.shape_cast %65 : vector<1x1x8xf32> to vector<1x8xf32>
    %67 = vector.shape_cast %61 : vector<1x8xf32> to vector<1x1x8xf32>
    tpu.vector_store %arg6[%c0_80, %c0_81, %c0_82], %67 {strides = array<i32>} : memref<1x2x8xf32, #tpu.memory_space<vmem>>, vector<1x1x8xf32>,
    %c0_83 = arith.constant 0 : index
    %c1_84 = arith.constant 1 : index
    %c0_85 = arith.constant 0 : index
    %68 = vector.load %arg6[%c0_83, %c1_84, %c0_85] : memref<1x2x8xf32, #tpu.memory_space<vmem>>, vector<1x1x8xf32>
    %69 = vector.shape_cast %68 : vector<1x1x8xf32> to vector<1x8xf32>
    %70 = vector.shape_cast %64 : vector<1x8xf32> to vector<1x1x8xf32>
    tpu.vector_store %arg6[%c0_83, %c1_84, %c0_85], %70 {strides = array<i32>} : memref<1x2x8xf32, #tpu.memory_space<vmem>>, vector<1x1x8xf32>,
    return
  }
  func.func @transform_0(%arg0: i32) -> (i32, i32, i32, i32) {
    %c0_i32 = arith.constant 0 : i32
    %c0_i32_0 = arith.constant 0 : i32
    %c0_i32_1 = arith.constant 0 : i32
    %c0_i32_2 = arith.constant 0 : i32
    return %arg0, %c0_i32, %c0_i32_0, %c0_i32_1 : i32, i32, i32, i32
  }
  func.func @transform_1(%arg0: i32) -> (i32, i32, i32) {
    %c0_i32 = arith.constant 0 : i32
    %c0_i32_0 = arith.constant 0 : i32
    %c0_i32_1 = arith.constant 0 : i32
    %c0_i32_2 = arith.constant 0 : i32
    return %c0_i32, %c0_i32_0, %c0_i32_1 : i32, i32, i32
  }
  func.func @transform_2(%arg0: i32) -> (i32, i32) {
    %c0_i32 = arith.constant 0 : i32
    %c0_i32_0 = arith.constant 0 : i32
    %c0_i32_1 = arith.constant 0 : i32
    return %c0_i32, %c0_i32_0 : i32, i32
  }
  func.func @transform_3(%arg0: i32) -> (i32, i32) {
    %c0_i32 = arith.constant 0 : i32
    %c0_i32_0 = arith.constant 0 : i32
    %c0_i32_1 = arith.constant 0 : i32
    return %c0_i32, %c0_i32_0 : i32, i32
  }
  func.func @transform_4(%arg0: i32) -> (i32, i32, i32, i32) {
    %c0_i32 = arith.constant 0 : i32
    %c0_i32_0 = arith.constant 0 : i32
    %c0_i32_1 = arith.constant 0 : i32
    %c0_i32_2 = arith.constant 0 : i32
    return %arg0, %c0_i32, %c0_i32_0, %c0_i32_1 : i32, i32, i32, i32
  }
  func.func @transform_5(%arg0: i32) -> (i32, i32, i32) {
    %c0_i32 = arith.constant 0 : i32
    %c0_i32_0 = arith.constant 0 : i32
    %c0_i32_1 = arith.constant 0 : i32
    return %arg0, %c0_i32, %c0_i32_0 : i32, i32, i32
  }
}

module attributes {stable_mosaic.version = 11 : i64} {
  func.func @_stage3_kernel(%arg0: i32, %arg1: memref<1x16x16x8xf32, #tpu.memory_space<vmem>>, %arg2: memref<2x2x8xf32, #tpu.memory_space<vmem>>, %arg3: memref<2x8xf32, #tpu.memory_space<vmem>>, %arg4: memref<1x16x16x8xf32, #tpu.memory_space<vmem>>, %arg5: memref<2x2x8xf32, #tpu.memory_space<vmem>>, %arg6: memref<2x8xf32, #tpu.memory_space<vmem>>, %arg7: memref<1x16x16x8xf32, #tpu.memory_space<vmem>>) attributes {dimension_semantics = [#tpu.dimension_semantics<parallel>], iteration_bounds = array<i64: 2>, scalar_prefetch = 0 : i64, scratch_operands = 0 : i64, tpu.core_type = #tpu.core_type<tc>, window_params = [{transform_indices = @transform_0, window_bounds = array<i64: 1, 16, 16, 8>}, {pipeline_mode = #tpu.pipeline_mode<synchronous>, transform_indices = @transform_1, window_bounds = array<i64: 2, 2, 8>}, {pipeline_mode = #tpu.pipeline_mode<synchronous>, transform_indices = @transform_2, window_bounds = array<i64: 2, 8>}, {transform_indices = @transform_3, window_bounds = array<i64: 1, 16, 16, 8>}, {pipeline_mode = #tpu.pipeline_mode<synchronous>, transform_indices = @transform_4, window_bounds = array<i64: 2, 2, 8>}, {pipeline_mode = #tpu.pipeline_mode<synchronous>, transform_indices = @transform_5, window_bounds = array<i64: 2, 8>}, {transform_indices = @transform_6, window_bounds = array<i64: 1, 16, 16, 8>}]} {
    %c0 = arith.constant 0 : index
    %c0_0 = arith.constant 0 : index
    %c0_1 = arith.constant 0 : index
    %0 = vector.load %arg2[%c0, %c0_0, %c0_1] : memref<2x2x8xf32, #tpu.memory_space<vmem>>, vector<2x2x8xf32>
    %cst = arith.constant dense<0.000000e+00> : vector<2x8xf32>
    %1 = vector.multi_reduction <add>, %0, %cst [0] : vector<2x2x8xf32> to vector<2x8xf32>
    %2 = vector.extract_strided_slice %1 {offsets = [0, 0], sizes = [1, 8], strides = [1, 1]} : vector<2x8xf32> to vector<1x8xf32>
    %cst_2 = arith.constant 0.001953125 : f32
    %3 = vector.broadcast %cst_2 : f32 to vector<1x8xf32>
    %4 = arith.mulf %2, %3 : vector<1x8xf32>
    %5 = vector.extract_strided_slice %1 {offsets = [1, 0], sizes = [1, 8], strides = [1, 1]} : vector<2x8xf32> to vector<1x8xf32>
    %cst_3 = arith.constant 0.001953125 : f32
    %6 = vector.broadcast %cst_3 : f32 to vector<1x8xf32>
    %7 = arith.mulf %5, %6 : vector<1x8xf32>
    %8 = arith.mulf %4, %4 : vector<1x8xf32>
    %9 = arith.subf %7, %8 : vector<1x8xf32>
    %c0_4 = arith.constant 0 : index
    %c0_5 = arith.constant 0 : index
    %10 = vector.load %arg3[%c0_4, %c0_5] : memref<2x8xf32, #tpu.memory_space<vmem>>, vector<1x8xf32>
    %cst_6 = arith.constant 9.99999974E-6 : f32
    %11 = vector.broadcast %cst_6 : f32 to vector<1x8xf32>
    %12 = arith.addf %9, %11 : vector<1x8xf32>
    %13 = math.rsqrt %12 : vector<1x8xf32>
    %14 = arith.mulf %10, %13 : vector<1x8xf32>
    %c1 = arith.constant 1 : index
    %c0_7 = arith.constant 0 : index
    %15 = vector.load %arg3[%c1, %c0_7] : memref<2x8xf32, #tpu.memory_space<vmem>>, vector<1x8xf32>
    %16 = arith.mulf %4, %14 : vector<1x8xf32>
    %17 = arith.subf %15, %16 : vector<1x8xf32>
    %c0_8 = arith.constant 0 : index
    %c0_9 = arith.constant 0 : index
    %c0_10 = arith.constant 0 : index
    %c0_11 = arith.constant 0 : index
    %18 = vector.load %arg1[%c0_8, %c0_9, %c0_10, %c0_11] : memref<1x16x16x8xf32, #tpu.memory_space<vmem>>, vector<1x16x16x8xf32>
    %19 = vector.shape_cast %18 : vector<1x16x16x8xf32> to vector<256x8xf32>
    %20 = vector.broadcast %14 : vector<1x8xf32> to vector<256x8xf32>
    %21 = arith.mulf %19, %20 : vector<256x8xf32>
    %22 = vector.broadcast %17 : vector<1x8xf32> to vector<256x8xf32>
    %23 = arith.addf %21, %22 : vector<256x8xf32>
    %c0_12 = arith.constant 0 : index
    %c0_13 = arith.constant 0 : index
    %c0_14 = arith.constant 0 : index
    %24 = vector.load %arg5[%c0_12, %c0_13, %c0_14] : memref<2x2x8xf32, #tpu.memory_space<vmem>>, vector<2x2x8xf32>
    %cst_15 = arith.constant dense<0.000000e+00> : vector<2x8xf32>
    %25 = vector.multi_reduction <add>, %24, %cst_15 [0] : vector<2x2x8xf32> to vector<2x8xf32>
    %26 = vector.extract_strided_slice %25 {offsets = [0, 0], sizes = [1, 8], strides = [1, 1]} : vector<2x8xf32> to vector<1x8xf32>
    %cst_16 = arith.constant 0.001953125 : f32
    %27 = vector.broadcast %cst_16 : f32 to vector<1x8xf32>
    %28 = arith.mulf %26, %27 : vector<1x8xf32>
    %29 = vector.extract_strided_slice %25 {offsets = [1, 0], sizes = [1, 8], strides = [1, 1]} : vector<2x8xf32> to vector<1x8xf32>
    %cst_17 = arith.constant 0.001953125 : f32
    %30 = vector.broadcast %cst_17 : f32 to vector<1x8xf32>
    %31 = arith.mulf %29, %30 : vector<1x8xf32>
    %32 = arith.mulf %28, %28 : vector<1x8xf32>
    %33 = arith.subf %31, %32 : vector<1x8xf32>
    %c0_18 = arith.constant 0 : index
    %c0_19 = arith.constant 0 : index
    %34 = vector.load %arg6[%c0_18, %c0_19] : memref<2x8xf32, #tpu.memory_space<vmem>>, vector<1x8xf32>
    %cst_20 = arith.constant 9.99999974E-6 : f32
    %35 = vector.broadcast %cst_20 : f32 to vector<1x8xf32>
    %36 = arith.addf %33, %35 : vector<1x8xf32>
    %37 = math.rsqrt %36 : vector<1x8xf32>
    %38 = arith.mulf %34, %37 : vector<1x8xf32>
    %c1_21 = arith.constant 1 : index
    %c0_22 = arith.constant 0 : index
    %39 = vector.load %arg6[%c1_21, %c0_22] : memref<2x8xf32, #tpu.memory_space<vmem>>, vector<1x8xf32>
    %40 = arith.mulf %28, %38 : vector<1x8xf32>
    %41 = arith.subf %39, %40 : vector<1x8xf32>
    %c0_23 = arith.constant 0 : index
    %c0_24 = arith.constant 0 : index
    %c0_25 = arith.constant 0 : index
    %c0_26 = arith.constant 0 : index
    %42 = vector.load %arg4[%c0_23, %c0_24, %c0_25, %c0_26] : memref<1x16x16x8xf32, #tpu.memory_space<vmem>>, vector<1x16x16x8xf32>
    %43 = vector.shape_cast %42 : vector<1x16x16x8xf32> to vector<256x8xf32>
    %44 = vector.broadcast %38 : vector<1x8xf32> to vector<256x8xf32>
    %45 = arith.mulf %43, %44 : vector<256x8xf32>
    %46 = arith.addf %23, %45 : vector<256x8xf32>
    %47 = vector.broadcast %41 : vector<1x8xf32> to vector<256x8xf32>
    %48 = arith.addf %46, %47 : vector<256x8xf32>
    %cst_27 = arith.constant 0.000000e+00 : f32
    %49 = vector.broadcast %cst_27 : f32 to vector<256x8xf32>
    %50 = arith.maximumf %48, %49 : vector<256x8xf32>
    %51 = vector.shape_cast %50 : vector<256x8xf32> to vector<1x16x16x8xf32>
    %c0_28 = arith.constant 0 : index
    %c0_29 = arith.constant 0 : index
    %c0_30 = arith.constant 0 : index
    %c0_31 = arith.constant 0 : index
    %52 = vector.load %arg7[%c0_28, %c0_29, %c0_30, %c0_31] : memref<1x16x16x8xf32, #tpu.memory_space<vmem>>, vector<1x16x16x8xf32>
    tpu.vector_store %arg7[%c0_28, %c0_29, %c0_30, %c0_31], %51 {strides = array<i32>} : memref<1x16x16x8xf32, #tpu.memory_space<vmem>>, vector<1x16x16x8xf32>,
    return
  }
  func.func @transform_0(%arg0: i32) -> (i32, i32, i32, i32) {
    %c0_i32 = arith.constant 0 : i32
    %c0_i32_0 = arith.constant 0 : i32
    %c0_i32_1 = arith.constant 0 : i32
    %c0_i32_2 = arith.constant 0 : i32
    return %arg0, %c0_i32, %c0_i32_0, %c0_i32_1 : i32, i32, i32, i32
  }
  func.func @transform_1(%arg0: i32) -> (i32, i32, i32) {
    %c0_i32 = arith.constant 0 : i32
    %c0_i32_0 = arith.constant 0 : i32
    %c0_i32_1 = arith.constant 0 : i32
    %c0_i32_2 = arith.constant 0 : i32
    return %c0_i32, %c0_i32_0, %c0_i32_1 : i32, i32, i32
  }
  func.func @transform_2(%arg0: i32) -> (i32, i32) {
    %c0_i32 = arith.constant 0 : i32
    %c0_i32_0 = arith.constant 0 : i32
    %c0_i32_1 = arith.constant 0 : i32
    return %c0_i32, %c0_i32_0 : i32, i32
  }
  func.func @transform_3(%arg0: i32) -> (i32, i32, i32, i32) {
    %c0_i32 = arith.constant 0 : i32
    %c0_i32_0 = arith.constant 0 : i32
    %c0_i32_1 = arith.constant 0 : i32
    %c0_i32_2 = arith.constant 0 : i32
    return %arg0, %c0_i32, %c0_i32_0, %c0_i32_1 : i32, i32, i32, i32
  }
  func.func @transform_4(%arg0: i32) -> (i32, i32, i32) {
    %c0_i32 = arith.constant 0 : i32
    %c0_i32_0 = arith.constant 0 : i32
    %c0_i32_1 = arith.constant 0 : i32
    %c0_i32_2 = arith.constant 0 : i32
    return %c0_i32, %c0_i32_0, %c0_i32_1 : i32, i32, i32
  }
  func.func @transform_5(%arg0: i32) -> (i32, i32) {
    %c0_i32 = arith.constant 0 : i32
    %c0_i32_0 = arith.constant 0 : i32
    %c0_i32_1 = arith.constant 0 : i32
    return %c0_i32, %c0_i32_0 : i32, i32
  }
  func.func @transform_6(%arg0: i32) -> (i32, i32, i32, i32) {
    %c0_i32 = arith.constant 0 : i32
    %c0_i32_0 = arith.constant 0 : i32
    %c0_i32_1 = arith.constant 0 : i32
    %c0_i32_2 = arith.constant 0 : i32
    return %arg0, %c0_i32, %c0_i32_0, %c0_i32_1 : i32, i32, i32, i32
  }
}

</mosaic_0001>

<llo_original>
// kernel: basic_block.5
$region0: #{basic_block.5}
  #allocation0 [shape = 'u32[]', space=smem, size = 0x4, offset = 0x4, fixed_abs, tag = 'smem constant byte address 0x4 - core index']
  #allocation1 [shape = 'u32[144,128]{1,0:T(1,128)}', space=vmem, size = 0x12000, scoped, tag = 'internal scratch']
  %s0 = inlined_call_operand.vmem [shape: f32[2,16,16,8], index: 0, kind: input, shape index: {}]
  %s1 = inlined_call_operand.vmem [shape: f32[2,2,8], index: 1, kind: input, shape index: {}]
  %s2 = inlined_call_operand.vmem [shape: f32[2,8], index: 2, kind: input, shape index: {}]
  %s3 = inlined_call_operand.vmem [shape: f32[2,16,16,8], index: 3, kind: input, shape index: {}]
  %s4 = inlined_call_operand.vmem [shape: f32[2,2,8], index: 4, kind: input, shape index: {}]
  %s5 = inlined_call_operand.vmem [shape: f32[2,8], index: 5, kind: input, shape index: {}]
  %s6 = inlined_call_operand.vmem [shape: f32[2,16,16,8], index: 6, kind: output, shape index: {}]
  %s7 = sld [smem:[#allocation0]]
  $region57: #{basic_block.5} parent=0
    _
  %s9 = ssub.s32 1, %s7
  %s10 = scalar_select 0, %s9, %s7
  loop: start=0, step=1, limit=4
  $region2: #{basic_block.5} parent=0 // loop_pre_header
    _
  $region3: #{basic_block.5} parent=0 // loop_header
    %s12 = sphi 0, %s16
    %p13 = scmp.ge.s32.totalorder %s12, 4
    %s22 = sphi 0, %s24
    %s25 = sphi 0, %s22
    %s26 = sphi 0, %s25
    %s42 = sphi 0, %s26
    %s46 = sphi 0, %s46
    %s48 = sphi 0, %s46
    %s49 = sphi 0, %s48
    %s63 = sphi 0, %s49
    %s67 = sphi 0, %s67
    %s69 = sphi 0, %s67
    %s70 = sphi 0, %s69
    %s84 = sphi 0, %s70
    %s90 = sphi 0, %s92
    %s93 = sphi 0, %s90
    %s94 = sphi 0, %s93
    %s110 = sphi 0, %s94
    %s114 = sphi 0, %s114
    %s116 = sphi 0, %s114
    %s117 = sphi 0, %s116
    %s131 = sphi 0, %s117
    %s135 = sphi 0, %s135
    %s137 = sphi 0, %s135
    %s138 = sphi 0, %s137
    %s152 = sphi 0, %s138
    %s158 = sphi 0, %s160
    %s161 = sphi 0, %s158
    %s162 = sphi 0, %s161
    %s178 = sphi 0, %s162
  $region4: #{basic_block.5} parent=0 // loop_header_branch
    %15 = sbr.rel (%p13) target = $region8
  $region5: #{basic_block.5} parent=0 // loop_body
    %s17 = ssub.s32 %s12, 1
    %s18 = ssub.s32 %s12, 2
    %s19 = sadd.s32 %s12, 1
    %s20 = ssub.s32 %s12, %s19
    %p21 = scmp.eq.s32.totalorder %s20, 0
    %s23 = sadd.s32 %s22, 1
    %s24 = scalar_select %p21, %s22, %s23
    %p27 = pneg %p21
    %p28 = scmp.eq.s32.totalorder %s12, 1
    %p29 = por %p27, %p28
    %p30 = scmp.ne.s32.totalorder %s22, %s25
    %p31 = scmp.eq.s32.totalorder %s12, 0
    %p32 = por %p30, %p31
    %p33 = scmp.ne.s32.totalorder %s22, %s25
    %p34 = scmp.eq.s32.totalorder %s17, 1
    %p35 = por %p33, %p34
    %p36 = scmp.ne.s32.totalorder %s25, %s26
    %p37 = scmp.eq.s32.totalorder %s17, 0
    %p38 = por %p36, %p37
    %p39 = scmp.ne.s32.totalorder %s25, %s26
    %p40 = scmp.eq.s32.totalorder %s18, 1
    %p41 = por %p39, %p40
    %p43 = scmp.ne.s32.totalorder %s26, %s42
    %p44 = scmp.eq.s32.totalorder %s18, 0
    %p45 = por %p43, %p44
    %s47 = sadd.s32 %s46, 1
    %p50 = scmp.eq.s32.totalorder %s12, 1
    %p51 = scmp.ne.s32.totalorder %s46, %s48
    %p52 = scmp.eq.s32.totalorder %s12, 0
    %p53 = por %p51, %p52
    %p54 = scmp.ne.s32.totalorder %s46, %s48
    %p55 = scmp.eq.s32.totalorder %s17, 1
    %p56 = por %p54, %p55
    %p57 = scmp.ne.s32.totalorder %s48, %s49
    %p58 = scmp.eq.s32.totalorder %s17, 0
    %p59 = por %p57, %p58
    %p60 = scmp.ne.s32.totalorder %s48, %s49
    %p61 = scmp.eq.s32.totalorder %s18, 1
    %p62 = por %p60, %p61
    %p64 = scmp.ne.s32.totalorder %s49, %s63
    %p65 = scmp.eq.s32.totalorder %s18, 0
    %p66 = por %p64, %p65
    %s68 = sadd.s32 %s67, 1
    %p71 = scmp.eq.s32.totalorder %s12, 1
    %p72 = scmp.ne.s32.totalorder %s67, %s69
    %p73 = scmp.eq.s32.totalorder %s12, 0
    %p74 = por %p72, %p73
    %p75 = scmp.ne.s32.totalorder %s67, %s69
    %p76 = scmp.eq.s32.totalorder %s17, 1
    %p77 = por %p75, %p76
    %p78 = scmp.ne.s32.totalorder %s69, %s70
    %p79 = scmp.eq.s32.totalorder %s17, 0
    %p80 = por %p78, %p79
    %p81 = scmp.ne.s32.totalorder %s69, %s70
    %p82 = scmp.eq.s32.totalorder %s18, 1
    %p83 = por %p81, %p82
    %p85 = scmp.ne.s32.totalorder %s70, %s84
    %p86 = scmp.eq.s32.totalorder %s18, 0
    %p87 = por %p85, %p86
    %s88 = ssub.s32 %s12, %s19
    %p89 = scmp.eq.s32.totalorder %s88, 0
    %s91 = sadd.s32 %s90, 1
    %s92 = scalar_select %p89, %s90, %s91
    %p95 = pneg %p89
    %p96 = scmp.eq.s32.totalorder %s12, 1
    %p97 = por %p95, %p96
    %p98 = scmp.ne.s32.totalorder %s90, %s93
    %p99 = scmp.eq.s32.totalorder %s12, 0
    %p100 = por %p98, %p99
    %p101 = scmp.ne.s32.totalorder %s90, %s93
    %p102 = scmp.eq.s32.totalorder %s17, 1
    %p103 = por %p101, %p102
    %p104 = scmp.ne.s32.totalorder %s93, %s94
    %p105 = scmp.eq.s32.totalorder %s17, 0
    %p106 = por %p104, %p105
    %p107 = scmp.ne.s32.totalorder %s93, %s94
    %p108 = scmp.eq.s32.totalorder %s18, 1
    %p109 = por %p107, %p108
    %p111 = scmp.ne.s32.totalorder %s94, %s110
    %p112 = scmp.eq.s32.totalorder %s18, 0
    %p113 = por %p111, %p112
    %s115 = sadd.s32 %s114, 1
    %p118 = scmp.eq.s32.totalorder %s12, 1
    %p119 = scmp.ne.s32.totalorder %s114, %s116
    %p120 = scmp.eq.s32.totalorder %s12, 0
    %p121 = por %p119, %p120
    %p122 = scmp.ne.s32.totalorder %s114, %s116
    %p123 = scmp.eq.s32.totalorder %s17, 1
    %p124 = por %p122, %p123
    %p125 = scmp.ne.s32.totalorder %s116, %s117
    %p126 = scmp.eq.s32.totalorder %s17, 0
    %p127 = por %p125, %p126
    %p128 = scmp.ne.s32.totalorder %s116, %s117
    %p129 = scmp.eq.s32.totalorder %s18, 1
    %p130 = por %p128, %p129
    %p132 = scmp.ne.s32.totalorder %s117, %s131
    %p133 = scmp.eq.s32.totalorder %s18, 0
    %p134 = por %p132, %p133
    %s136 = sadd.s32 %s135, 1
    %p139 = scmp.eq.s32.totalorder %s12, 1
    %p140 = scmp.ne.s32.totalorder %s135, %s137
    %p141 = scmp.eq.s32.totalorder %s12, 0
    %p142 = por %p140, %p141
    %p143 = scmp.ne.s32.totalorder %s135, %s137
    %p144 = scmp.eq.s32.totalorder %s17, 1
    %p145 = por %p143, %p144
    %p146 = scmp.ne.s32.totalorder %s137, %s138
    %p147 = scmp.eq.s32.totalorder %s17, 0
    %p148 = por %p146, %p147
    %p149 = scmp.ne.s32.totalorder %s137, %s138
    %p150 = scmp.eq.s32.totalorder %s18, 1
    %p151 = por %p149, %p150
    %p153 = scmp.ne.s32.totalorder %s138, %s152
    %p154 = scmp.eq.s32.totalorder %s18, 0
    %p155 = por %p153, %p154
    %s156 = ssub.s32 %s12, %s19
    %p157 = scmp.eq.s32.totalorder %s156, 0
    %s159 = sadd.s32 %s158, 1
    %s160 = scalar_select %p157, %s158, %s159
    %p163 = pneg %p157
    %p164 = scmp.eq.s32.totalorder %s12, 1
    %p165 = por %p163, %p164
    %p166 = scmp.ne.s32.totalorder %s158, %s161
    %p167 = scmp.eq.s32.totalorder %s12, 0
    %p168 = por %p166, %p167
    %p169 = scmp.ne.s32.totalorder %s158, %s161
    %p170 = scmp.eq.s32.totalorder %s17, 1
    %p171 = por %p169, %p170
    %p172 = scmp.ne.s32.totalorder %s161, %s162
    %p173 = scmp.eq.s32.totalorder %s17, 0
    %p174 = por %p172, %p173
    %p175 = scmp.ne.s32.totalorder %s161, %s162
    %p176 = scmp.eq.s32.totalorder %s18, 1
    %p177 = por %p175, %p176
    %p179 = scmp.ne.s32.totalorder %s162, %s178
    %p180 = scmp.eq.s32.totalorder %s18, 0
    %p181 = por %p179, %p180
    %p182 = scmp.le.s32.totalorder 1, %s12
    %p183 = scmp.lt.s32.totalorder %s12, 3
    %p184 = pnand %p182, %p183
    %p185 = pneg %p184
    // Predicated region
    $region9: #{basic_block.5} parent=5 // pred_check
      _
    $region10: #{basic_block.5} parent=5 // pred_check_branch
      %187 = sbr.rel (%p184) target = $region12
    $region11: #{basic_block.5} parent=5 // pred_region
      %s188 = ssub.s32 %s12, 1
      // Predicated region
      $region13: #{basic_block.5} parent=11 // pred_check
        %p189 = pneg %p59
      $region14: #{basic_block.5} parent=11 // pred_check_branch
        %191 = sbr.rel (%p189) target = $region16
      $region15: #{basic_block.5} parent=11 // pred_region
        _
      $region16: #{basic_block.5} parent=11 // pred_fallthru
        _
      // Predicated region
      $region17: #{basic_block.5} parent=11 // pred_check
        %p192 = pneg %p80
      $region18: #{basic_block.5} parent=11 // pred_check_branch
        %194 = sbr.rel (%p192) target = $region20
      $region19: #{basic_block.5} parent=11 // pred_region
        _
      $region20: #{basic_block.5} parent=11 // pred_fallthru
        _
      // Predicated region
      $region21: #{basic_block.5} parent=11 // pred_check
        %p195 = pneg %p127
      $region22: #{basic_block.5} parent=11 // pred_check_branch
        %197 = sbr.rel (%p195) target = $region24
      $region23: #{basic_block.5} parent=11 // pred_region
        _
      $region24: #{basic_block.5} parent=11 // pred_fallthru
        _
      // Predicated region
      $region25: #{basic_block.5} parent=11 // pred_check
        %p198 = pneg %p148
      $region26: #{basic_block.5} parent=11 // pred_check_branch
        %200 = sbr.rel (%p198) target = $region28
      $region27: #{basic_block.5} parent=11 // pred_region
        _
      $region28: #{basic_block.5} parent=11 // pred_fallthru
        _
    $region12: #{basic_block.5} parent=5 // pred_fallthru
      _
    %p201 = scmp.lt.s32.totalorder %s12, 2
    // Predicated region
    $region29: #{basic_block.5} parent=5 // pred_check
      %p202 = pneg %p201
    $region30: #{basic_block.5} parent=5 // pred_check_branch
      %204 = sbr.rel (%p202) target = $region32
    $region31: #{basic_block.5} parent=5 // pred_region
      // Predicated region
      $region33: #{basic_block.5} parent=31 // pred_check
        %p205 = pneg %p32
      $region34: #{basic_block.5} parent=31 // pred_check_branch
        %207 = sbr.rel (%p205) target = $region36
      $region35: #{basic_block.5} parent=31 // pred_region
        %p208 = scmp.lt.s32.totalorder %s12, 1
        %s209 = scalar_select %p208, %s12, 1
        %s210 = smul.addr %s209, 32
        %s211 = smul.addr %s210, 8
        %s212 = scalar_lea.vmem %s0, %s211
      $region36: #{basic_block.5} parent=31 // pred_fallthru
        _
      // Predicated region
      $region37: #{basic_block.5} parent=31 // pred_check
        %p213 = pneg %p100
      $region38: #{basic_block.5} parent=31 // pred_check_branch
        %215 = sbr.rel (%p213) target = $region40
      $region39: #{basic_block.5} parent=31 // pred_region
        %p216 = scmp.lt.s32.totalorder %s12, 1
        %s217 = scalar_select %p216, %s12, 1
        %s218 = smul.addr %s217, 32
        %s219 = smul.addr %s218, 8
        %s220 = scalar_lea.vmem %s3, %s219
      $region40: #{basic_block.5} parent=31 // pred_fallthru
        _
    $region32: #{basic_block.5} parent=5 // pred_fallthru
      _
    %p221 = scmp.le.s32.totalorder 1, %s12
    %p222 = scmp.lt.s32.totalorder %s12, 3
    %p223 = pnand %p221, %p222
    %p224 = pneg %p223
    // Predicated region
    $region41: #{basic_block.5} parent=5 // pred_check
      _
    $region42: #{basic_block.5} parent=5 // pred_check_branch
      %226 = sbr.rel (%p223) target = $region44
    $region43: #{basic_block.5} parent=5 // pred_region
      %s227 = ssub.s32 %s12, 1
      %p228 = scmp.lt.s32.totalorder %s17, 1
      %s229 = scalar_select %p228, %s17, 1
      %s230 = smul.addr %s229, 32
      %s231 = smul.addr %s230, 8
      %s232 = scalar_lea.vmem %s0, %s231
      %p233 = pneg %p38
      %p234 = pneg %p35
      %p235 = pneg %p59
      %p236 = pneg %p56
      %p237 = pneg %p80
      %p238 = pneg %p77
      %p239 = scmp.lt.s32.totalorder %s17, 1
      %s240 = scalar_select %p239, %s17, 1
      %s241 = smul.addr %s240, 32
      %s242 = smul.addr %s241, 8
      %s243 = scalar_lea.vmem %s3, %s242
      %p244 = pneg %p106
      %p245 = pneg %p103
      %p246 = pneg %p127
      %p247 = pneg %p124
      %p248 = pneg %p148
      %p249 = pneg %p145
      %p250 = pneg %p174
      %p251 = pneg %p171
      %p252 = scmp.lt.s32.totalorder %s17, 1
      %s253 = scalar_select %p252, %s17, 1
      %s254 = smul.addr %s253, 32
      %s255 = smul.addr %s254, 8
      %s256 = scalar_lea.vmem %s6, %s255
      %p257 = scmp.lt.s32.totalorder %s17, 1
      %s258 = scalar_select %p257, %s17, 1
      %s259 = smul.addr %s258, 32
      %s260 = smul.addr %s259, 8
      %s261 = scalar_lea.vmem %s0, %s260
      %p262 = scmp.lt.s32.totalorder %s17, 1
      %s263 = scalar_select %p262, %s17, 1
      %s264 = smul.addr %s263, 32
      %s265 = smul.addr %s264, 8
      %s266 = scalar_lea.vmem %s3, %s265
      %p267 = scmp.lt.s32.totalorder %s17, 1
      %s268 = scalar_select %p267, %s17, 1
      %s269 = smul.addr %s268, 32
      %s270 = smul.addr %s269, 8
      %s271 = scalar_lea.vmem %s6, %s270
      %v272 = vld [vmem:[%s1] sm:$0x3]
      %v273 = vld [vmem:[%s1 + $0x2] sm:$0x3]
      %vm274 = vcmask 58368
      %v275 = vsel %vm274, %v272, 0.0
      %v276 = vsel %vm274, %v273, 0.0
      %v277 = vadd.f32 %v275, %v276
      %v278 = vmul.f32 %v277, 0.001953125
      %v279 = vmul.f32 %v278, %v278
      %v281 = vrot.slane %v279, 7
      %v283 = vsub.f32 %v278, %v281
      %v284 = vld [vmem:[%s2] sm:$0x1]
      %v285 = vadd.f32 %v283, 1e-05
      %v286 = vrsqrt.pop %v285
      %v288 = vrot.slane %v286, 1
      %v290 = vmul.f32 %v284, %v288
      %v291 = vld [vmem:[%s2 + $0x1] sm:$0x1]
      %v292 = vmul.f32 %v278, %v290
      %v293 = vsub.f32 %v291, %v292
      %v294 = vld [vmem:[%s261] sm:$0xff]
      %v295 = vld [vmem:[%s261 + $0x8] sm:$0xff]
      %v296 = vld [vmem:[%s261 + $0x10] sm:$0xff]
      %v297 = vld [vmem:[%s261 + $0x18] sm:$0xff]
      %v298 = vld [vmem:[%s261 + $0x20] sm:$0xff]
      %v299 = vld [vmem:[%s261 + $0x28] sm:$0xff]
      %v300 = vld [vmem:[%s261 + $0x30] sm:$0xff]
      %v301 = vld [vmem:[%s261 + $0x38] sm:$0xff]
      %v302 = vld [vmem:[%s261 + $0x40] sm:$0xff]
      %v303 = vld [vmem:[%s261 + $0x48] sm:$0xff]
      %v304 = vld [vmem:[%s261 + $0x50] sm:$0xff]
      %v305 = vld [vmem:[%s261 + $0x58] sm:$0xff]
      %v306 = vld [vmem:[%s261 + $0x60] sm:$0xff]
      %v307 = vld [vmem:[%s261 + $0x68] sm:$0xff]
      %v308 = vld [vmem:[%s261 + $0x70] sm:$0xff]
      %v309 = vld [vmem:[%s261 + $0x78] sm:$0xff]
      %v310 = vld [vmem:[%s261 + $0x80] sm:$0xff]
      %v311 = vld [vmem:[%s261 + $0x88] sm:$0xff]
      %v312 = vld [vmem:[%s261 + $0x90] sm:$0xff]
      %v313 = vld [vmem:[%s261 + $0x98] sm:$0xff]
      %v314 = vld [vmem:[%s261 + $0xa0] sm:$0xff]
      %v315 = vld [vmem:[%s261 + $0xa8] sm:$0xff]
      %v316 = vld [vmem:[%s261 + $0xb0] sm:$0xff]
      %v317 = vld [vmem:[%s261 + $0xb8] sm:$0xff]
      %v318 = vld [vmem:[%s261 + $0xc0] sm:$0xff]
      %v319 = vld [vmem:[%s261 + $0xc8] sm:$0xff]
      %v320 = vld [vmem:[%s261 + $0xd0] sm:$0xff]
      %v321 = vld [vmem:[%s261 + $0xd8] sm:$0xff]
      %v322 = vld [vmem:[%s261 + $0xe0] sm:$0xff]
      %v323 = vld [vmem:[%s261 + $0xe8] sm:$0xff]
      %v324 = vld [vmem:[%s261 + $0xf0] sm:$0xff]
      %v325 = vld [vmem:[%s261 + $0xf8] sm:$0xff]
      %v326 = vlaneseq
      %v327 = vshrl.u32 %v326, 7
      %v328 = vsub.s32 0, %v327
      %v329 = vrot.slane %v290, %v328
      %v330 = vmul.f32 %v294, %v329
      %v331 = vmul.f32 %v295, %v329
      %v332 = vmul.f32 %v296, %v329
      %v333 = vmul.f32 %v297, %v329
      %v334 = vmul.f32 %v298, %v329
      %v335 = vmul.f32 %v299, %v329
      %v336 = vmul.f32 %v300, %v329
      %v337 = vmul.f32 %v301, %v329
      %v338 = vmul.f32 %v302, %v329
      %v339 = vmul.f32 %v303, %v329
      %v340 = vmul.f32 %v304, %v329
      %v341 = vmul.f32 %v305, %v329
      %v342 = vmul.f32 %v306, %v329
      %v343 = vmul.f32 %v307, %v329
      %v344 = vmul.f32 %v308, %v329
      %v345 = vmul.f32 %v309, %v329
      %v346 = vmul.f32 %v310, %v329
      %v347 = vmul.f32 %v311, %v329
      %v348 = vmul.f32 %v312, %v329
      %v349 = vmul.f32 %v313, %v329
      %v350 = vmul.f32 %v314, %v329
      %v351 = vmul.f32 %v315, %v329
      %v352 = vmul.f32 %v316, %v329
      %v353 = vmul.f32 %v317, %v329
      %v354 = vmul.f32 %v318, %v329
      %v355 = vmul.f32 %v319, %v329
      %v356 = vmul.f32 %v320, %v329
      %v357 = vmul.f32 %v321, %v329
      %v358 = vmul.f32 %v322, %v329
      %v359 = vmul.f32 %v323, %v329
      %v360 = vmul.f32 %v324, %v329
      %v361 = vmul.f32 %v325, %v329
      %v362 = vlaneseq
      %v363 = vshrl.u32 %v362, 7
      %v364 = vsub.s32 0, %v363
      %v365 = vrot.slane %v293, %v364
      %v366 = vadd.f32 %v330, %v365
      %v367 = vadd.f32 %v331, %v365
      %v368 = vadd.f32 %v332, %v365
      %v369 = vadd.f32 %v333, %v365
      %v370 = vadd.f32 %v334, %v365
      %v371 = vadd.f32 %v335, %v365
      %v372 = vadd.f32 %v336, %v365
      %v373 = vadd.f32 %v337, %v365
      %v374 = vadd.f32 %v338, %v365
      %v375 = vadd.f32 %v339, %v365
      %v376 = vadd.f32 %v340, %v365
      %v377 = vadd.f32 %v341, %v365
      %v378 = vadd.f32 %v342, %v365
      %v379 = vadd.f32 %v343, %v365
      %v380 = vadd.f32 %v344, %v365
      %v381 = vadd.f32 %v345, %v365
      %v382 = vadd.f32 %v346, %v365
      %v383 = vadd.f32 %v347, %v365
      %v384 = vadd.f32 %v348, %v365
      %v385 = vadd.f32 %v349, %v365
      %v386 = vadd.f32 %v350, %v365
      %v387 = vadd.f32 %v351, %v365
      %v388 = vadd.f32 %v352, %v365
      %v389 = vadd.f32 %v353, %v365
      %v390 = vadd.f32 %v354, %v365
      %v391 = vadd.f32 %v355, %v365
      %v392 = vadd.f32 %v356, %v365
      %v393 = vadd.f32 %v357, %v365
      %v394 = vadd.f32 %v358, %v365
      %v395 = vadd.f32 %v359, %v365
      %v396 = vadd.f32 %v360, %v365
      %v397 = vadd.f32 %v361, %v365
      %v398 = vld [vmem:[%s4] sm:$0x3]
      %v399 = vld [vmem:[%s4 + $0x2] sm:$0x3]
      %v400 = vsel %vm274, %v398, 0.0
      %v401 = vsel %vm274, %v399, 0.0
      %v402 = vadd.f32 %v400, %v401
      %v403 = vmul.f32 %v402, 0.001953125
      %v404 = vmul.f32 %v403, %v403
      %v406 = vrot.slane %v404, 7
      %v408 = vsub.f32 %v403, %v406
      %v409 = vld [vmem:[%s5] sm:$0x1]
      %v410 = vadd.f32 %v408, 1e-05
      %v411 = vrsqrt.pop %v410
      %v413 = vrot.slane %v411, 1
      %v415 = vmul.f32 %v409, %v413
      %v416 = vld [vmem:[%s5 + $0x1] sm:$0x1]
      %v417 = vmul.f32 %v403, %v415
      %v418 = vsub.f32 %v416, %v417
      %v419 = vld [vmem:[%s266] sm:$0xff]
      %v420 = vld [vmem:[%s266 + $0x8] sm:$0xff]
      %v421 = vld [vmem:[%s266 + $0x10] sm:$0xff]
      %v422 = vld [vmem:[%s266 + $0x18] sm:$0xff]
      %v423 = vld [vmem:[%s266 + $0x20] sm:$0xff]
      %v424 = vld [vmem:[%s266 + $0x28] sm:$0xff]
      %v425 = vld [vmem:[%s266 + $0x30] sm:$0xff]
      %v426 = vld [vmem:[%s266 + $0x38] sm:$0xff]
      %v427 = vld [vmem:[%s266 + $0x40] sm:$0xff]
      %v428 = vld [vmem:[%s266 + $0x48] sm:$0xff]
      %v429 = vld [vmem:[%s266 + $0x50] sm:$0xff]
      %v430 = vld [vmem:[%s266 + $0x58] sm:$0xff]
      %v431 = vld [vmem:[%s266 + $0x60] sm:$0xff]
      %v432 = vld [vmem:[%s266 + $0x68] sm:$0xff]
      %v433 = vld [vmem:[%s266 + $0x70] sm:$0xff]
      %v434 = vld [vmem:[%s266 + $0x78] sm:$0xff]
      %v435 = vld [vmem:[%s266 + $0x80] sm:$0xff]
      %v436 = vld [vmem:[%s266 + $0x88] sm:$0xff]
      %v437 = vld [vmem:[%s266 + $0x90] sm:$0xff]
      %v438 = vld [vmem:[%s266 + $0x98] sm:$0xff]
      %v439 = vld [vmem:[%s266 + $0xa0] sm:$0xff]
      %v440 = vld [vmem:[%s266 + $0xa8] sm:$0xff]
      %v441 = vld [vmem:[%s266 + $0xb0] sm:$0xff]
      %v442 = vld [vmem:[%s266 + $0xb8] sm:$0xff]
      %v443 = vld [vmem:[%s266 + $0xc0] sm:$0xff]
      %v444 = vld [vmem:[%s266 + $0xc8] sm:$0xff]
      %v445 = vld [vmem:[%s266 + $0xd0] sm:$0xff]
      %v446 = vld [vmem:[%s266 + $0xd8] sm:$0xff]
      %v447 = vld [vmem:[%s266 + $0xe0] sm:$0xff]
      %v448 = vld [vmem:[%s266 + $0xe8] sm:$0xff]
      %v449 = vld [vmem:[%s266 + $0xf0] sm:$0xff]
      %v450 = vld [vmem:[%s266 + $0xf8] sm:$0xff]
      %v451 = vlaneseq
      %v452 = vshrl.u32 %v451, 7
      %v453 = vsub.s32 0, %v452
      %v454 = vrot.slane %v415, %v453
      %v455 = vmul.f32 %v419, %v454
      %v456 = vmul.f32 %v420, %v454
      %v457 = vmul.f32 %v421, %v454
      %v458 = vmul.f32 %v422, %v454
      %v459 = vmul.f32 %v423, %v454
      %v460 = vmul.f32 %v424, %v454
      %v461 = vmul.f32 %v425, %v454
      %v462 = vmul.f32 %v426, %v454
      %v463 = vmul.f32 %v427, %v454
      %v464 = vmul.f32 %v428, %v454
      %v465 = vmul.f32 %v429, %v454
      %v466 = vmul.f32 %v430, %v454
      %v467 = vmul.f32 %v431, %v454
      %v468 = vmul.f32 %v432, %v454
      %v469 = vmul.f32 %v433, %v454
      %v470 = vmul.f32 %v434, %v454
      %v471 = vmul.f32 %v435, %v454
      %v472 = vmul.f32 %v436, %v454
      %v473 = vmul.f32 %v437, %v454
      %v474 = vmul.f32 %v438, %v454
      %v475 = vmul.f32 %v439, %v454
      %v476 = vmul.f32 %v440, %v454
      %v477 = vmul.f32 %v441, %v454
      %v478 = vmul.f32 %v442, %v454
      %v479 = vmul.f32 %v443, %v454
      %v480 = vmul.f32 %v444, %v454
      %v481 = vmul.f32 %v445, %v454
      %v482 = vmul.f32 %v446, %v454
      %v483 = vmul.f32 %v447, %v454
      %v484 = vmul.f32 %v448, %v454
      %v485 = vmul.f32 %v449, %v454
      %v486 = vmul.f32 %v450, %v454
      %v487 = vadd.f32 %v366, %v455
      %v488 = vadd.f32 %v367, %v456
      %v489 = vadd.f32 %v368, %v457
      %v490 = vadd.f32 %v369, %v458
      %v491 = vadd.f32 %v370, %v459
      %v492 = vadd.f32 %v371, %v460
      %v493 = vadd.f32 %v372, %v461
      %v494 = vadd.f32 %v373, %v462
      %v495 = vadd.f32 %v374, %v463
      %v496 = vadd.f32 %v375, %v464
      %v497 = vadd.f32 %v376, %v465
      %v498 = vadd.f32 %v377, %v466
      %v499 = vadd.f32 %v378, %v467
      %v500 = vadd.f32 %v379, %v468
      %v501 = vadd.f32 %v380, %v469
      %v502 = vadd.f32 %v381, %v470
      %v503 = vadd.f32 %v382, %v471
      %v504 = vadd.f32 %v383, %v472
      %v505 = vadd.f32 %v384, %v473
      %v506 = vadd.f32 %v385, %v474
      %v507 = vadd.f32 %v386, %v475
      %v508 = vadd.f32 %v387, %v476
      %v509 = vadd.f32 %v388, %v477
      %v510 = vadd.f32 %v389, %v478
      %v511 = vadd.f32 %v390, %v479
      %v512 = vadd.f32 %v391, %v480
      %v513 = vadd.f32 %v392, %v481
      %v514 = vadd.f32 %v393, %v482
      %v515 = vadd.f32 %v394, %v483
      %v516 = vadd.f32 %v395, %v484
      %v517 = vadd.f32 %v396, %v485
      %v518 = vadd.f32 %v397, %v486
      %v519 = vlaneseq
      %v520 = vshrl.u32 %v519, 7
      %v521 = vsub.s32 0, %v520
      %v522 = vrot.slane %v418, %v521
      %v523 = vadd.f32 %v487, %v522
      %v524 = vadd.f32 %v488, %v522
      %v525 = vadd.f32 %v489, %v522
      %v526 = vadd.f32 %v490, %v522
      %v527 = vadd.f32 %v491, %v522
      %v528 = vadd.f32 %v492, %v522
      %v529 = vadd.f32 %v493, %v522
      %v530 = vadd.f32 %v494, %v522
      %v531 = vadd.f32 %v495, %v522
      %v532 = vadd.f32 %v496, %v522
      %v533 = vadd.f32 %v497, %v522
      %v534 = vadd.f32 %v498, %v522
      %v535 = vadd.f32 %v499, %v522
      %v536 = vadd.f32 %v500, %v522
      %v537 = vadd.f32 %v501, %v522
      %v538 = vadd.f32 %v502, %v522
      %v539 = vadd.f32 %v503, %v522
      %v540 = vadd.f32 %v504, %v522
      %v541 = vadd.f32 %v505, %v522
      %v542 = vadd.f32 %v506, %v522
      %v543 = vadd.f32 %v507, %v522
      %v544 = vadd.f32 %v508, %v522
      %v545 = vadd.f32 %v509, %v522
      %v546 = vadd.f32 %v510, %v522
      %v547 = vadd.f32 %v511, %v522
      %v548 = vadd.f32 %v512, %v522
      %v549 = vadd.f32 %v513, %v522
      %v550 = vadd.f32 %v514, %v522
      %v551 = vadd.f32 %v515, %v522
      %v552 = vadd.f32 %v516, %v522
      %v553 = vadd.f32 %v517, %v522
      %v554 = vadd.f32 %v518, %v522
      %v555 = vmax.f32 %v523, 0.0
      %v556 = vmax.f32 %v524, 0.0
      %v557 = vmax.f32 %v525, 0.0
      %v558 = vmax.f32 %v526, 0.0
      %v559 = vmax.f32 %v527, 0.0
      %v560 = vmax.f32 %v528, 0.0
      %v561 = vmax.f32 %v529, 0.0
      %v562 = vmax.f32 %v530, 0.0
      %v563 = vmax.f32 %v531, 0.0
      %v564 = vmax.f32 %v532, 0.0
      %v565 = vmax.f32 %v533, 0.0
      %v566 = vmax.f32 %v534, 0.0
      %v567 = vmax.f32 %v535, 0.0
      %v568 = vmax.f32 %v536, 0.0
      %v569 = vmax.f32 %v537, 0.0
      %v570 = vmax.f32 %v538, 0.0
      %v571 = vmax.f32 %v539, 0.0
      %v572 = vmax.f32 %v540, 0.0
      %v573 = vmax.f32 %v541, 0.0
      %v574 = vmax.f32 %v542, 0.0
      %v575 = vmax.f32 %v543, 0.0
      %v576 = vmax.f32 %v544, 0.0
      %v577 = vmax.f32 %v545, 0.0
      %v578 = vmax.f32 %v546, 0.0
      %v579 = vmax.f32 %v547, 0.0
      %v580 = vmax.f32 %v548, 0.0
      %v581 = vmax.f32 %v549, 0.0
      %v582 = vmax.f32 %v550, 0.0
      %v583 = vmax.f32 %v551, 0.0
      %v584 = vmax.f32 %v552, 0.0
      %v585 = vmax.f32 %v553, 0.0
      %v586 = vmax.f32 %v554, 0.0
      %vm587 = vcmask 64512
      %588 = vst.msk [vmem:[%s271] sm:$0xff] %vm587, %v555
      %589 = vst.msk [vmem:[%s271 + $0x8] sm:$0xff] %vm587, %v556
      %590 = vst.msk [vmem:[%s271 + $0x10] sm:$0xff] %vm587, %v557
      %591 = vst.msk [vmem:[%s271 + $0x18] sm:$0xff] %vm587, %v558
      %592 = vst.msk [vmem:[%s271 + $0x20] sm:$0xff] %vm587, %v559
      %593 = vst.msk [vmem:[%s271 + $0x28] sm:$0xff] %vm587, %v560
      %594 = vst.msk [vmem:[%s271 + $0x30] sm:$0xff] %vm587, %v561
      %595 = vst.msk [vmem:[%s271 + $0x38] sm:$0xff] %vm587, %v562
      %596 = vst.msk [vmem:[%s271 + $0x40] sm:$0xff] %vm587, %v563
      %597 = vst.msk [vmem:[%s271 + $0x48] sm:$0xff] %vm587, %v564
      %598 = vst.msk [vmem:[%s271 + $0x50] sm:$0xff] %vm587, %v565
      %599 = vst.msk [vmem:[%s271 + $0x58] sm:$0xff] %vm587, %v566
      %600 = vst.msk [vmem:[%s271 + $0x60] sm:$0xff] %vm587, %v567
      %601 = vst.msk [vmem:[%s271 + $0x68] sm:$0xff] %vm587, %v568
      %602 = vst.msk [vmem:[%s271 + $0x70] sm:$0xff] %vm587, %v569
      %603 = vst.msk [vmem:[%s271 + $0x78] sm:$0xff] %vm587, %v570
      %604 = vst.msk [vmem:[%s271 + $0x80] sm:$0xff] %vm587, %v571
      %605 = vst.msk [vmem:[%s271 + $0x88] sm:$0xff] %vm587, %v572
      %606 = vst.msk [vmem:[%s271 + $0x90] sm:$0xff] %vm587, %v573
      %607 = vst.msk [vmem:[%s271 + $0x98] sm:$0xff] %vm587, %v574
      %608 = vst.msk [vmem:[%s271 + $0xa0] sm:$0xff] %vm587, %v575
      %609 = vst.msk [vmem:[%s271 + $0xa8] sm:$0xff] %vm587, %v576
      %610 = vst.msk [vmem:[%s271 + $0xb0] sm:$0xff] %vm587, %v577
      %611 = vst.msk [vmem:[%s271 + $0xb8] sm:$0xff] %vm587, %v578
      %612 = vst.msk [vmem:[%s271 + $0xc0] sm:$0xff] %vm587, %v579
      %613 = vst.msk [vmem:[%s271 + $0xc8] sm:$0xff] %vm587, %v580
      %614 = vst.msk [vmem:[%s271 + $0xd0] sm:$0xff] %vm587, %v581
      %615 = vst.msk [vmem:[%s271 + $0xd8] sm:$0xff] %vm587, %v582
      %616 = vst.msk [vmem:[%s271 + $0xe0] sm:$0xff] %vm587, %v583
      %617 = vst.msk [vmem:[%s271 + $0xe8] sm:$0xff] %vm587, %v584
      %618 = vst.msk [vmem:[%s271 + $0xf0] sm:$0xff] %vm587, %v585
      %619 = vst.msk [vmem:[%s271 + $0xf8] sm:$0xff] %vm587, %v586
      %p620 = scmp.lt.s32.totalorder %s17, 1
      %s621 = scalar_select %p620, %s17, 1
      %s622 = smul.addr %s621, 32
      %s623 = smul.addr %s622, 8
      %s624 = scalar_lea.vmem %s6, %s623
      // Predicated region
      $region45: #{basic_block.5} parent=43 // pred_check
        %p625 = pneg %p171
      $region46: #{basic_block.5} parent=43 // pred_check_branch
        %627 = sbr.rel (%p625) target = $region48
      $region47: #{basic_block.5} parent=43 // pred_region
        _
      $region48: #{basic_block.5} parent=43 // pred_fallthru
        _
    $region44: #{basic_block.5} parent=5 // pred_fallthru
      _
    %p628 = scmp.le.s32.totalorder 2, %s12
    // Predicated region
    $region49: #{basic_block.5} parent=5 // pred_check
      %p629 = pneg %p628
    $region50: #{basic_block.5} parent=5 // pred_check_branch
      %631 = sbr.rel (%p629) target = $region52
    $region51: #{basic_block.5} parent=5 // pred_region
      %s632 = ssub.s32 %s12, 2
      // Predicated region
      $region53: #{basic_block.5} parent=51 // pred_check
        %p633 = pneg %p177
      $region54: #{basic_block.5} parent=51 // pred_check_branch
        %635 = sbr.rel (%p633) target = $region56
      $region55: #{basic_block.5} parent=51 // pred_region
        %p636 = scmp.lt.s32.totalorder %s18, 1
        %s637 = scalar_select %p636, %s18, 1
        %s638 = smul.addr %s637, 32
        %s639 = smul.addr %s638, 8
        %s640 = scalar_lea.vmem %s6, %s639
      $region56: #{basic_block.5} parent=51 // pred_fallthru
        _
    $region52: #{basic_block.5} parent=5 // pred_fallthru
      _
  $region6: #{basic_block.5} parent=0 // loop_footer
    %s16 = sadd.s32 1, %s12
  $region7: #{basic_block.5} parent=0 // loop_footer_branch
    %11 = sbr.rel target = $region3
  $region8: #{basic_block.5} parent=0 // loop_exit
    _

// kernel: basic_block.4
$region0: #{basic_block.4}
  #allocation0 [shape = 'u32[]', space=smem, size = 0x4, offset = 0x4, fixed_abs, tag = 'smem constant byte address 0x4 - core index']
  #allocation1 [shape = 'u32[144,128]{1,0:T(1,128)}', space=vmem, size = 0x12000, scoped, tag = 'internal scratch']
  #allocation2 [shape = 'f32[1,18,18,8]{3,2,1,0:T(8,128)}', space=vmem, size = 0x36000, scoped, tag = 'scratch operand']
  %s0 = inlined_call_operand.vmem [shape: f32[2,16,16,8], index: 0, kind: input, shape index: {}]
  %s1 = inlined_call_operand.vmem [shape: f32[2,2,8], index: 1, kind: input, shape index: {}]
  %s2 = inlined_call_operand.vmem [shape: f32[2,8], index: 2, kind: input, shape index: {}]
  %s3 = inlined_call_operand.vmem [shape: bf16[72,8], index: 3, kind: input, shape index: {}]
  %s4 = inlined_call_operand.vmem [shape: f32[2,16,16,8], index: 4, kind: output, shape index: {0}]
  %s5 = inlined_call_operand.vmem [shape: f32[2,2,8], index: 5, kind: output, shape index: {1}]
  %6 = xla_tuple %s4, %s5
  %s7 = sld [smem:[#allocation0]]
  $region57: #{basic_block.4} parent=0
    _
  %s9 = ssub.s32 1, %s7
  %s10 = scalar_select 0, %s9, %s7
  loop: start=0, step=1, limit=4
  $region2: #{basic_block.4} parent=0 // loop_pre_header
    _
  $region3: #{basic_block.4} parent=0 // loop_header
    %s12 = sphi 0, %s16
    %p13 = scmp.ge.s32.totalorder %s12, 4
    %s22 = sphi 0, %s24
    %s25 = sphi 0, %s22
    %s26 = sphi 0, %s25
    %s42 = sphi 0, %s26
    %s46 = sphi 0, %s46
    %s48 = sphi 0, %s46
    %s49 = sphi 0, %s48
    %s63 = sphi 0, %s49
    %s67 = sphi 0, %s67
    %s69 = sphi 0, %s67
    %s70 = sphi 0, %s69
    %s84 = sphi 0, %s70
    %s88 = sphi 0, %s88
    %s90 = sphi 0, %s88
    %s91 = sphi 0, %s90
    %s105 = sphi 0, %s91
    %s111 = sphi 0, %s113
    %s114 = sphi 0, %s111
    %s115 = sphi 0, %s114
    %s131 = sphi 0, %s115
    %s137 = sphi 0, %s139
    %s140 = sphi 0, %s137
    %s141 = sphi 0, %s140
    %s157 = sphi 0, %s141
  $region4: #{basic_block.4} parent=0 // loop_header_branch
    %15 = sbr.rel (%p13) target = $region8
  $region5: #{basic_block.4} parent=0 // loop_body
    %s17 = ssub.s32 %s12, 1
    %s18 = ssub.s32 %s12, 2
    %s19 = sadd.s32 %s12, 1
    %s20 = ssub.s32 %s12, %s19
    %p21 = scmp.eq.s32.totalorder %s20, 0
    %s23 = sadd.s32 %s22, 1
    %s24 = scalar_select %p21, %s22, %s23
    %p27 = pneg %p21
    %p28 = scmp.eq.s32.totalorder %s12, 1
    %p29 = por %p27, %p28
    %p30 = scmp.ne.s32.totalorder %s22, %s25
    %p31 = scmp.eq.s32.totalorder %s12, 0
    %p32 = por %p30, %p31
    %p33 = scmp.ne.s32.totalorder %s22, %s25
    %p34 = scmp.eq.s32.totalorder %s17, 1
    %p35 = por %p33, %p34
    %p36 = scmp.ne.s32.totalorder %s25, %s26
    %p37 = scmp.eq.s32.totalorder %s17, 0
    %p38 = por %p36, %p37
    %p39 = scmp.ne.s32.totalorder %s25, %s26
    %p40 = scmp.eq.s32.totalorder %s18, 1
    %p41 = por %p39, %p40
    %p43 = scmp.ne.s32.totalorder %s26, %s42
    %p44 = scmp.eq.s32.totalorder %s18, 0
    %p45 = por %p43, %p44
    %s47 = sadd.s32 %s46, 1
    %p50 = scmp.eq.s32.totalorder %s12, 1
    %p51 = scmp.ne.s32.totalorder %s46, %s48
    %p52 = scmp.eq.s32.totalorder %s12, 0
    %p53 = por %p51, %p52
    %p54 = scmp.ne.s32.totalorder %s46, %s48
    %p55 = scmp.eq.s32.totalorder %s17, 1
    %p56 = por %p54, %p55
    %p57 = scmp.ne.s32.totalorder %s48, %s49
    %p58 = scmp.eq.s32.totalorder %s17, 0
    %p59 = por %p57, %p58
    %p60 = scmp.ne.s32.totalorder %s48, %s49
    %p61 = scmp.eq.s32.totalorder %s18, 1
    %p62 = por %p60, %p61
    %p64 = scmp.ne.s32.totalorder %s49, %s63
    %p65 = scmp.eq.s32.totalorder %s18, 0
    %p66 = por %p64, %p65
    %s68 = sadd.s32 %s67, 1
    %p71 = scmp.eq.s32.totalorder %s12, 1
    %p72 = scmp.ne.s32.totalorder %s67, %s69
    %p73 = scmp.eq.s32.totalorder %s12, 0
    %p74 = por %p72, %p73
    %p75 = scmp.ne.s32.totalorder %s67, %s69
    %p76 = scmp.eq.s32.totalorder %s17, 1
    %p77 = por %p75, %p76
    %p78 = scmp.ne.s32.totalorder %s69, %s70
    %p79 = scmp.eq.s32.totalorder %s17, 0
    %p80 = por %p78, %p79
    %p81 = scmp.ne.s32.totalorder %s69, %s70
    %p82 = scmp.eq.s32.totalorder %s18, 1
    %p83 = por %p81, %p82
    %p85 = scmp.ne.s32.totalorder %s70, %s84
    %p86 = scmp.eq.s32.totalorder %s18, 0
    %p87 = por %p85, %p86
    %s89 = sadd.s32 %s88, 1
    %p92 = scmp.eq.s32.totalorder %s12, 1
    %p93 = scmp.ne.s32.totalorder %s88, %s90
    %p94 = scmp.eq.s32.totalorder %s12, 0
    %p95 = por %p93, %p94
    %p96 = scmp.ne.s32.totalorder %s88, %s90
    %p97 = scmp.eq.s32.totalorder %s17, 1
    %p98 = por %p96, %p97
    %p99 = scmp.ne.s32.totalorder %s90, %s91
    %p100 = scmp.eq.s32.totalorder %s17, 0
    %p101 = por %p99, %p100
    %p102 = scmp.ne.s32.totalorder %s90, %s91
    %p103 = scmp.eq.s32.totalorder %s18, 1
    %p104 = por %p102, %p103
    %p106 = scmp.ne.s32.totalorder %s91, %s105
    %p107 = scmp.eq.s32.totalorder %s18, 0
    %p108 = por %p106, %p107
    %s109 = ssub.s32 %s12, %s19
    %p110 = scmp.eq.s32.totalorder %s109, 0
    %s112 = sadd.s32 %s111, 1
    %s113 = scalar_select %p110, %s111, %s112
    %p116 = pneg %p110
    %p117 = scmp.eq.s32.totalorder %s12, 1
    %p118 = por %p116, %p117
    %p119 = scmp.ne.s32.totalorder %s111, %s114
    %p120 = scmp.eq.s32.totalorder %s12, 0
    %p121 = por %p119, %p120
    %p122 = scmp.ne.s32.totalorder %s111, %s114
    %p123 = scmp.eq.s32.totalorder %s17, 1
    %p124 = por %p122, %p123
    %p125 = scmp.ne.s32.totalorder %s114, %s115
    %p126 = scmp.eq.s32.totalorder %s17, 0
    %p127 = por %p125, %p126
    %p128 = scmp.ne.s32.totalorder %s114, %s115
    %p129 = scmp.eq.s32.totalorder %s18, 1
    %p130 = por %p128, %p129
    %p132 = scmp.ne.s32.totalorder %s115, %s131
    %p133 = scmp.eq.s32.totalorder %s18, 0
    %p134 = por %p132, %p133
    %s135 = ssub.s32 %s12, %s19
    %p136 = scmp.eq.s32.totalorder %s135, 0
    %s138 = sadd.s32 %s137, 1
    %s139 = scalar_select %p136, %s137, %s138
    %p142 = pneg %p136
    %p143 = scmp.eq.s32.totalorder %s12, 1
    %p144 = por %p142, %p143
    %p145 = scmp.ne.s32.totalorder %s137, %s140
    %p146 = scmp.eq.s32.totalorder %s12, 0
    %p147 = por %p145, %p146
    %p148 = scmp.ne.s32.totalorder %s137, %s140
    %p149 = scmp.eq.s32.totalorder %s17, 1
    %p150 = por %p148, %p149
    %p151 = scmp.ne.s32.totalorder %s140, %s141
    %p152 = scmp.eq.s32.totalorder %s17, 0
    %p153 = por %p151, %p152
    %p154 = scmp.ne.s32.totalorder %s140, %s141
    %p155 = scmp.eq.s32.totalorder %s18, 1
    %p156 = por %p154, %p155
    %p158 = scmp.ne.s32.totalorder %s141, %s157
    %p159 = scmp.eq.s32.totalorder %s18, 0
    %p160 = por %p158, %p159
    %p161 = scmp.le.s32.totalorder 1, %s12
    %p162 = scmp.lt.s32.totalorder %s12, 3
    %p163 = pnand %p161, %p162
    %p164 = pneg %p163
    // Predicated region
    $region9: #{basic_block.4} parent=5 // pred_check
      _
    $region10: #{basic_block.4} parent=5 // pred_check_branch
      %166 = sbr.rel (%p163) target = $region12
    $region11: #{basic_block.4} parent=5 // pred_region
      %s167 = ssub.s32 %s12, 1
      // Predicated region
      $region13: #{basic_block.4} parent=11 // pred_check
        %p168 = pneg %p59
      $region14: #{basic_block.4} parent=11 // pred_check_branch
        %170 = sbr.rel (%p168) target = $region16
      $region15: #{basic_block.4} parent=11 // pred_region
        _
      $region16: #{basic_block.4} parent=11 // pred_fallthru
        _
      // Predicated region
      $region17: #{basic_block.4} parent=11 // pred_check
        %p171 = pneg %p80
      $region18: #{basic_block.4} parent=11 // pred_check_branch
        %173 = sbr.rel (%p171) target = $region20
      $region19: #{basic_block.4} parent=11 // pred_region
        _
      $region20: #{basic_block.4} parent=11 // pred_fallthru
        _
      // Predicated region
      $region21: #{basic_block.4} parent=11 // pred_check
        %p174 = pneg %p101
      $region22: #{basic_block.4} parent=11 // pred_check_branch
        %176 = sbr.rel (%p174) target = $region24
      $region23: #{basic_block.4} parent=11 // pred_region
        _
      $region24: #{basic_block.4} parent=11 // pred_fallthru
        _
    $region12: #{basic_block.4} parent=5 // pred_fallthru
      _
    %p177 = scmp.lt.s32.totalorder %s12, 2
    // Predicated region
    $region25: #{basic_block.4} parent=5 // pred_check
      %p178 = pneg %p177
    $region26: #{basic_block.4} parent=5 // pred_check_branch
      %180 = sbr.rel (%p178) target = $region28
    $region27: #{basic_block.4} parent=5 // pred_region
      // Predicated region
      $region29: #{basic_block.4} parent=27 // pred_check
        %p181 = pneg %p32
      $region30: #{basic_block.4} parent=27 // pred_check_branch
        %183 = sbr.rel (%p181) target = $region32
      $region31: #{basic_block.4} parent=27 // pred_region
        %p184 = scmp.lt.s32.totalorder %s12, 1
        %s185 = scalar_select %p184, %s12, 1
        %s186 = smul.addr %s185, 32
        %s187 = smul.addr %s186, 8
        %s188 = scalar_lea.vmem %s0, %s187
      $region32: #{basic_block.4} parent=27 // pred_fallthru
        _
    $region28: #{basic_block.4} parent=5 // pred_fallthru
      _
    %p189 = scmp.le.s32.totalorder 1, %s12
    %p190 = scmp.lt.s32.totalorder %s12, 3
    %p191 = pnand %p189, %p190
    %p192 = pneg %p191
    // Predicated region
    $region33: #{basic_block.4} parent=5 // pred_check
      _
    $region34: #{basic_block.4} parent=5 // pred_check_branch
      %194 = sbr.rel (%p191) target = $region36
    $region35: #{basic_block.4} parent=5 // pred_region
      %s195 = ssub.s32 %s12, 1
      %p196 = scmp.lt.s32.totalorder %s17, 1
      %s197 = scalar_select %p196, %s17, 1
      %s198 = smul.addr %s197, 32
      %s199 = smul.addr %s198, 8
      %s200 = scalar_lea.vmem %s0, %s199
      %p201 = pneg %p38
      %p202 = pneg %p35
      %p203 = pneg %p59
      %p204 = pneg %p56
      %p205 = pneg %p80
      %p206 = pneg %p77
      %p207 = pneg %p101
      %p208 = pneg %p98
      %p209 = pneg %p127
      %p210 = pneg %p124
      %p211 = scmp.lt.s32.totalorder %s17, 1
      %s212 = scalar_select %p211, %s17, 1
      %s213 = smul.addr %s212, 32
      %s214 = smul.addr %s213, 8
      %s215 = scalar_lea.vmem %s4, %s214
      %p216 = pneg %p153
      %p217 = pneg %p150
      %p218 = scmp.lt.s32.totalorder %s17, 1
      %s219 = scalar_select %p218, %s17, 1
      %s220 = smul.addr %s219, 2
      %s221 = scalar_lea.vmem %s5, %s220
      %p222 = scmp.lt.s32.totalorder %s17, 1
      %s223 = scalar_select %p222, %s17, 1
      %s224 = smul.addr %s223, 32
      %s225 = smul.addr %s224, 8
      %s226 = scalar_lea.vmem %s0, %s225
      %p227 = scmp.lt.s32.totalorder %s17, 1
      %s228 = scalar_select %p227, %s17, 1
      %s229 = smul.addr %s228, 32
      %s230 = smul.addr %s229, 8
      %s231 = scalar_lea.vmem %s4, %s230
      %p232 = scmp.lt.s32.totalorder %s17, 1
      %s233 = scalar_select %p232, %s17, 1
      %s234 = smul.addr %s233, 2
      %s235 = scalar_lea.vmem %s5, %s234
      %v237 = vld [vmem:[%s1] sm:$0x3]
      %v238 = vld [vmem:[%s1 + $0x2] sm:$0x3]
      %vm239 = vcmask 58368
      %v240 = vsel %vm239, %v237, 0.0
      %v241 = vsel %vm239, %v238, 0.0
      %v242 = vadd.f32 %v240, %v241
      %v243 = vmul.f32 %v242, 0.001953125
      %v244 = vmul.f32 %v243, %v243
      %v246 = vrot.slane %v244, 7
      %v248 = vsub.f32 %v243, %v246
      %v249 = vld [vmem:[%s2] sm:$0x1]
      %v250 = vadd.f32 %v248, 1e-05
      %v251 = vrsqrt.pop %v250
      %v253 = vrot.slane %v251, 1
      %v255 = vmul.f32 %v249, %v253
      %v256 = vld [vmem:[%s2 + $0x1] sm:$0x1]
      %v257 = vmul.f32 %v243, %v255
      %v258 = vsub.f32 %v256, %v257
      %v259 = vld [vmem:[%s226] sm:$0xff]
      %v260 = vld [vmem:[%s226 + $0x8] sm:$0xff]
      %v261 = vld [vmem:[%s226 + $0x10] sm:$0xff]
      %v262 = vld [vmem:[%s226 + $0x18] sm:$0xff]
      %v263 = vld [vmem:[%s226 + $0x20] sm:$0xff]
      %v264 = vld [vmem:[%s226 + $0x28] sm:$0xff]
      %v265 = vld [vmem:[%s226 + $0x30] sm:$0xff]
      %v266 = vld [vmem:[%s226 + $0x38] sm:$0xff]
      %v267 = vld [vmem:[%s226 + $0x40] sm:$0xff]
      %v268 = vld [vmem:[%s226 + $0x48] sm:$0xff]
      %v269 = vld [vmem:[%s226 + $0x50] sm:$0xff]
      %v270 = vld [vmem:[%s226 + $0x58] sm:$0xff]
      %v271 = vld [vmem:[%s226 + $0x60] sm:$0xff]
      %v272 = vld [vmem:[%s226 + $0x68] sm:$0xff]
      %v273 = vld [vmem:[%s226 + $0x70] sm:$0xff]
      %v274 = vld [vmem:[%s226 + $0x78] sm:$0xff]
      %v275 = vld [vmem:[%s226 + $0x80] sm:$0xff]
      %v276 = vld [vmem:[%s226 + $0x88] sm:$0xff]
      %v277 = vld [vmem:[%s226 + $0x90] sm:$0xff]
      %v278 = vld [vmem:[%s226 + $0x98] sm:$0xff]
      %v279 = vld [vmem:[%s226 + $0xa0] sm:$0xff]
      %v280 = vld [vmem:[%s226 + $0xa8] sm:$0xff]
      %v281 = vld [vmem:[%s226 + $0xb0] sm:$0xff]
      %v282 = vld [vmem:[%s226 + $0xb8] sm:$0xff]
      %v283 = vld [vmem:[%s226 + $0xc0] sm:$0xff]
      %v284 = vld [vmem:[%s226 + $0xc8] sm:$0xff]
      %v285 = vld [vmem:[%s226 + $0xd0] sm:$0xff]
      %v286 = vld [vmem:[%s226 + $0xd8] sm:$0xff]
      %v287 = vld [vmem:[%s226 + $0xe0] sm:$0xff]
      %v288 = vld [vmem:[%s226 + $0xe8] sm:$0xff]
      %v289 = vld [vmem:[%s226 + $0xf0] sm:$0xff]
      %v290 = vld [vmem:[%s226 + $0xf8] sm:$0xff]
      %v291 = vlaneseq
      %v292 = vshrl.u32 %v291, 7
      %v293 = vsub.s32 0, %v292
      %v294 = vrot.slane %v255, %v293
      %v295 = vmul.f32 %v259, %v294
      %v296 = vmul.f32 %v260, %v294
      %v297 = vmul.f32 %v261, %v294
      %v298 = vmul.f32 %v262, %v294
      %v299 = vmul.f32 %v263, %v294
      %v300 = vmul.f32 %v264, %v294
      %v301 = vmul.f32 %v265, %v294
      %v302 = vmul.f32 %v266, %v294
      %v303 = vmul.f32 %v267, %v294
      %v304 = vmul.f32 %v268, %v294
      %v305 = vmul.f32 %v269, %v294
      %v306 = vmul.f32 %v270, %v294
      %v307 = vmul.f32 %v271, %v294
      %v308 = vmul.f32 %v272, %v294
      %v309 = vmul.f32 %v273, %v294
      %v310 = vmul.f32 %v274, %v294
      %v311 = vmul.f32 %v275, %v294
      %v312 = vmul.f32 %v276, %v294
      %v313 = vmul.f32 %v277, %v294
      %v314 = vmul.f32 %v278, %v294
      %v315 = vmul.f32 %v279, %v294
      %v316 = vmul.f32 %v280, %v294
      %v317 = vmul.f32 %v281, %v294
      %v318 = vmul.f32 %v282, %v294
      %v319 = vmul.f32 %v283, %v294
      %v320 = vmul.f32 %v284, %v294
      %v321 = vmul.f32 %v285, %v294
      %v322 = vmul.f32 %v286, %v294
      %v323 = vmul.f32 %v287, %v294
      %v324 = vmul.f32 %v288, %v294
      %v325 = vmul.f32 %v289, %v294
      %v326 = vmul.f32 %v290, %v294
      %v327 = vlaneseq
      %v328 = vshrl.u32 %v327, 7
      %v329 = vsub.s32 0, %v328
      %v330 = vrot.slane %v258, %v329
      %v331 = vadd.f32 %v295, %v330
      %v332 = vadd.f32 %v296, %v330
      %v333 = vadd.f32 %v297, %v330
      %v334 = vadd.f32 %v298, %v330
      %v335 = vadd.f32 %v299, %v330
      %v336 = vadd.f32 %v300, %v330
      %v337 = vadd.f32 %v301, %v330
      %v338 = vadd.f32 %v302, %v330
      %v339 = vadd.f32 %v303, %v330
      %v340 = vadd.f32 %v304, %v330
      %v341 = vadd.f32 %v305, %v330
      %v342 = vadd.f32 %v306, %v330
      %v343 = vadd.f32 %v307, %v330
      %v344 = vadd.f32 %v308, %v330
      %v345 = vadd.f32 %v309, %v330
      %v346 = vadd.f32 %v310, %v330
      %v347 = vadd.f32 %v311, %v330
      %v348 = vadd.f32 %v312, %v330
      %v349 = vadd.f32 %v313, %v330
      %v350 = vadd.f32 %v314, %v330
      %v351 = vadd.f32 %v315, %v330
      %v352 = vadd.f32 %v316, %v330
      %v353 = vadd.f32 %v317, %v330
      %v354 = vadd.f32 %v318, %v330
      %v355 = vadd.f32 %v319, %v330
      %v356 = vadd.f32 %v320, %v330
      %v357 = vadd.f32 %v321, %v330
      %v358 = vadd.f32 %v322, %v330
      %v359 = vadd.f32 %v323, %v330
      %v360 = vadd.f32 %v324, %v330
      %v361 = vadd.f32 %v325, %v330
      %v362 = vadd.f32 %v326, %v330
      %v363 = vmax.f32 %v331, 0.0
      %v364 = vmax.f32 %v332, 0.0
      %v365 = vmax.f32 %v333, 0.0
      %v366 = vmax.f32 %v334, 0.0
      %v367 = vmax.f32 %v335, 0.0
      %v368 = vmax.f32 %v336, 0.0
      %v369 = vmax.f32 %v337, 0.0
      %v370 = vmax.f32 %v338, 0.0
      %v371 = vmax.f32 %v339, 0.0
      %v372 = vmax.f32 %v340, 0.0
      %v373 = vmax.f32 %v341, 0.0
      %v374 = vmax.f32 %v342, 0.0
      %v375 = vmax.f32 %v343, 0.0
      %v376 = vmax.f32 %v344, 0.0
      %v377 = vmax.f32 %v345, 0.0
      %v378 = vmax.f32 %v346, 0.0
      %v379 = vmax.f32 %v347, 0.0
      %v380 = vmax.f32 %v348, 0.0
      %v381 = vmax.f32 %v349, 0.0
      %v382 = vmax.f32 %v350, 0.0
      %v383 = vmax.f32 %v351, 0.0
      %v384 = vmax.f32 %v352, 0.0
      %v385 = vmax.f32 %v353, 0.0
      %v386 = vmax.f32 %v354, 0.0
      %v387 = vmax.f32 %v355, 0.0
      %v388 = vmax.f32 %v356, 0.0
      %v389 = vmax.f32 %v357, 0.0
      %v390 = vmax.f32 %v358, 0.0
      %v391 = vmax.f32 %v359, 0.0
      %v392 = vmax.f32 %v360, 0.0
      %v393 = vmax.f32 %v361, 0.0
      %v394 = vmax.f32 %v362, 0.0
      %vm395 = vcmask 64512
      %396 = vst.msk [vmem:[#allocation2] sm:$0xff] %vm395, 0.0
      %397 = vst.msk [vmem:[#allocation2 + $0x8] sm:$0xff] %vm395, 0.0
      %398 = vst.msk [vmem:[#allocation2 + $0x10] sm:$0x3] %vm239, 0.0
      %s399 = scalar_lea.vmem [#allocation2], 408
      %400 = vst.msk [vmem:[%s399] sm:$0xff] %vm395, 0.0
      %401 = vst.msk [vmem:[%s399 + $0x8] sm:$0xff] %vm395, 0.0
      %402 = vst.msk [vmem:[%s399 + $0x10] sm:$0x3] %vm239, 0.0
      %vm403 = vcmask 57344
      %404 = vst.msk [vmem:[#allocation2] sm:$0x1] %vm403, 0.0
      %405 = vst.msk [vmem:[#allocation2 + $0x18] sm:$0x1] %vm403, 0.0
      %406 = vst.msk [vmem:[#allocation2 + $0x30] sm:$0x1] %vm403, 0.0
      %407 = vst.msk [vmem:[#allocation2 + $0x48] sm:$0x1] %vm403, 0.0
      %408 = vst.msk [vmem:[#allocation2 + $0x60] sm:$0x1] %vm403, 0.0
      %409 = vst.msk [vmem:[#allocation2 + $0x78] sm:$0x1] %vm403, 0.0
      %410 = vst.msk [vmem:[#allocation2 + $0x90] sm:$0x1] %vm403, 0.0
      %411 = vst.msk [vmem:[#allocation2 + $0xa8] sm:$0x1] %vm403, 0.0
      %412 = vst.msk [vmem:[#allocation2 + $0xc0] sm:$0x1] %vm403, 0.0
      %413 = vst.msk [vmem:[#allocation2 + $0xd8] sm:$0x1] %vm403, 0.0
      %414 = vst.msk [vmem:[#allocation2 + $0xf0] sm:$0x1] %vm403, 0.0
      %415 = vst.msk [vmem:[#allocation2 + $0x108] sm:$0x1] %vm403, 0.0
      %416 = vst.msk [vmem:[#allocation2 + $0x120] sm:$0x1] %vm403, 0.0
      %417 = vst.msk [vmem:[#allocation2 + $0x138] sm:$0x1] %vm403, 0.0
      %418 = vst.msk [vmem:[#allocation2 + $0x150] sm:$0x1] %vm403, 0.0
      %419 = vst.msk [vmem:[#allocation2 + $0x168] sm:$0x1] %vm403, 0.0
      %420 = vst.msk [vmem:[#allocation2 + $0x180] sm:$0x1] %vm403, 0.0
      %421 = vst.msk [vmem:[#allocation2 + $0x198] sm:$0x1] %vm403, 0.0
      %422 = vst.msk [vmem:[#allocation2 + $0x11] sm:$0x1] %vm403, 0.0
      %423 = vst.msk [vmem:[#allocation2 + $0x29] sm:$0x1] %vm403, 0.0
      %424 = vst.msk [vmem:[#allocation2 + $0x41] sm:$0x1] %vm403, 0.0
      %425 = vst.msk [vmem:[#allocation2 + $0x59] sm:$0x1] %vm403, 0.0
      %426 = vst.msk [vmem:[#allocation2 + $0x71] sm:$0x1] %vm403, 0.0
      %427 = vst.msk [vmem:[#allocation2 + $0x89] sm:$0x1] %vm403, 0.0
      %428 = vst.msk [vmem:[#allocation2 + $0xa1] sm:$0x1] %vm403, 0.0
      %429 = vst.msk [vmem:[#allocation2 + $0xb9] sm:$0x1] %vm403, 0.0
      %430 = vst.msk [vmem:[#allocation2 + $0xd1] sm:$0x1] %vm403, 0.0
      %431 = vst.msk [vmem:[#allocation2 + $0xe9] sm:$0x1] %vm403, 0.0
      %432 = vst.msk [vmem:[#allocation2 + $0x101] sm:$0x1] %vm403, 0.0
      %433 = vst.msk [vmem:[#allocation2 + $0x119] sm:$0x1] %vm403, 0.0
      %434 = vst.msk [vmem:[#allocation2 + $0x131] sm:$0x1] %vm403, 0.0
      %435 = vst.msk [vmem:[#allocation2 + $0x149] sm:$0x1] %vm403, 0.0
      %436 = vst.msk [vmem:[#allocation2 + $0x161] sm:$0x1] %vm403, 0.0
      %437 = vst.msk [vmem:[#allocation2 + $0x179] sm:$0x1] %vm403, 0.0
      %438 = vst.msk [vmem:[#allocation2 + $0x191] sm:$0x1] %vm403, 0.0
      %439 = vst.msk [vmem:[#allocation2 + $0x1a9] sm:$0x1] %vm403, 0.0
      %s440 = scalar_lea.vmem [#allocation2], 24
      %441 = vst.msk [vmem:[%s440 + $0x1] sm:$0xff] %vm395, %v363
      %442 = vst.msk [vmem:[%s440 + $0x9] sm:$0xff] %vm395, %v364
      %443 = vst.msk [vmem:[%s440 + $0x19] sm:$0xff] %vm395, %v365
      %444 = vst.msk [vmem:[%s440 + $0x21] sm:$0xff] %vm395, %v366
      %445 = vst.msk [vmem:[%s440 + $0x31] sm:$0xff] %vm395, %v367
      %446 = vst.msk [vmem:[%s440 + $0x39] sm:$0xff] %vm395, %v368
      %447 = vst.msk [vmem:[%s440 + $0x49] sm:$0xff] %vm395, %v369
      %448 = vst.msk [vmem:[%s440 + $0x51] sm:$0xff] %vm395, %v370
      %449 = vst.msk [vmem:[%s440 + $0x61] sm:$0xff] %vm395, %v371
      %450 = vst.msk [vmem:[%s440 + $0x69] sm:$0xff] %vm395, %v372
      %451 = vst.msk [vmem:[%s440 + $0x79] sm:$0xff] %vm395, %v373
      %452 = vst.msk [vmem:[%s440 + $0x81] sm:$0xff] %vm395, %v374
      %453 = vst.msk [vmem:[%s440 + $0x91] sm:$0xff] %vm395, %v375
      %454 = vst.msk [vmem:[%s440 + $0x99] sm:$0xff] %vm395, %v376
      %455 = vst.msk [vmem:[%s440 + $0xa9] sm:$0xff] %vm395, %v377
      %456 = vst.msk [vmem:[%s440 + $0xb1] sm:$0xff] %vm395, %v378
      %457 = vst.msk [vmem:[%s440 + $0xc1] sm:$0xff] %vm395, %v379
      %458 = vst.msk [vmem:[%s440 + $0xc9] sm:$0xff] %vm395, %v380
      %459 = vst.msk [vmem:[%s440 + $0xd9] sm:$0xff] %vm395, %v381
      %460 = vst.msk [vmem:[%s440 + $0xe1] sm:$0xff] %vm395, %v382
      %461 = vst.msk [vmem:[%s440 + $0xf1] sm:$0xff] %vm395, %v383
      %462 = vst.msk [vmem:[%s440 + $0xf9] sm:$0xff] %vm395, %v384
      %463 = vst.msk [vmem:[%s440 + $0x109] sm:$0xff] %vm395, %v385
      %464 = vst.msk [vmem:[%s440 + $0x111] sm:$0xff] %vm395, %v386
      %465 = vst.msk [vmem:[%s440 + $0x121] sm:$0xff] %vm395, %v387
      %466 = vst.msk [vmem:[%s440 + $0x129] sm:$0xff] %vm395, %v388
      %467 = vst.msk [vmem:[%s440 + $0x139] sm:$0xff] %vm395, %v389
      %468 = vst.msk [vmem:[%s440 + $0x141] sm:$0xff] %vm395, %v390
      %469 = vst.msk [vmem:[%s440 + $0x151] sm:$0xff] %vm395, %v391
      %470 = vst.msk [vmem:[%s440 + $0x159] sm:$0xff] %vm395, %v392
      %471 = vst.msk [vmem:[%s440 + $0x169] sm:$0xff] %vm395, %v393
      %472 = vst.msk [vmem:[%s440 + $0x171] sm:$0xff] %vm395, %v394
      %v473 = vld [vmem:[#allocation2] sm:$0xff]
      %v474 = vld [vmem:[#allocation2 + $0x8] sm:$0xff]
      %v475 = vld [vmem:[#allocation2 + $0x18] sm:$0xff]
      %v476 = vld [vmem:[#allocation2 + $0x20] sm:$0xff]
      %v477 = vld [vmem:[#allocation2 + $0x30] sm:$0xff]
      %v478 = vld [vmem:[#allocation2 + $0x38] sm:$0xff]
      %v479 = vld [vmem:[#allocation2 + $0x48] sm:$0xff]
      %v480 = vld [vmem:[#allocation2 + $0x50] sm:$0xff]
      %v481 = vld [vmem:[#allocation2 + $0x60] sm:$0xff]
      %v482 = vld [vmem:[#allocation2 + $0x68] sm:$0xff]
      %v483 = vld [vmem:[#allocation2 + $0x78] sm:$0xff]
      %v484 = vld [vmem:[#allocation2 + $0x80] sm:$0xff]
      %v485 = vld [vmem:[#allocation2 + $0x90] sm:$0xff]
      %v486 = vld [vmem:[#allocation2 + $0x98] sm:$0xff]
      %v487 = vld [vmem:[#allocation2 + $0xa8] sm:$0xff]
      %v488 = vld [vmem:[#allocation2 + $0xb0] sm:$0xff]
      %v489 = vld [vmem:[#allocation2 + $0xc0] sm:$0xff]
      %v490 = vld [vmem:[#allocation2 + $0xc8] sm:$0xff]
      %v491 = vld [vmem:[#allocation2 + $0xd8] sm:$0xff]
      %v492 = vld [vmem:[#allocation2 + $0xe0] sm:$0xff]
      %v493 = vld [vmem:[#allocation2 + $0xf0] sm:$0xff]
      %v494 = vld [vmem:[#allocation2 + $0xf8] sm:$0xff]
      %v495 = vld [vmem:[#allocation2 + $0x108] sm:$0xff]
      %v496 = vld [vmem:[#allocation2 + $0x110] sm:$0xff]
      %v497 = vld [vmem:[#allocation2 + $0x120] sm:$0xff]
      %v498 = vld [vmem:[#allocation2 + $0x128] sm:$0xff]
      %v499 = vld [vmem:[#allocation2 + $0x138] sm:$0xff]
      %v500 = vld [vmem:[#allocation2 + $0x140] sm:$0xff]
      %v501 = vld [vmem:[#allocation2 + $0x150] sm:$0xff]
      %v502 = vld [vmem:[#allocation2 + $0x158] sm:$0xff]
      %v503 = vld [vmem:[#allocation2 + $0x168] sm:$0xff]
      %v504 = vld [vmem:[#allocation2 + $0x170] sm:$0xff]
      %v505 = vld [vmem:[#allocation2 + $0x1] sm:$0xff]
      %v506 = vld [vmem:[#allocation2 + $0x9] sm:$0xff]
      %v507 = vld [vmem:[#allocation2 + $0x19] sm:$0xff]
      %v508 = vld [vmem:[#allocation2 + $0x21] sm:$0xff]
      %v509 = vld [vmem:[#allocation2 + $0x31] sm:$0xff]
      %v510 = vld [vmem:[#allocation2 + $0x39] sm:$0xff]
      %v511 = vld [vmem:[#allocation2 + $0x49] sm:$0xff]
      %v512 = vld [vmem:[#allocation2 + $0x51] sm:$0xff]
      %v513 = vld [vmem:[#allocation2 + $0x61] sm:$0xff]
      %v514 = vld [vmem:[#allocation2 + $0x69] sm:$0xff]
      %v515 = vld [vmem:[#allocation2 + $0x79] sm:$0xff]
      %v516 = vld [vmem:[#allocation2 + $0x81] sm:$0xff]
      %v517 = vld [vmem:[#allocation2 + $0x91] sm:$0xff]
      %v518 = vld [vmem:[#allocation2 + $0x99] sm:$0xff]
      %v519 = vld [vmem:[#allocation2 + $0xa9] sm:$0xff]
      %v520 = vld [vmem:[#allocation2 + $0xb1] sm:$0xff]
      %v521 = vld [vmem:[#allocation2 + $0xc1] sm:$0xff]
      %v522 = vld [vmem:[#allocation2 + $0xc9] sm:$0xff]
      %v523 = vld [vmem:[#allocation2 + $0xd9] sm:$0xff]
      %v524 = vld [vmem:[#allocation2 + $0xe1] sm:$0xff]
      %v525 = vld [vmem:[#allocation2 + $0xf1] sm:$0xff]
      %v526 = vld [vmem:[#allocation2 + $0xf9] sm:$0xff]
      %v527 = vld [vmem:[#allocation2 + $0x109] sm:$0xff]
      %v528 = vld [vmem:[#allocation2 + $0x111] sm:$0xff]
      %v529 = vld [vmem:[#allocation2 + $0x121] sm:$0xff]
      %v530 = vld [vmem:[#allocation2 + $0x129] sm:$0xff]
      %v531 = vld [vmem:[#allocation2 + $0x139] sm:$0xff]
      %v532 = vld [vmem:[#allocation2 + $0x141] sm:$0xff]
      %v533 = vld [vmem:[#allocation2 + $0x151] sm:$0xff]
      %v534 = vld [vmem:[#allocation2 + $0x159] sm:$0xff]
      %v535 = vld [vmem:[#allocation2 + $0x169] sm:$0xff]
      %v536 = vld [vmem:[#allocation2 + $0x171] sm:$0xff]
      %v537 = vld [vmem:[#allocation2 + $0x2] sm:$0xff]
      %v538 = vld [vmem:[#allocation2 + $0xa] sm:$0xff]
      %v539 = vld [vmem:[#allocation2 + $0x1a] sm:$0xff]
      %v540 = vld [vmem:[#allocation2 + $0x22] sm:$0xff]
      %v541 = vld [vmem:[#allocation2 + $0x32] sm:$0xff]
      %v542 = vld [vmem:[#allocation2 + $0x3a] sm:$0xff]
      %v543 = vld [vmem:[#allocation2 + $0x4a] sm:$0xff]
      %v544 = vld [vmem:[#allocation2 + $0x52] sm:$0xff]
      %v545 = vld [vmem:[#allocation2 + $0x62] sm:$0xff]
      %v546 = vld [vmem:[#allocation2 + $0x6a] sm:$0xff]
      %v547 = vld [vmem:[#allocation2 + $0x7a] sm:$0xff]
      %v548 = vld [vmem:[#allocation2 + $0x82] sm:$0xff]
      %v549 = vld [vmem:[#allocation2 + $0x92] sm:$0xff]
      %v550 = vld [vmem:[#allocation2 + $0x9a] sm:$0xff]
      %v551 = vld [vmem:[#allocation2 + $0xaa] sm:$0xff]
      %v552 = vld [vmem:[#allocation2 + $0xb2] sm:$0xff]
      %v553 = vld [vmem:[#allocation2 + $0xc2] sm:$0xff]
      %v554 = vld [vmem:[#allocation2 + $0xca] sm:$0xff]
      %v555 = vld [vmem:[#allocation2 + $0xda] sm:$0xff]
      %v556 = vld [vmem:[#allocation2 + $0xe2] sm:$0xff]
      %v557 = vld [vmem:[#allocation2 + $0xf2] sm:$0xff]
      %v558 = vld [vmem:[#allocation2 + $0xfa] sm:$0xff]
      %v559 = vld [vmem:[#allocation2 + $0x10a] sm:$0xff]
      %v560 = vld [vmem:[#allocation2 + $0x112] sm:$0xff]
      %v561 = vld [vmem:[#allocation2 + $0x122] sm:$0xff]
      %v562 = vld [vmem:[#allocation2 + $0x12a] sm:$0xff]
      %v563 = vld [vmem:[#allocation2 + $0x13a] sm:$0xff]
      %v564 = vld [vmem:[#allocation2 + $0x142] sm:$0xff]
      %v565 = vld [vmem:[#allocation2 + $0x152] sm:$0xff]
      %v566 = vld [vmem:[#allocation2 + $0x15a] sm:$0xff]
      %v567 = vld [vmem:[#allocation2 + $0x16a] sm:$0xff]
      %v568 = vld [vmem:[#allocation2 + $0x172] sm:$0xff]
      %v569 = vld [vmem:[%s440] sm:$0xff]
      %v570 = vld [vmem:[%s440 + $0x8] sm:$0xff]
      %v571 = vld [vmem:[%s440 + $0x18] sm:$0xff]
      %v572 = vld [vmem:[%s440 + $0x20] sm:$0xff]
      %v573 = vld [vmem:[%s440 + $0x30] sm:$0xff]
      %v574 = vld [vmem:[%s440 + $0x38] sm:$0xff]
      %v575 = vld [vmem:[%s440 + $0x48] sm:$0xff]
      %v576 = vld [vmem:[%s440 + $0x50] sm:$0xff]
      %v577 = vld [vmem:[%s440 + $0x60] sm:$0xff]
      %v578 = vld [vmem:[%s440 + $0x68] sm:$0xff]
      %v579 = vld [vmem:[%s440 + $0x78] sm:$0xff]
      %v580 = vld [vmem:[%s440 + $0x80] sm:$0xff]
      %v581 = vld [vmem:[%s440 + $0x90] sm:$0xff]
      %v582 = vld [vmem:[%s440 + $0x98] sm:$0xff]
      %v583 = vld [vmem:[%s440 + $0xa8] sm:$0xff]
      %v584 = vld [vmem:[%s440 + $0xb0] sm:$0xff]
      %v585 = vld [vmem:[%s440 + $0xc0] sm:$0xff]
      %v586 = vld [vmem:[%s440 + $0xc8] sm:$0xff]
      %v587 = vld [vmem:[%s440 + $0xd8] sm:$0xff]
      %v588 = vld [vmem:[%s440 + $0xe0] sm:$0xff]
      %v589 = vld [vmem:[%s440 + $0xf0] sm:$0xff]
      %v590 = vld [vmem:[%s440 + $0xf8] sm:$0xff]
      %v591 = vld [vmem:[%s440 + $0x108] sm:$0xff]
      %v592 = vld [vmem:[%s440 + $0x110] sm:$0xff]
      %v593 = vld [vmem:[%s440 + $0x120] sm:$0xff]
      %v594 = vld [vmem:[%s440 + $0x128] sm:$0xff]
      %v595 = vld [vmem:[%s440 + $0x138] sm:$0xff]
      %v596 = vld [vmem:[%s440 + $0x140] sm:$0xff]
      %v597 = vld [vmem:[%s440 + $0x150] sm:$0xff]
      %v598 = vld [vmem:[%s440 + $0x158] sm:$0xff]
      %v599 = vld [vmem:[%s440 + $0x168] sm:$0xff]
      %v600 = vld [vmem:[%s440 + $0x170] sm:$0xff]
      %v601 = vld [vmem:[%s440 + $0x1] sm:$0xff]
      %v602 = vld [vmem:[%s440 + $0x9] sm:$0xff]
      %v603 = vld [vmem:[%s440 + $0x19] sm:$0xff]
      %v604 = vld [vmem:[%s440 + $0x21] sm:$0xff]
      %v605 = vld [vmem:[%s440 + $0x31] sm:$0xff]
      %v606 = vld [vmem:[%s440 + $0x39] sm:$0xff]
      %v607 = vld [vmem:[%s440 + $0x49] sm:$0xff]
      %v608 = vld [vmem:[%s440 + $0x51] sm:$0xff]
      %v609 = vld [vmem:[%s440 + $0x61] sm:$0xff]
      %v610 = vld [vmem:[%s440 + $0x69] sm:$0xff]
      %v611 = vld [vmem:[%s440 + $0x79] sm:$0xff]
      %v612 = vld [vmem:[%s440 + $0x81] sm:$0xff]
      %v613 = vld [vmem:[%s440 + $0x91] sm:$0xff]
      %v614 = vld [vmem:[%s440 + $0x99] sm:$0xff]
      %v615 = vld [vmem:[%s440 + $0xa9] sm:$0xff]
      %v616 = vld [vmem:[%s440 + $0xb1] sm:$0xff]
      %v617 = vld [vmem:[%s440 + $0xc1] sm:$0xff]
      %v618 = vld [vmem:[%s440 + $0xc9] sm:$0xff]
      %v619 = vld [vmem:[%s440 + $0xd9] sm:$0xff]
      %v620 = vld [vmem:[%s440 + $0xe1] sm:$0xff]
      %v621 = vld [vmem:[%s440 + $0xf1] sm:$0xff]
      %v622 = vld [vmem:[%s440 + $0xf9] sm:$0xff]
      %v623 = vld [vmem:[%s440 + $0x109] sm:$0xff]
      %v624 = vld [vmem:[%s440 + $0x111] sm:$0xff]
      %v625 = vld [vmem:[%s440 + $0x121] sm:$0xff]
      %v626 = vld [vmem:[%s440 + $0x129] sm:$0xff]
      %v627 = vld [vmem:[%s440 + $0x139] sm:$0xff]
      %v628 = vld [vmem:[%s440 + $0x141] sm:$0xff]
      %v629 = vld [vmem:[%s440 + $0x151] sm:$0xff]
      %v630 = vld [vmem:[%s440 + $0x159] sm:$0xff]
      %v631 = vld [vmem:[%s440 + $0x169] sm:$0xff]
      %v632 = vld [vmem:[%s440 + $0x171] sm:$0xff]
      %v633 = vld [vmem:[%s440 + $0x2] sm:$0xff]
      %v634 = vld [vmem:[%s440 + $0xa] sm:$0xff]
      %v635 = vld [vmem:[%s440 + $0x1a] sm:$0xff]
      %v636 = vld [vmem:[%s440 + $0x22] sm:$0xff]
      %v637 = vld [vmem:[%s440 + $0x32] sm:$0xff]
      %v638 = vld [vmem:[%s440 + $0x3a] sm:$0xff]
      %v639 = vld [vmem:[%s440 + $0x4a] sm:$0xff]
      %v640 = vld [vmem:[%s440 + $0x52] sm:$0xff]
      %v641 = vld [vmem:[%s440 + $0x62] sm:$0xff]
      %v642 = vld [vmem:[%s440 + $0x6a] sm:$0xff]
      %v643 = vld [vmem:[%s440 + $0x7a] sm:$0xff]
      %v644 = vld [vmem:[%s440 + $0x82] sm:$0xff]
      %v645 = vld [vmem:[%s440 + $0x92] sm:$0xff]
      %v646 = vld [vmem:[%s440 + $0x9a] sm:$0xff]
      %v647 = vld [vmem:[%s440 + $0xaa] sm:$0xff]
      %v648 = vld [vmem:[%s440 + $0xb2] sm:$0xff]
      %v649 = vld [vmem:[%s440 + $0xc2] sm:$0xff]
      %v650 = vld [vmem:[%s440 + $0xca] sm:$0xff]
      %v651 = vld [vmem:[%s440 + $0xda] sm:$0xff]
      %v652 = vld [vmem:[%s440 + $0xe2] sm:$0xff]
      %v653 = vld [vmem:[%s440 + $0xf2] sm:$0xff]
      %v654 = vld [vmem:[%s440 + $0xfa] sm:$0xff]
      %v655 = vld [vmem:[%s440 + $0x10a] sm:$0xff]
      %v656 = vld [vmem:[%s440 + $0x112] sm:$0xff]
      %v657 = vld [vmem:[%s440 + $0x122] sm:$0xff]
      %v658 = vld [vmem:[%s440 + $0x12a] sm:$0xff]
      %v659 = vld [vmem:[%s440 + $0x13a] sm:$0xff]
      %v660 = vld [vmem:[%s440 + $0x142] sm:$0xff]
      %v661 = vld [vmem:[%s440 + $0x152] sm:$0xff]
      %v662 = vld [vmem:[%s440 + $0x15a] sm:$0xff]
      %v663 = vld [vmem:[%s440 + $0x16a] sm:$0xff]
      %v664 = vld [vmem:[%s440 + $0x172] sm:$0xff]
      %s665 = scalar_lea.vmem [#allocation2], 48
      %v666 = vld [vmem:[%s665] sm:$0xff]
      %v667 = vld [vmem:[%s665 + $0x8] sm:$0xff]
      %v668 = vld [vmem:[%s665 + $0x18] sm:$0xff]
      %v669 = vld [vmem:[%s665 + $0x20] sm:$0xff]
      %v670 = vld [vmem:[%s665 + $0x30] sm:$0xff]
      %v671 = vld [vmem:[%s665 + $0x38] sm:$0xff]
      %v672 = vld [vmem:[%s665 + $0x48] sm:$0xff]
      %v673 = vld [vmem:[%s665 + $0x50] sm:$0xff]
      %v674 = vld [vmem:[%s665 + $0x60] sm:$0xff]
      %v675 = vld [vmem:[%s665 + $0x68] sm:$0xff]
      %v676 = vld [vmem:[%s665 + $0x78] sm:$0xff]
      %v677 = vld [vmem:[%s665 + $0x80] sm:$0xff]
      %v678 = vld [vmem:[%s665 + $0x90] sm:$0xff]
      %v679 = vld [vmem:[%s665 + $0x98] sm:$0xff]
      %v680 = vld [vmem:[%s665 + $0xa8] sm:$0xff]
      %v681 = vld [vmem:[%s665 + $0xb0] sm:$0xff]
      %v682 = vld [vmem:[%s665 + $0xc0] sm:$0xff]
      %v683 = vld [vmem:[%s665 + $0xc8] sm:$0xff]
      %v684 = vld [vmem:[%s665 + $0xd8] sm:$0xff]
      %v685 = vld [vmem:[%s665 + $0xe0] sm:$0xff]
      %v686 = vld [vmem:[%s665 + $0xf0] sm:$0xff]
      %v687 = vld [vmem:[%s665 + $0xf8] sm:$0xff]
      %v688 = vld [vmem:[%s665 + $0x108] sm:$0xff]
      %v689 = vld [vmem:[%s665 + $0x110] sm:$0xff]
      %v690 = vld [vmem:[%s665 + $0x120] sm:$0xff]
      %v691 = vld [vmem:[%s665 + $0x128] sm:$0xff]
      %v692 = vld [vmem:[%s665 + $0x138] sm:$0xff]
      %v693 = vld [vmem:[%s665 + $0x140] sm:$0xff]
      %v694 = vld [vmem:[%s665 + $0x150] sm:$0xff]
      %v695 = vld [vmem:[%s665 + $0x158] sm:$0xff]
      %v696 = vld [vmem:[%s665 + $0x168] sm:$0xff]
      %v697 = vld [vmem:[%s665 + $0x170] sm:$0xff]
      %v698 = vld [vmem:[%s665 + $0x1] sm:$0xff]
      %v699 = vld [vmem:[%s665 + $0x9] sm:$0xff]
      %v700 = vld [vmem:[%s665 + $0x19] sm:$0xff]
      %v701 = vld [vmem:[%s665 + $0x21] sm:$0xff]
      %v702 = vld [vmem:[%s665 + $0x31] sm:$0xff]
      %v703 = vld [vmem:[%s665 + $0x39] sm:$0xff]
      %v704 = vld [vmem:[%s665 + $0x49] sm:$0xff]
      %v705 = vld [vmem:[%s665 + $0x51] sm:$0xff]
      %v706 = vld [vmem:[%s665 + $0x61] sm:$0xff]
      %v707 = vld [vmem:[%s665 + $0x69] sm:$0xff]
      %v708 = vld [vmem:[%s665 + $0x79] sm:$0xff]
      %v709 = vld [vmem:[%s665 + $0x81] sm:$0xff]
      %v710 = vld [vmem:[%s665 + $0x91] sm:$0xff]
      %v711 = vld [vmem:[%s665 + $0x99] sm:$0xff]
      %v712 = vld [vmem:[%s665 + $0xa9] sm:$0xff]
      %v713 = vld [vmem:[%s665 + $0xb1] sm:$0xff]
      %v714 = vld [vmem:[%s665 + $0xc1] sm:$0xff]
      %v715 = vld [vmem:[%s665 + $0xc9] sm:$0xff]
      %v716 = vld [vmem:[%s665 + $0xd9] sm:$0xff]
      %v717 = vld [vmem:[%s665 + $0xe1] sm:$0xff]
      %v718 = vld [vmem:[%s665 + $0xf1] sm:$0xff]
      %v719 = vld [vmem:[%s665 + $0xf9] sm:$0xff]
      %v720 = vld [vmem:[%s665 + $0x109] sm:$0xff]
      %v721 = vld [vmem:[%s665 + $0x111] sm:$0xff]
      %v722 = vld [vmem:[%s665 + $0x121] sm:$0xff]
      %v723 = vld [vmem:[%s665 + $0x129] sm:$0xff]
      %v724 = vld [vmem:[%s665 + $0x139] sm:$0xff]
      %v725 = vld [vmem:[%s665 + $0x141] sm:$0xff]
      %v726 = vld [vmem:[%s665 + $0x151] sm:$0xff]
      %v727 = vld [vmem:[%s665 + $0x159] sm:$0xff]
      %v728 = vld [vmem:[%s665 + $0x169] sm:$0xff]
      %v729 = vld [vmem:[%s665 + $0x171] sm:$0xff]
      %v730 = vld [vmem:[%s665 + $0x2] sm:$0xff]
      %v731 = vld [vmem:[%s665 + $0xa] sm:$0xff]
      %v732 = vld [vmem:[%s665 + $0x1a] sm:$0xff]
      %v733 = vld [vmem:[%s665 + $0x22] sm:$0xff]
      %v734 = vld [vmem:[%s665 + $0x32] sm:$0xff]
      %v735 = vld [vmem:[%s665 + $0x3a] sm:$0xff]
      %v736 = vld [vmem:[%s665 + $0x4a] sm:$0xff]
      %v737 = vld [vmem:[%s665 + $0x52] sm:$0xff]
      %v738 = vld [vmem:[%s665 + $0x62] sm:$0xff]
      %v739 = vld [vmem:[%s665 + $0x6a] sm:$0xff]
      %v740 = vld [vmem:[%s665 + $0x7a] sm:$0xff]
      %v741 = vld [vmem:[%s665 + $0x82] sm:$0xff]
      %v742 = vld [vmem:[%s665 + $0x92] sm:$0xff]
      %v743 = vld [vmem:[%s665 + $0x9a] sm:$0xff]
      %v744 = vld [vmem:[%s665 + $0xaa] sm:$0xff]
      %v745 = vld [vmem:[%s665 + $0xb2] sm:$0xff]
      %v746 = vld [vmem:[%s665 + $0xc2] sm:$0xff]
      %v747 = vld [vmem:[%s665 + $0xca] sm:$0xff]
      %v748 = vld [vmem:[%s665 + $0xda] sm:$0xff]
      %v749 = vld [vmem:[%s665 + $0xe2] sm:$0xff]
      %v750 = vld [vmem:[%s665 + $0xf2] sm:$0xff]
      %v751 = vld [vmem:[%s665 + $0xfa] sm:$0xff]
      %v752 = vld [vmem:[%s665 + $0x10a] sm:$0xff]
      %v753 = vld [vmem:[%s665 + $0x112] sm:$0xff]
      %v754 = vld [vmem:[%s665 + $0x122] sm:$0xff]
      %v755 = vld [vmem:[%s665 + $0x12a] sm:$0xff]
      %v756 = vld [vmem:[%s665 + $0x13a] sm:$0xff]
      %v757 = vld [vmem:[%s665 + $0x142] sm:$0xff]
      %v758 = vld [vmem:[%s665 + $0x152] sm:$0xff]
      %v759 = vld [vmem:[%s665 + $0x15a] sm:$0xff]
      %v760 = vld [vmem:[%s665 + $0x16a] sm:$0xff]
      %v761 = vld [vmem:[%s665 + $0x172] sm:$0xff]
      %794 = vrot.lane.b32.xlu0 %v505, 8
      %v795 = vpop.permute.xlu0 %794
      %796 = vrot.lane.b32.xlu0 %v506, 8
      %v797 = vpop.permute.xlu0 %796
      %798 = vrot.lane.b32.xlu0 %v507, 8
      %v799 = vpop.permute.xlu0 %798
      %800 = vrot.lane.b32.xlu0 %v508, 8
      %v801 = vpop.permute.xlu0 %800
      %802 = vrot.lane.b32.xlu0 %v509, 8
      %v803 = vpop.permute.xlu0 %802
      %804 = vrot.lane.b32.xlu0 %v510, 8
      %v805 = vpop.permute.xlu0 %804
      %806 = vrot.lane.b32.xlu0 %v511, 8
      %v807 = vpop.permute.xlu0 %806
      %808 = vrot.lane.b32.xlu0 %v512, 8
      %v809 = vpop.permute.xlu0 %808
      %810 = vrot.lane.b32.xlu0 %v513, 8
      %v811 = vpop.permute.xlu0 %810
      %812 = vrot.lane.b32.xlu0 %v514, 8
      %v813 = vpop.permute.xlu0 %812
      %814 = vrot.lane.b32.xlu0 %v515, 8
      %v815 = vpop.permute.xlu0 %814
      %816 = vrot.lane.b32.xlu0 %v516, 8
      %v817 = vpop.permute.xlu0 %816
      %818 = vrot.lane.b32.xlu0 %v517, 8
      %v819 = vpop.permute.xlu0 %818
      %820 = vrot.lane.b32.xlu0 %v518, 8
      %v821 = vpop.permute.xlu0 %820
      %822 = vrot.lane.b32.xlu0 %v519, 8
      %v823 = vpop.permute.xlu0 %822
      %824 = vrot.lane.b32.xlu0 %v520, 8
      %v825 = vpop.permute.xlu0 %824
      %826 = vrot.lane.b32.xlu0 %v521, 8
      %v827 = vpop.permute.xlu0 %826
      %828 = vrot.lane.b32.xlu0 %v522, 8
      %v829 = vpop.permute.xlu0 %828
      %830 = vrot.lane.b32.xlu0 %v523, 8
      %v831 = vpop.permute.xlu0 %830
      %832 = vrot.lane.b32.xlu0 %v524, 8
      %v833 = vpop.permute.xlu0 %832
      %834 = vrot.lane.b32.xlu0 %v525, 8
      %v835 = vpop.permute.xlu0 %834
      %836 = vrot.lane.b32.xlu0 %v526, 8
      %v837 = vpop.permute.xlu0 %836
      %838 = vrot.lane.b32.xlu0 %v527, 8
      %v839 = vpop.permute.xlu0 %838
      %840 = vrot.lane.b32.xlu0 %v528, 8
      %v841 = vpop.permute.xlu0 %840
      %842 = vrot.lane.b32.xlu0 %v529, 8
      %v843 = vpop.permute.xlu0 %842
      %844 = vrot.lane.b32.xlu0 %v530, 8
      %v845 = vpop.permute.xlu0 %844
      %846 = vrot.lane.b32.xlu0 %v531, 8
      %v847 = vpop.permute.xlu0 %846
      %848 = vrot.lane.b32.xlu0 %v532, 8
      %v849 = vpop.permute.xlu0 %848
      %850 = vrot.lane.b32.xlu0 %v533, 8
      %v851 = vpop.permute.xlu0 %850
      %852 = vrot.lane.b32.xlu0 %v534, 8
      %v853 = vpop.permute.xlu0 %852
      %854 = vrot.lane.b32.xlu0 %v535, 8
      %v855 = vpop.permute.xlu0 %854
      %856 = vrot.lane.b32.xlu0 %v536, 8
      %v857 = vpop.permute.xlu0 %856
      %922 = vrot.lane.b32.xlu0 %v537, 16
      %v923 = vpop.permute.xlu0 %922
      %924 = vrot.lane.b32.xlu0 %v538, 16
      %v925 = vpop.permute.xlu0 %924
      %926 = vrot.lane.b32.xlu0 %v539, 16
      %v927 = vpop.permute.xlu0 %926
      %928 = vrot.lane.b32.xlu0 %v540, 16
      %v929 = vpop.permute.xlu0 %928
      %930 = vrot.lane.b32.xlu0 %v541, 16
      %v931 = vpop.permute.xlu0 %930
      %932 = vrot.lane.b32.xlu0 %v542, 16
      %v933 = vpop.permute.xlu0 %932
      %934 = vrot.lane.b32.xlu0 %v543, 16
      %v935 = vpop.permute.xlu0 %934
      %936 = vrot.lane.b32.xlu0 %v544, 16
      %v937 = vpop.permute.xlu0 %936
      %938 = vrot.lane.b32.xlu0 %v545, 16
      %v939 = vpop.permute.xlu0 %938
      %940 = vrot.lane.b32.xlu0 %v546, 16
      %v941 = vpop.permute.xlu0 %940
      %942 = vrot.lane.b32.xlu0 %v547, 16
      %v943 = vpop.permute.xlu0 %942
      %944 = vrot.lane.b32.xlu0 %v548, 16
      %v945 = vpop.permute.xlu0 %944
      %946 = vrot.lane.b32.xlu0 %v549, 16
      %v947 = vpop.permute.xlu0 %946
      %948 = vrot.lane.b32.xlu0 %v550, 16
      %v949 = vpop.permute.xlu0 %948
      %950 = vrot.lane.b32.xlu0 %v551, 16
      %v951 = vpop.permute.xlu0 %950
      %952 = vrot.lane.b32.xlu0 %v552, 16
      %v953 = vpop.permute.xlu0 %952
      %954 = vrot.lane.b32.xlu0 %v553, 16
      %v955 = vpop.permute.xlu0 %954
      %956 = vrot.lane.b32.xlu0 %v554, 16
      %v957 = vpop.permute.xlu0 %956
      %958 = vrot.lane.b32.xlu0 %v555, 16
      %v959 = vpop.permute.xlu0 %958
      %960 = vrot.lane.b32.xlu0 %v556, 16
      %v961 = vpop.permute.xlu0 %960
      %962 = vrot.lane.b32.xlu0 %v557, 16
      %v963 = vpop.permute.xlu0 %962
      %964 = vrot.lane.b32.xlu0 %v558, 16
      %v965 = vpop.permute.xlu0 %964
      %966 = vrot.lane.b32.xlu0 %v559, 16
      %v967 = vpop.permute.xlu0 %966
      %968 = vrot.lane.b32.xlu0 %v560, 16
      %v969 = vpop.permute.xlu0 %968
      %970 = vrot.lane.b32.xlu0 %v561, 16
      %v971 = vpop.permute.xlu0 %970
      %972 = vrot.lane.b32.xlu0 %v562, 16
      %v973 = vpop.permute.xlu0 %972
      %974 = vrot.lane.b32.xlu0 %v563, 16
      %v975 = vpop.permute.xlu0 %974
      %976 = vrot.lane.b32.xlu0 %v564, 16
      %v977 = vpop.permute.xlu0 %976
      %978 = vrot.lane.b32.xlu0 %v565, 16
      %v979 = vpop.permute.xlu0 %978
      %980 = vrot.lane.b32.xlu0 %v566, 16
      %v981 = vpop.permute.xlu0 %980
      %982 = vrot.lane.b32.xlu0 %v567, 16
      %v983 = vpop.permute.xlu0 %982
      %984 = vrot.lane.b32.xlu0 %v568, 16
      %v985 = vpop.permute.xlu0 %984
      %1050 = vrot.lane.b32.xlu0 %v569, 24
      %v1051 = vpop.permute.xlu0 %1050
      %1052 = vrot.lane.b32.xlu0 %v570, 24
      %v1053 = vpop.permute.xlu0 %1052
      %1054 = vrot.lane.b32.xlu0 %v571, 24
      %v1055 = vpop.permute.xlu0 %1054
      %1056 = vrot.lane.b32.xlu0 %v572, 24
      %v1057 = vpop.permute.xlu0 %1056
      %1058 = vrot.lane.b32.xlu0 %v573, 24
      %v1059 = vpop.permute.xlu0 %1058
      %1060 = vrot.lane.b32.xlu0 %v574, 24
      %v1061 = vpop.permute.xlu0 %1060
      %1062 = vrot.lane.b32.xlu0 %v575, 24
      %v1063 = vpop.permute.xlu0 %1062
      %1064 = vrot.lane.b32.xlu0 %v576, 24
      %v1065 = vpop.permute.xlu0 %1064
      %1066 = vrot.lane.b32.xlu0 %v577, 24
      %v1067 = vpop.permute.xlu0 %1066
      %1068 = vrot.lane.b32.xlu0 %v578, 24
      %v1069 = vpop.permute.xlu0 %1068
      %1070 = vrot.lane.b32.xlu0 %v579, 24
      %v1071 = vpop.permute.xlu0 %1070
      %1072 = vrot.lane.b32.xlu0 %v580, 24
      %v1073 = vpop.permute.xlu0 %1072
      %1074 = vrot.lane.b32.xlu0 %v581, 24
      %v1075 = vpop.permute.xlu0 %1074
      %1076 = vrot.lane.b32.xlu0 %v582, 24
      %v1077 = vpop.permute.xlu0 %1076
      %1078 = vrot.lane.b32.xlu0 %v583, 24
      %v1079 = vpop.permute.xlu0 %1078
      %1080 = vrot.lane.b32.xlu0 %v584, 24
      %v1081 = vpop.permute.xlu0 %1080
      %1082 = vrot.lane.b32.xlu0 %v585, 24
      %v1083 = vpop.permute.xlu0 %1082
      %1084 = vrot.lane.b32.xlu0 %v586, 24
      %v1085 = vpop.permute.xlu0 %1084
      %1086 = vrot.lane.b32.xlu0 %v587, 24
      %v1087 = vpop.permute.xlu0 %1086
      %1088 = vrot.lane.b32.xlu0 %v588, 24
      %v1089 = vpop.permute.xlu0 %1088
      %1090 = vrot.lane.b32.xlu0 %v589, 24
      %v1091 = vpop.permute.xlu0 %1090
      %1092 = vrot.lane.b32.xlu0 %v590, 24
      %v1093 = vpop.permute.xlu0 %1092
      %1094 = vrot.lane.b32.xlu0 %v591, 24
      %v1095 = vpop.permute.xlu0 %1094
      %1096 = vrot.lane.b32.xlu0 %v592, 24
      %v1097 = vpop.permute.xlu0 %1096
      %1098 = vrot.lane.b32.xlu0 %v593, 24
      %v1099 = vpop.permute.xlu0 %1098
      %1100 = vrot.lane.b32.xlu0 %v594, 24
      %v1101 = vpop.permute.xlu0 %1100
      %1102 = vrot.lane.b32.xlu0 %v595, 24
      %v1103 = vpop.permute.xlu0 %1102
      %1104 = vrot.lane.b32.xlu0 %v596, 24
      %v1105 = vpop.permute.xlu0 %1104
      %1106 = vrot.lane.b32.xlu0 %v597, 24
      %v1107 = vpop.permute.xlu0 %1106
      %1108 = vrot.lane.b32.xlu0 %v598, 24
      %v1109 = vpop.permute.xlu0 %1108
      %1110 = vrot.lane.b32.xlu0 %v599, 24
      %v1111 = vpop.permute.xlu0 %1110
      %1112 = vrot.lane.b32.xlu0 %v600, 24
      %v1113 = vpop.permute.xlu0 %1112
      %1178 = vrot.lane.b32.xlu0 %v601, 32
      %v1179 = vpop.permute.xlu0 %1178
      %1180 = vrot.lane.b32.xlu0 %v602, 32
      %v1181 = vpop.permute.xlu0 %1180
      %1182 = vrot.lane.b32.xlu0 %v603, 32
      %v1183 = vpop.permute.xlu0 %1182
      %1184 = vrot.lane.b32.xlu0 %v604, 32
      %v1185 = vpop.permute.xlu0 %1184
      %1186 = vrot.lane.b32.xlu0 %v605, 32
      %v1187 = vpop.permute.xlu0 %1186
      %1188 = vrot.lane.b32.xlu0 %v606, 32
      %v1189 = vpop.permute.xlu0 %1188
      %1190 = vrot.lane.b32.xlu0 %v607, 32
      %v1191 = vpop.permute.xlu0 %1190
      %1192 = vrot.lane.b32.xlu0 %v608, 32
      %v1193 = vpop.permute.xlu0 %1192
      %1194 = vrot.lane.b32.xlu0 %v609, 32
      %v1195 = vpop.permute.xlu0 %1194
      %1196 = vrot.lane.b32.xlu0 %v610, 32
      %v1197 = vpop.permute.xlu0 %1196
      %1198 = vrot.lane.b32.xlu0 %v611, 32
      %v1199 = vpop.permute.xlu0 %1198
      %1200 = vrot.lane.b32.xlu0 %v612, 32
      %v1201 = vpop.permute.xlu0 %1200
      %1202 = vrot.lane.b32.xlu0 %v613, 32
      %v1203 = vpop.permute.xlu0 %1202
      %1204 = vrot.lane.b32.xlu0 %v614, 32
      %v1205 = vpop.permute.xlu0 %1204
      %1206 = vrot.lane.b32.xlu0 %v615, 32
      %v1207 = vpop.permute.xlu0 %1206
      %1208 = vrot.lane.b32.xlu0 %v616, 32
      %v1209 = vpop.permute.xlu0 %1208
      %1210 = vrot.lane.b32.xlu0 %v617, 32
      %v1211 = vpop.permute.xlu0 %1210
      %1212 = vrot.lane.b32.xlu0 %v618, 32
      %v1213 = vpop.permute.xlu0 %1212
      %1214 = vrot.lane.b32.xlu0 %v619, 32
      %v1215 = vpop.permute.xlu0 %1214
      %1216 = vrot.lane.b32.xlu0 %v620, 32
      %v1217 = vpop.permute.xlu0 %1216
      %1218 = vrot.lane.b32.xlu0 %v621, 32
      %v1219 = vpop.permute.xlu0 %1218
      %1220 = vrot.lane.b32.xlu0 %v622, 32
      %v1221 = vpop.permute.xlu0 %1220
      %1222 = vrot.lane.b32.xlu0 %v623, 32
      %v1223 = vpop.permute.xlu0 %1222
      %1224 = vrot.lane.b32.xlu0 %v624, 32
      %v1225 = vpop.permute.xlu0 %1224
      %1226 = vrot.lane.b32.xlu0 %v625, 32
      %v1227 = vpop.permute.xlu0 %1226
      %1228 = vrot.lane.b32.xlu0 %v626, 32
      %v1229 = vpop.permute.xlu0 %1228
      %1230 = vrot.lane.b32.xlu0 %v627, 32
      %v1231 = vpop.permute.xlu0 %1230
      %1232 = vrot.lane.b32.xlu0 %v628, 32
      %v1233 = vpop.permute.xlu0 %1232
      %1234 = vrot.lane.b32.xlu0 %v629, 32
      %v1235 = vpop.permute.xlu0 %1234
      %1236 = vrot.lane.b32.xlu0 %v630, 32
      %v1237 = vpop.permute.xlu0 %1236
      %1238 = vrot.lane.b32.xlu0 %v631, 32
      %v1239 = vpop.permute.xlu0 %1238
      %1240 = vrot.lane.b32.xlu0 %v632, 32
      %v1241 = vpop.permute.xlu0 %1240
      %1306 = vrot.lane.b32.xlu0 %v633, 40
      %v1307 = vpop.permute.xlu0 %1306
      %1308 = vrot.lane.b32.xlu0 %v634, 40
      %v1309 = vpop.permute.xlu0 %1308
      %1310 = vrot.lane.b32.xlu0 %v635, 40
      %v1311 = vpop.permute.xlu0 %1310
      %1312 = vrot.lane.b32.xlu0 %v636, 40
      %v1313 = vpop.permute.xlu0 %1312
      %1314 = vrot.lane.b32.xlu0 %v637, 40
      %v1315 = vpop.permute.xlu0 %1314
      %1316 = vrot.lane.b32.xlu0 %v638, 40
      %v1317 = vpop.permute.xlu0 %1316
      %1318 = vrot.lane.b32.xlu0 %v639, 40
      %v1319 = vpop.permute.xlu0 %1318
      %1320 = vrot.lane.b32.xlu0 %v640, 40
      %v1321 = vpop.permute.xlu0 %1320
      %1322 = vrot.lane.b32.xlu0 %v641, 40
      %v1323 = vpop.permute.xlu0 %1322
      %1324 = vrot.lane.b32.xlu0 %v642, 40
      %v1325 = vpop.permute.xlu0 %1324
      %1326 = vrot.lane.b32.xlu0 %v643, 40
      %v1327 = vpop.permute.xlu0 %1326
      %1328 = vrot.lane.b32.xlu0 %v644, 40
      %v1329 = vpop.permute.xlu0 %1328
      %1330 = vrot.lane.b32.xlu0 %v645, 40
      %v1331 = vpop.permute.xlu0 %1330
      %1332 = vrot.lane.b32.xlu0 %v646, 40
      %v1333 = vpop.permute.xlu0 %1332
      %1334 = vrot.lane.b32.xlu0 %v647, 40
      %v1335 = vpop.permute.xlu0 %1334
      %1336 = vrot.lane.b32.xlu0 %v648, 40
      %v1337 = vpop.permute.xlu0 %1336
      %1338 = vrot.lane.b32.xlu0 %v649, 40
      %v1339 = vpop.permute.xlu0 %1338
      %1340 = vrot.lane.b32.xlu0 %v650, 40
      %v1341 = vpop.permute.xlu0 %1340
      %1342 = vrot.lane.b32.xlu0 %v651, 40
      %v1343 = vpop.permute.xlu0 %1342
      %1344 = vrot.lane.b32.xlu0 %v652, 40
      %v1345 = vpop.permute.xlu0 %1344
      %1346 = vrot.lane.b32.xlu0 %v653, 40
      %v1347 = vpop.permute.xlu0 %1346
      %1348 = vrot.lane.b32.xlu0 %v654, 40
      %v1349 = vpop.permute.xlu0 %1348
      %1350 = vrot.lane.b32.xlu0 %v655, 40
      %v1351 = vpop.permute.xlu0 %1350
      %1352 = vrot.lane.b32.xlu0 %v656, 40
      %v1353 = vpop.permute.xlu0 %1352
      %1354 = vrot.lane.b32.xlu0 %v657, 40
      %v1355 = vpop.permute.xlu0 %1354
      %1356 = vrot.lane.b32.xlu0 %v658, 40
      %v1357 = vpop.permute.xlu0 %1356
      %1358 = vrot.lane.b32.xlu0 %v659, 40
      %v1359 = vpop.permute.xlu0 %1358
      %1360 = vrot.lane.b32.xlu0 %v660, 40
      %v1361 = vpop.permute.xlu0 %1360
      %1362 = vrot.lane.b32.xlu0 %v661, 40
      %v1363 = vpop.permute.xlu0 %1362
      %1364 = vrot.lane.b32.xlu0 %v662, 40
      %v1365 = vpop.permute.xlu0 %1364
      %1366 = vrot.lane.b32.xlu0 %v663, 40
      %v1367 = vpop.permute.xlu0 %1366
      %1368 = vrot.lane.b32.xlu0 %v664, 40
      %v1369 = vpop.permute.xlu0 %1368
      %1434 = vrot.lane.b32.xlu0 %v666, 48
      %v1435 = vpop.permute.xlu0 %1434
      %1436 = vrot.lane.b32.xlu0 %v667, 48
      %v1437 = vpop.permute.xlu0 %1436
      %1438 = vrot.lane.b32.xlu0 %v668, 48
      %v1439 = vpop.permute.xlu0 %1438
      %1440 = vrot.lane.b32.xlu0 %v669, 48
      %v1441 = vpop.permute.xlu0 %1440
      %1442 = vrot.lane.b32.xlu0 %v670, 48
      %v1443 = vpop.permute.xlu0 %1442
      %1444 = vrot.lane.b32.xlu0 %v671, 48
      %v1445 = vpop.permute.xlu0 %1444
      %1446 = vrot.lane.b32.xlu0 %v672, 48
      %v1447 = vpop.permute.xlu0 %1446
      %1448 = vrot.lane.b32.xlu0 %v673, 48
      %v1449 = vpop.permute.xlu0 %1448
      %1450 = vrot.lane.b32.xlu0 %v674, 48
      %v1451 = vpop.permute.xlu0 %1450
      %1452 = vrot.lane.b32.xlu0 %v675, 48
      %v1453 = vpop.permute.xlu0 %1452
      %1454 = vrot.lane.b32.xlu0 %v676, 48
      %v1455 = vpop.permute.xlu0 %1454
      %1456 = vrot.lane.b32.xlu0 %v677, 48
      %v1457 = vpop.permute.xlu0 %1456
      %1458 = vrot.lane.b32.xlu0 %v678, 48
      %v1459 = vpop.permute.xlu0 %1458
      %1460 = vrot.lane.b32.xlu0 %v679, 48
      %v1461 = vpop.permute.xlu0 %1460
      %1462 = vrot.lane.b32.xlu0 %v680, 48
      %v1463 = vpop.permute.xlu0 %1462
      %1464 = vrot.lane.b32.xlu0 %v681, 48
      %v1465 = vpop.permute.xlu0 %1464
      %1466 = vrot.lane.b32.xlu0 %v682, 48
      %v1467 = vpop.permute.xlu0 %1466
      %1468 = vrot.lane.b32.xlu0 %v683, 48
      %v1469 = vpop.permute.xlu0 %1468
      %1470 = vrot.lane.b32.xlu0 %v684, 48
      %v1471 = vpop.permute.xlu0 %1470
      %1472 = vrot.lane.b32.xlu0 %v685, 48
      %v1473 = vpop.permute.xlu0 %1472
      %1474 = vrot.lane.b32.xlu0 %v686, 48
      %v1475 = vpop.permute.xlu0 %1474
      %1476 = vrot.lane.b32.xlu0 %v687, 48
      %v1477 = vpop.permute.xlu0 %1476
      %1478 = vrot.lane.b32.xlu0 %v688, 48
      %v1479 = vpop.permute.xlu0 %1478
      %1480 = vrot.lane.b32.xlu0 %v689, 48
      %v1481 = vpop.permute.xlu0 %1480
      %1482 = vrot.lane.b32.xlu0 %v690, 48
      %v1483 = vpop.permute.xlu0 %1482
      %1484 = vrot.lane.b32.xlu0 %v691, 48
      %v1485 = vpop.permute.xlu0 %1484
      %1486 = vrot.lane.b32.xlu0 %v692, 48
      %v1487 = vpop.permute.xlu0 %1486
      %1488 = vrot.lane.b32.xlu0 %v693, 48
      %v1489 = vpop.permute.xlu0 %1488
      %1490 = vrot.lane.b32.xlu0 %v694, 48
      %v1491 = vpop.permute.xlu0 %1490
      %1492 = vrot.lane.b32.xlu0 %v695, 48
      %v1493 = vpop.permute.xlu0 %1492
      %1494 = vrot.lane.b32.xlu0 %v696, 48
      %v1495 = vpop.permute.xlu0 %1494
      %1496 = vrot.lane.b32.xlu0 %v697, 48
      %v1497 = vpop.permute.xlu0 %1496
      %1562 = vrot.lane.b32.xlu0 %v698, 56
      %v1563 = vpop.permute.xlu0 %1562
      %1564 = vrot.lane.b32.xlu0 %v699, 56
      %v1565 = vpop.permute.xlu0 %1564
      %1566 = vrot.lane.b32.xlu0 %v700, 56
      %v1567 = vpop.permute.xlu0 %1566
      %1568 = vrot.lane.b32.xlu0 %v701, 56
      %v1569 = vpop.permute.xlu0 %1568
      %1570 = vrot.lane.b32.xlu0 %v702, 56
      %v1571 = vpop.permute.xlu0 %1570
      %1572 = vrot.lane.b32.xlu0 %v703, 56
      %v1573 = vpop.permute.xlu0 %1572
      %1574 = vrot.lane.b32.xlu0 %v704, 56
      %v1575 = vpop.permute.xlu0 %1574
      %1576 = vrot.lane.b32.xlu0 %v705, 56
      %v1577 = vpop.permute.xlu0 %1576
      %1578 = vrot.lane.b32.xlu0 %v706, 56
      %v1579 = vpop.permute.xlu0 %1578
      %1580 = vrot.lane.b32.xlu0 %v707, 56
      %v1581 = vpop.permute.xlu0 %1580
      %1582 = vrot.lane.b32.xlu0 %v708, 56
      %v1583 = vpop.permute.xlu0 %1582
      %1584 = vrot.lane.b32.xlu0 %v709, 56
      %v1585 = vpop.permute.xlu0 %1584
      %1586 = vrot.lane.b32.xlu0 %v710, 56
      %v1587 = vpop.permute.xlu0 %1586
      %1588 = vrot.lane.b32.xlu0 %v711, 56
      %v1589 = vpop.permute.xlu0 %1588
      %1590 = vrot.lane.b32.xlu0 %v712, 56
      %v1591 = vpop.permute.xlu0 %1590
      %1592 = vrot.lane.b32.xlu0 %v713, 56
      %v1593 = vpop.permute.xlu0 %1592
      %1594 = vrot.lane.b32.xlu0 %v714, 56
      %v1595 = vpop.permute.xlu0 %1594
      %1596 = vrot.lane.b32.xlu0 %v715, 56
      %v1597 = vpop.permute.xlu0 %1596
      %1598 = vrot.lane.b32.xlu0 %v716, 56
      %v1599 = vpop.permute.xlu0 %1598
      %1600 = vrot.lane.b32.xlu0 %v717, 56
      %v1601 = vpop.permute.xlu0 %1600
      %1602 = vrot.lane.b32.xlu0 %v718, 56
      %v1603 = vpop.permute.xlu0 %1602
      %1604 = vrot.lane.b32.xlu0 %v719, 56
      %v1605 = vpop.permute.xlu0 %1604
      %1606 = vrot.lane.b32.xlu0 %v720, 56
      %v1607 = vpop.permute.xlu0 %1606
      %1608 = vrot.lane.b32.xlu0 %v721, 56
      %v1609 = vpop.permute.xlu0 %1608
      %1610 = vrot.lane.b32.xlu0 %v722, 56
      %v1611 = vpop.permute.xlu0 %1610
      %1612 = vrot.lane.b32.xlu0 %v723, 56
      %v1613 = vpop.permute.xlu0 %1612
      %1614 = vrot.lane.b32.xlu0 %v724, 56
      %v1615 = vpop.permute.xlu0 %1614
      %1616 = vrot.lane.b32.xlu0 %v725, 56
      %v1617 = vpop.permute.xlu0 %1616
      %1618 = vrot.lane.b32.xlu0 %v726, 56
      %v1619 = vpop.permute.xlu0 %1618
      %1620 = vrot.lane.b32.xlu0 %v727, 56
      %v1621 = vpop.permute.xlu0 %1620
      %1622 = vrot.lane.b32.xlu0 %v728, 56
      %v1623 = vpop.permute.xlu0 %1622
      %1624 = vrot.lane.b32.xlu0 %v729, 56
      %v1625 = vpop.permute.xlu0 %1624
      %1690 = vrot.lane.b32.xlu0 %v730, 64
      %v1691 = vpop.permute.xlu0 %1690
      %1692 = vrot.lane.b32.xlu0 %v731, 64
      %v1693 = vpop.permute.xlu0 %1692
      %1694 = vrot.lane.b32.xlu0 %v732, 64
      %v1695 = vpop.permute.xlu0 %1694
      %1696 = vrot.lane.b32.xlu0 %v733, 64
      %v1697 = vpop.permute.xlu0 %1696
      %1698 = vrot.lane.b32.xlu0 %v734, 64
      %v1699 = vpop.permute.xlu0 %1698
      %1700 = vrot.lane.b32.xlu0 %v735, 64
      %v1701 = vpop.permute.xlu0 %1700
      %1702 = vrot.lane.b32.xlu0 %v736, 64
      %v1703 = vpop.permute.xlu0 %1702
      %1704 = vrot.lane.b32.xlu0 %v737, 64
      %v1705 = vpop.permute.xlu0 %1704
      %1706 = vrot.lane.b32.xlu0 %v738, 64
      %v1707 = vpop.permute.xlu0 %1706
      %1708 = vrot.lane.b32.xlu0 %v739, 64
      %v1709 = vpop.permute.xlu0 %1708
      %1710 = vrot.lane.b32.xlu0 %v740, 64
      %v1711 = vpop.permute.xlu0 %1710
      %1712 = vrot.lane.b32.xlu0 %v741, 64
      %v1713 = vpop.permute.xlu0 %1712
      %1714 = vrot.lane.b32.xlu0 %v742, 64
      %v1715 = vpop.permute.xlu0 %1714
      %1716 = vrot.lane.b32.xlu0 %v743, 64
      %v1717 = vpop.permute.xlu0 %1716
      %1718 = vrot.lane.b32.xlu0 %v744, 64
      %v1719 = vpop.permute.xlu0 %1718
      %1720 = vrot.lane.b32.xlu0 %v745, 64
      %v1721 = vpop.permute.xlu0 %1720
      %1722 = vrot.lane.b32.xlu0 %v746, 64
      %v1723 = vpop.permute.xlu0 %1722
      %1724 = vrot.lane.b32.xlu0 %v747, 64
      %v1725 = vpop.permute.xlu0 %1724
      %1726 = vrot.lane.b32.xlu0 %v748, 64
      %v1727 = vpop.permute.xlu0 %1726
      %1728 = vrot.lane.b32.xlu0 %v749, 64
      %v1729 = vpop.permute.xlu0 %1728
      %1730 = vrot.lane.b32.xlu0 %v750, 64
      %v1731 = vpop.permute.xlu0 %1730
      %1732 = vrot.lane.b32.xlu0 %v751, 64
      %v1733 = vpop.permute.xlu0 %1732
      %1734 = vrot.lane.b32.xlu0 %v752, 64
      %v1735 = vpop.permute.xlu0 %1734
      %1736 = vrot.lane.b32.xlu0 %v753, 64
      %v1737 = vpop.permute.xlu0 %1736
      %1738 = vrot.lane.b32.xlu0 %v754, 64
      %v1739 = vpop.permute.xlu0 %1738
      %1740 = vrot.lane.b32.xlu0 %v755, 64
      %v1741 = vpop.permute.xlu0 %1740
      %1742 = vrot.lane.b32.xlu0 %v756, 64
      %v1743 = vpop.permute.xlu0 %1742
      %1744 = vrot.lane.b32.xlu0 %v757, 64
      %v1745 = vpop.permute.xlu0 %1744
      %1746 = vrot.lane.b32.xlu0 %v758, 64
      %v1747 = vpop.permute.xlu0 %1746
      %1748 = vrot.lane.b32.xlu0 %v759, 64
      %v1749 = vpop.permute.xlu0 %1748
      %1750 = vrot.lane.b32.xlu0 %v760, 64
      %v1751 = vpop.permute.xlu0 %1750
      %1752 = vrot.lane.b32.xlu0 %v761, 64
      %v1753 = vpop.permute.xlu0 %1752
      %v1786 = vsel %vm395, %v473, %v795
      %v1787 = vsel %vm395, %v474, %v797
      %v1788 = vsel %vm395, %v475, %v799
      %v1789 = vsel %vm395, %v476, %v801
      %v1790 = vsel %vm395, %v477, %v803
      %v1791 = vsel %vm395, %v478, %v805
      %v1792 = vsel %vm395, %v479, %v807
      %v1793 = vsel %vm395, %v480, %v809
      %v1794 = vsel %vm395, %v481, %v811
      %v1795 = vsel %vm395, %v482, %v813
      %v1796 = vsel %vm395, %v483, %v815
      %v1797 = vsel %vm395, %v484, %v817
      %v1798 = vsel %vm395, %v485, %v819
      %v1799 = vsel %vm395, %v486, %v821
      %v1800 = vsel %vm395, %v487, %v823
      %v1801 = vsel %vm395, %v488, %v825
      %v1802 = vsel %vm395, %v489, %v827
      %v1803 = vsel %vm395, %v490, %v829
      %v1804 = vsel %vm395, %v491, %v831
      %v1805 = vsel %vm395, %v492, %v833
      %v1806 = vsel %vm395, %v493, %v835
      %v1807 = vsel %vm395, %v494, %v837
      %v1808 = vsel %vm395, %v495, %v839
      %v1809 = vsel %vm395, %v496, %v841
      %v1810 = vsel %vm395, %v497, %v843
      %v1811 = vsel %vm395, %v498, %v845
      %v1812 = vsel %vm395, %v499, %v847
      %v1813 = vsel %vm395, %v500, %v849
      %v1814 = vsel %vm395, %v501, %v851
      %v1815 = vsel %vm395, %v502, %v853
      %v1816 = vsel %vm395, %v503, %v855
      %v1817 = vsel %vm395, %v504, %v857
      %vm1818 = vcmask 130048
      %v1819 = vsel %vm1818, %v1786, %v923
      %v1820 = vsel %vm1818, %v1787, %v925
      %v1821 = vsel %vm1818, %v1788, %v927
      %v1822 = vsel %vm1818, %v1789, %v929
      %v1823 = vsel %vm1818, %v1790, %v931
      %v1824 = vsel %vm1818, %v1791, %v933
      %v1825 = vsel %vm1818, %v1792, %v935
      %v1826 = vsel %vm1818, %v1793, %v937
      %v1827 = vsel %vm1818, %v1794, %v939
      %v1828 = vsel %vm1818, %v1795, %v941
      %v1829 = vsel %vm1818, %v1796, %v943
      %v1830 = vsel %vm1818, %v1797, %v945
      %v1831 = vsel %vm1818, %v1798, %v947
      %v1832 = vsel %vm1818, %v1799, %v949
      %v1833 = vsel %vm1818, %v1800, %v951
      %v1834 = vsel %vm1818, %v1801, %v953
      %v1835 = vsel %vm1818, %v1802, %v955
      %v1836 = vsel %vm1818, %v1803, %v957
      %v1837 = vsel %vm1818, %v1804, %v959
      %v1838 = vsel %vm1818, %v1805, %v961
      %v1839 = vsel %vm1818, %v1806, %v963
      %v1840 = vsel %vm1818, %v1807, %v965
      %v1841 = vsel %vm1818, %v1808, %v967
      %v1842 = vsel %vm1818, %v1809, %v969
      %v1843 = vsel %vm1818, %v1810, %v971
      %v1844 = vsel %vm1818, %v1811, %v973
      %v1845 = vsel %vm1818, %v1812, %v975
      %v1846 = vsel %vm1818, %v1813, %v977
      %v1847 = vsel %vm1818, %v1814, %v979
      %v1848 = vsel %vm1818, %v1815, %v981
      %v1849 = vsel %vm1818, %v1816, %v983
      %v1850 = vsel %vm1818, %v1817, %v985
      %vm1851 = vcmask 195584
      %v1852 = vsel %vm1851, %v1819, %v1051
      %v1853 = vsel %vm1851, %v1820, %v1053
      %v1854 = vsel %vm1851, %v1821, %v1055
      %v1855 = vsel %vm1851, %v1822, %v1057
      %v1856 = vsel %vm1851, %v1823, %v1059
      %v1857 = vsel %vm1851, %v1824, %v1061
      %v1858 = vsel %vm1851, %v1825, %v1063
      %v1859 = vsel %vm1851, %v1826, %v1065
      %v1860 = vsel %vm1851, %v1827, %v1067
      %v1861 = vsel %vm1851, %v1828, %v1069
      %v1862 = vsel %vm1851, %v1829, %v1071
      %v1863 = vsel %vm1851, %v1830, %v1073
      %v1864 = vsel %vm1851, %v1831, %v1075
      %v1865 = vsel %vm1851, %v1832, %v1077
      %v1866 = vsel %vm1851, %v1833, %v1079
      %v1867 = vsel %vm1851, %v1834, %v1081
      %v1868 = vsel %vm1851, %v1835, %v1083
      %v1869 = vsel %vm1851, %v1836, %v1085
      %v1870 = vsel %vm1851, %v1837, %v1087
      %v1871 = vsel %vm1851, %v1838, %v1089
      %v1872 = vsel %vm1851, %v1839, %v1091
      %v1873 = vsel %vm1851, %v1840, %v1093
      %v1874 = vsel %vm1851, %v1841, %v1095
      %v1875 = vsel %vm1851, %v1842, %v1097
      %v1876 = vsel %vm1851, %v1843, %v1099
      %v1877 = vsel %vm1851, %v1844, %v1101
      %v1878 = vsel %vm1851, %v1845, %v1103
      %v1879 = vsel %vm1851, %v1846, %v1105
      %v1880 = vsel %vm1851, %v1847, %v1107
      %v1881 = vsel %vm1851, %v1848, %v1109
      %v1882 = vsel %vm1851, %v1849, %v1111
      %v1883 = vsel %vm1851, %v1850, %v1113
      %vm1884 = vcmask 261120
      %v1885 = vsel %vm1884, %v1852, %v1179
      %v1886 = vsel %vm1884, %v1853, %v1181
      %v1887 = vsel %vm1884, %v1854, %v1183
      %v1888 = vsel %vm1884, %v1855, %v1185
      %v1889 = vsel %vm1884, %v1856, %v1187
      %v1890 = vsel %vm1884, %v1857, %v1189
      %v1891 = vsel %vm1884, %v1858, %v1191
      %v1892 = vsel %vm1884, %v1859, %v1193
      %v1893 = vsel %vm1884, %v1860, %v1195
      %v1894 = vsel %vm1884, %v1861, %v1197
      %v1895 = vsel %vm1884, %v1862, %v1199
      %v1896 = vsel %vm1884, %v1863, %v1201
      %v1897 = vsel %vm1884, %v1864, %v1203
      %v1898 = vsel %vm1884, %v1865, %v1205
      %v1899 = vsel %vm1884, %v1866, %v1207
      %v1900 = vsel %vm1884, %v1867, %v1209
      %v1901 = vsel %vm1884, %v1868, %v1211
      %v1902 = vsel %vm1884, %v1869, %v1213
      %v1903 = vsel %vm1884, %v1870, %v1215
      %v1904 = vsel %vm1884, %v1871, %v1217
      %v1905 = vsel %vm1884, %v1872, %v1219
      %v1906 = vsel %vm1884, %v1873, %v1221
      %v1907 = vsel %vm1884, %v1874, %v1223
      %v1908 = vsel %vm1884, %v1875, %v1225
      %v1909 = vsel %vm1884, %v1876, %v1227
      %v1910 = vsel %vm1884, %v1877, %v1229
      %v1911 = vsel %vm1884, %v1878, %v1231
      %v1912 = vsel %vm1884, %v1879, %v1233
      %v1913 = vsel %vm1884, %v1880, %v1235
      %v1914 = vsel %vm1884, %v1881, %v1237
      %v1915 = vsel %vm1884, %v1882, %v1239
      %v1916 = vsel %vm1884, %v1883, %v1241
      %vm1917 = vcmask 326656
      %v1918 = vsel %vm1917, %v1885, %v1307
      %v1919 = vsel %vm1917, %v1886, %v1309
      %v1920 = vsel %vm1917, %v1887, %v1311
      %v1921 = vsel %vm1917, %v1888, %v1313
      %v1922 = vsel %vm1917, %v1889, %v1315
      %v1923 = vsel %vm1917, %v1890, %v1317
      %v1924 = vsel %vm1917, %v1891, %v1319
      %v1925 = vsel %vm1917, %v1892, %v1321
      %v1926 = vsel %vm1917, %v1893, %v1323
      %v1927 = vsel %vm1917, %v1894, %v1325
      %v1928 = vsel %vm1917, %v1895, %v1327
      %v1929 = vsel %vm1917, %v1896, %v1329
      %v1930 = vsel %vm1917, %v1897, %v1331
      %v1931 = vsel %vm1917, %v1898, %v1333
      %v1932 = vsel %vm1917, %v1899, %v1335
      %v1933 = vsel %vm1917, %v1900, %v1337
      %v1934 = vsel %vm1917, %v1901, %v1339
      %v1935 = vsel %vm1917, %v1902, %v1341
      %v1936 = vsel %vm1917, %v1903, %v1343
      %v1937 = vsel %vm1917, %v1904, %v1345
      %v1938 = vsel %vm1917, %v1905, %v1347
      %v1939 = vsel %vm1917, %v1906, %v1349
      %v1940 = vsel %vm1917, %v1907, %v1351
      %v1941 = vsel %vm1917, %v1908, %v1353
      %v1942 = vsel %vm1917, %v1909, %v1355
      %v1943 = vsel %vm1917, %v1910, %v1357
      %v1944 = vsel %vm1917, %v1911, %v1359
      %v1945 = vsel %vm1917, %v1912, %v1361
      %v1946 = vsel %vm1917, %v1913, %v1363
      %v1947 = vsel %vm1917, %v1914, %v1365
      %v1948 = vsel %vm1917, %v1915, %v1367
      %v1949 = vsel %vm1917, %v1916, %v1369
      %vm1950 = vcmask 392192
      %v1951 = vsel %vm1950, %v1918, %v1435
      %v1952 = vsel %vm1950, %v1919, %v1437
      %v1953 = vsel %vm1950, %v1920, %v1439
      %v1954 = vsel %vm1950, %v1921, %v1441
      %v1955 = vsel %vm1950, %v1922, %v1443
      %v1956 = vsel %vm1950, %v1923, %v1445
      %v1957 = vsel %vm1950, %v1924, %v1447
      %v1958 = vsel %vm1950, %v1925, %v1449
      %v1959 = vsel %vm1950, %v1926, %v1451
      %v1960 = vsel %vm1950, %v1927, %v1453
      %v1961 = vsel %vm1950, %v1928, %v1455
      %v1962 = vsel %vm1950, %v1929, %v1457
      %v1963 = vsel %vm1950, %v1930, %v1459
      %v1964 = vsel %vm1950, %v1931, %v1461
      %v1965 = vsel %vm1950, %v1932, %v1463
      %v1966 = vsel %vm1950, %v1933, %v1465
      %v1967 = vsel %vm1950, %v1934, %v1467
      %v1968 = vsel %vm1950, %v1935, %v1469
      %v1969 = vsel %vm1950, %v1936, %v1471
      %v1970 = vsel %vm1950, %v1937, %v1473
      %v1971 = vsel %vm1950, %v1938, %v1475
      %v1972 = vsel %vm1950, %v1939, %v1477
      %v1973 = vsel %vm1950, %v1940, %v1479
      %v1974 = vsel %vm1950, %v1941, %v1481
      %v1975 = vsel %vm1950, %v1942, %v1483
      %v1976 = vsel %vm1950, %v1943, %v1485
      %v1977 = vsel %vm1950, %v1944, %v1487
      %v1978 = vsel %vm1950, %v1945, %v1489
      %v1979 = vsel %vm1950, %v1946, %v1491
      %v1980 = vsel %vm1950, %v1947, %v1493
      %v1981 = vsel %vm1950, %v1948, %v1495
      %v1982 = vsel %vm1950, %v1949, %v1497
      %vm1983 = vcmask 457728
      %v1984 = vsel %vm1983, %v1951, %v1563
      %v1985 = vsel %vm1983, %v1952, %v1565
      %v1986 = vsel %vm1983, %v1953, %v1567
      %v1987 = vsel %vm1983, %v1954, %v1569
      %v1988 = vsel %vm1983, %v1955, %v1571
      %v1989 = vsel %vm1983, %v1956, %v1573
      %v1990 = vsel %vm1983, %v1957, %v1575
      %v1991 = vsel %vm1983, %v1958, %v1577
      %v1992 = vsel %vm1983, %v1959, %v1579
      %v1993 = vsel %vm1983, %v1960, %v1581
      %v1994 = vsel %vm1983, %v1961, %v1583
      %v1995 = vsel %vm1983, %v1962, %v1585
      %v1996 = vsel %vm1983, %v1963, %v1587
      %v1997 = vsel %vm1983, %v1964, %v1589
      %v1998 = vsel %vm1983, %v1965, %v1591
      %v1999 = vsel %vm1983, %v1966, %v1593
      %v2000 = vsel %vm1983, %v1967, %v1595
      %v2001 = vsel %vm1983, %v1968, %v1597
      %v2002 = vsel %vm1983, %v1969, %v1599
      %v2003 = vsel %vm1983, %v1970, %v1601
      %v2004 = vsel %vm1983, %v1971, %v1603
      %v2005 = vsel %vm1983, %v1972, %v1605
      %v2006 = vsel %vm1983, %v1973, %v1607
      %v2007 = vsel %vm1983, %v1974, %v1609
      %v2008 = vsel %vm1983, %v1975, %v1611
      %v2009 = vsel %vm1983, %v1976, %v1613
      %v2010 = vsel %vm1983, %v1977, %v1615
      %v2011 = vsel %vm1983, %v1978, %v1617
      %v2012 = vsel %vm1983, %v1979, %v1619
      %v2013 = vsel %vm1983, %v1980, %v1621
      %v2014 = vsel %vm1983, %v1981, %v1623
      %v2015 = vsel %vm1983, %v1982, %v1625
      %vm2016 = vcmask 523264
      %v2017 = vsel %vm2016, %v1984, %v1691
      %v2018 = vsel %vm2016, %v1985, %v1693
      %v2019 = vsel %vm2016, %v1986, %v1695
      %v2020 = vsel %vm2016, %v1987, %v1697
      %v2021 = vsel %vm2016, %v1988, %v1699
      %v2022 = vsel %vm2016, %v1989, %v1701
      %v2023 = vsel %vm2016, %v1990, %v1703
      %v2024 = vsel %vm2016, %v1991, %v1705
      %v2025 = vsel %vm2016, %v1992, %v1707
      %v2026 = vsel %vm2016, %v1993, %v1709
      %v2027 = vsel %vm2016, %v1994, %v1711
      %v2028 = vsel %vm2016, %v1995, %v1713
      %v2029 = vsel %vm2016, %v1996, %v1715
      %v2030 = vsel %vm2016, %v1997, %v1717
      %v2031 = vsel %vm2016, %v1998, %v1719
      %v2032 = vsel %vm2016, %v1999, %v1721
      %v2033 = vsel %vm2016, %v2000, %v1723
      %v2034 = vsel %vm2016, %v2001, %v1725
      %v2035 = vsel %vm2016, %v2002, %v1727
      %v2036 = vsel %vm2016, %v2003, %v1729
      %v2037 = vsel %vm2016, %v2004, %v1731
      %v2038 = vsel %vm2016, %v2005, %v1733
      %v2039 = vsel %vm2016, %v2006, %v1735
      %v2040 = vsel %vm2016, %v2007, %v1737
      %v2041 = vsel %vm2016, %v2008, %v1739
      %v2042 = vsel %vm2016, %v2009, %v1741
      %v2043 = vsel %vm2016, %v2010, %v1743
      %v2044 = vsel %vm2016, %v2011, %v1745
      %v2045 = vsel %vm2016, %v2012, %v1747
      %v2046 = vsel %vm2016, %v2013, %v1749
      %v2047 = vsel %vm2016, %v2014, %v1751
      %v2048 = vsel %vm2016, %v2015, %v1753
      %v2049 = vpack.c.bf16 %v2018, %v2017
      %v2050 = vpack.c.bf16 %v2020, %v2019
      %v2051 = vpack.c.bf16 %v2022, %v2021
      %v2052 = vpack.c.bf16 %v2024, %v2023
      %v2053 = vpack.c.bf16 %v2026, %v2025
      %v2054 = vpack.c.bf16 %v2028, %v2027
      %v2055 = vpack.c.bf16 %v2030, %v2029
      %v2056 = vpack.c.bf16 %v2032, %v2031
      %v2057 = vpack.c.bf16 %v2034, %v2033
      %v2058 = vpack.c.bf16 %v2036, %v2035
      %v2059 = vpack.c.bf16 %v2038, %v2037
      %v2060 = vpack.c.bf16 %v2040, %v2039
      %v2061 = vpack.c.bf16 %v2042, %v2041
      %v2062 = vpack.c.bf16 %v2044, %v2043
      %v2063 = vpack.c.bf16 %v2046, %v2045
      %v2064 = vpack.c.bf16 %v2048, %v2047
      %v2065 = vld [vmem:[%s3] sm:$0xf]
      %v2066 = vld [vmem:[%s3 + $0x4] sm:$0xf]
      %v2067 = vld [vmem:[%s3 + $0x8] sm:$0xf]
      %v2068 = vld [vmem:[%s3 + $0xc] sm:$0xf]
      %v2069 = vld [vmem:[%s3 + $0x10] sm:$0xf]
      %v2070 = vld [vmem:[%s3 + $0x14] sm:$0xf]
      %v2071 = vld [vmem:[%s3 + $0x18] sm:$0xf]
      %v2072 = vld [vmem:[%s3 + $0x1c] sm:$0xf]
      %v2073 = vld [vmem:[%s3 + $0x20] sm:$0xf]
      %v2083 = vunpack.c.l.b16 %v2065
      %v2084 = vunpack.c.l.b16 %v2066
      %v2085 = vunpack.c.l.b16 %v2067
      %v2086 = vunpack.c.l.b16 %v2068
      %v2087 = vunpack.c.l.b16 %v2069
      %v2088 = vunpack.c.l.b16 %v2070
      %v2089 = vunpack.c.l.b16 %v2071
      %v2090 = vunpack.c.l.b16 %v2072
      %v2091 = vunpack.c.l.b16 %v2073
      %v2092 = vpack.c.b16 %v2084, %v2083
      %v2093 = vpack.c.b16 %v2086, %v2085
      %v2094 = vpack.c.b16 %v2088, %v2087
      %v2095 = vpack.c.b16 %v2090, %v2089
      %v2096 = vpack.c.b16 %v2091, %v2091
      %vm2101 = vcmask 588800
      %v2103 = vsel %vm2101, %v2049, 0
      %v2106 = vsel %vm2101, %v2050, 0
      %v2109 = vsel %vm2101, %v2051, 0
      %v2112 = vsel %vm2101, %v2052, 0
      %v2115 = vsel %vm2101, %v2053, 0
      %v2118 = vsel %vm2101, %v2054, 0
      %v2121 = vsel %vm2101, %v2055, 0
      %v2124 = vsel %vm2101, %v2056, 0
      %v2127 = vsel %vm2101, %v2057, 0
      %v2130 = vsel %vm2101, %v2058, 0
      %v2133 = vsel %vm2101, %v2059, 0
      %v2136 = vsel %vm2101, %v2060, 0
      %v2139 = vsel %vm2101, %v2061, 0
      %v2142 = vsel %vm2101, %v2062, 0
      %v2145 = vsel %vm2101, %v2063, 0
      %v2148 = vsel %vm2101, %v2064, 0
      %vm2150 = vcmask 1043456
      %v2152 = vsel %vm2150, %v2096, 0
      %2154 = vmatprep.subr.bf16.mxu0 0
      %2155 = vmatpush1.bf16.msra.mxu0 0
      %2156 = vmatprep.subr.bf16.mxu0 0
      %2157 = vmatpush1.bf16.msra.mxu0 0
      %2158 = vmatprep.subr.bf16.mxu0 0
      %2159 = vmatpush1.bf16.msra.mxu0 0
      %2160 = vmatprep.subr.bf16.mxu0 0
      %2161 = vmatpush1.bf16.msra.mxu0 %v2152
      %2162 = vmatprep.subr.bf16.mxu0 0
      %2163 = vmatpush1.bf16.msra.mxu0 %v2095
      %2164 = vmatprep.subr.bf16.mxu0 0
      %2165 = vmatpush1.bf16.msra.mxu0 %v2094
      %2166 = vmatprep.subr.bf16.mxu0 0
      %2167 = vmatpush1.bf16.msra.mxu0 %v2093
      %2168 = vmatprep.subr.bf16.mxu0 0
      %2169 = vmatpush1.bf16.msra.mxu0 %v2092
      %2170 = vmatprep.subr.bf16.mxu0 0
      %2171 = vmatpush2.bf16.msra.mxu0 0
      %2172 = vmatprep.subr.bf16.mxu0 0
      %2173 = vmatpush2.bf16.msra.mxu0 0
      %2174 = vmatprep.subr.bf16.mxu0 0
      %2175 = vmatpush2.bf16.msra.mxu0 0
      %2176 = vmatprep.subr.bf16.mxu0 0
      %2177 = vmatpush2.bf16.msra.mxu0 0
      %2178 = vmatprep.subr.bf16.mxu0 0
      %2179 = vmatpush2.bf16.msra.mxu0 0
      %2180 = vmatprep.subr.bf16.mxu0 0
      %2181 = vmatpush2.bf16.msra.mxu0 0
      %2182 = vmatprep.subr.bf16.mxu0 0
      %2183 = vmatpush2.bf16.msra.mxu0 0
      %2184 = vmatprep.subr.bf16.mxu0 0
      %2185 = vmatpush2.bf16.msra.mxu0 0
      %2186 = vmatprep.mubr.bf16.mxu0 0
      %2187 = vmatmul.mubr.bf16.gmra.mxu0 %v2103
      %v2188 = vpop.f32.mrf.mxu0
      %v2189 = vadd.f32 0.0, %v2188
      %v2190 = vpop.f32.mrf.mxu0
      %v2191 = vpop.f32.mrf.mxu0
      %v2192 = vadd.f32 0.0, %v2191
      %v2193 = vpop.f32.mrf.mxu0
      %2194 = vmatprep.mubr.bf16.mxu0 0
      %2195 = vmatmul.mubr.bf16.gmra.mxu0 %v2106
      %v2196 = vpop.f32.mrf.mxu0
      %v2197 = vadd.f32 0.0, %v2196
      %v2198 = vpop.f32.mrf.mxu0
      %v2199 = vpop.f32.mrf.mxu0
      %v2200 = vadd.f32 0.0, %v2199
      %v2201 = vpop.f32.mrf.mxu0
      %2202 = vmatprep.mubr.bf16.mxu0 0
      %2203 = vmatmul.mubr.bf16.gmra.mxu0 %v2109
      %v2204 = vpop.f32.mrf.mxu0
      %v2205 = vadd.f32 0.0, %v2204
      %v2206 = vpop.f32.mrf.mxu0
      %v2207 = vpop.f32.mrf.mxu0
      %v2208 = vadd.f32 0.0, %v2207
      %v2209 = vpop.f32.mrf.mxu0
      %2210 = vmatprep.mubr.bf16.mxu0 0
      %2211 = vmatmul.mubr.bf16.gmra.mxu0 %v2112
      %v2212 = vpop.f32.mrf.mxu0
      %v2213 = vadd.f32 0.0, %v2212
      %v2214 = vpop.f32.mrf.mxu0
      %v2215 = vpop.f32.mrf.mxu0
      %v2216 = vadd.f32 0.0, %v2215
      %v2217 = vpop.f32.mrf.mxu0
      %2218 = vmatprep.mubr.bf16.mxu0 0
      %2219 = vmatmul.mubr.bf16.gmra.mxu0 %v2115
      %v2220 = vpop.f32.mrf.mxu0
      %v2221 = vadd.f32 0.0, %v2220
      %v2222 = vpop.f32.mrf.mxu0
      %v2223 = vpop.f32.mrf.mxu0
      %v2224 = vadd.f32 0.0, %v2223
      %v2225 = vpop.f32.mrf.mxu0
      %2226 = vmatprep.mubr.bf16.mxu0 0
      %2227 = vmatmul.mubr.bf16.gmra.mxu0 %v2118
      %v2228 = vpop.f32.mrf.mxu0
      %v2229 = vadd.f32 0.0, %v2228
      %v2230 = vpop.f32.mrf.mxu0
      %v2231 = vpop.f32.mrf.mxu0
      %v2232 = vadd.f32 0.0, %v2231
      %v2233 = vpop.f32.mrf.mxu0
      %2234 = vmatprep.mubr.bf16.mxu0 0
      %2235 = vmatmul.mubr.bf16.gmra.mxu0 %v2121
      %v2236 = vpop.f32.mrf.mxu0
      %v2237 = vadd.f32 0.0, %v2236
      %v2238 = vpop.f32.mrf.mxu0
      %v2239 = vpop.f32.mrf.mxu0
      %v2240 = vadd.f32 0.0, %v2239
      %v2241 = vpop.f32.mrf.mxu0
      %2242 = vmatprep.mubr.bf16.mxu0 0
      %2243 = vmatmul.mubr.bf16.gmra.mxu0 %v2124
      %v2244 = vpop.f32.mrf.mxu0
      %v2245 = vadd.f32 0.0, %v2244
      %v2246 = vpop.f32.mrf.mxu0
      %v2247 = vpop.f32.mrf.mxu0
      %v2248 = vadd.f32 0.0, %v2247
      %v2249 = vpop.f32.mrf.mxu0
      %2250 = vmatprep.mubr.bf16.mxu0 0
      %2251 = vmatmul.mubr.bf16.gmra.mxu0 %v2127
      %v2252 = vpop.f32.mrf.mxu0
      %v2253 = vadd.f32 0.0, %v2252
      %v2254 = vpop.f32.mrf.mxu0
      %v2255 = vpop.f32.mrf.mxu0
      %v2256 = vadd.f32 0.0, %v2255
      %v2257 = vpop.f32.mrf.mxu0
      %2258 = vmatprep.mubr.bf16.mxu0 0
      %2259 = vmatmul.mubr.bf16.gmra.mxu0 %v2130
      %v2260 = vpop.f32.mrf.mxu0
      %v2261 = vadd.f32 0.0, %v2260
      %v2262 = vpop.f32.mrf.mxu0
      %v2263 = vpop.f32.mrf.mxu0
      %v2264 = vadd.f32 0.0, %v2263
      %v2265 = vpop.f32.mrf.mxu0
      %2266 = vmatprep.mubr.bf16.mxu0 0
      %2267 = vmatmul.mubr.bf16.gmra.mxu0 %v2133
      %v2268 = vpop.f32.mrf.mxu0
      %v2269 = vadd.f32 0.0, %v2268
      %v2270 = vpop.f32.mrf.mxu0
      %v2271 = vpop.f32.mrf.mxu0
      %v2272 = vadd.f32 0.0, %v2271
      %v2273 = vpop.f32.mrf.mxu0
      %2274 = vmatprep.mubr.bf16.mxu0 0
      %2275 = vmatmul.mubr.bf16.gmra.mxu0 %v2136
      %v2276 = vpop.f32.mrf.mxu0
      %v2277 = vadd.f32 0.0, %v2276
      %v2278 = vpop.f32.mrf.mxu0
      %v2279 = vpop.f32.mrf.mxu0
      %v2280 = vadd.f32 0.0, %v2279
      %v2281 = vpop.f32.mrf.mxu0
      %2282 = vmatprep.mubr.bf16.mxu0 0
      %2283 = vmatmul.mubr.bf16.gmra.mxu0 %v2139
      %v2284 = vpop.f32.mrf.mxu0
      %v2285 = vadd.f32 0.0, %v2284
      %v2286 = vpop.f32.mrf.mxu0
      %v2287 = vpop.f32.mrf.mxu0
      %v2288 = vadd.f32 0.0, %v2287
      %v2289 = vpop.f32.mrf.mxu0
      %2290 = vmatprep.mubr.bf16.mxu0 0
      %2291 = vmatmul.mubr.bf16.gmra.mxu0 %v2142
      %v2292 = vpop.f32.mrf.mxu0
      %v2293 = vadd.f32 0.0, %v2292
      %v2294 = vpop.f32.mrf.mxu0
      %v2295 = vpop.f32.mrf.mxu0
      %v2296 = vadd.f32 0.0, %v2295
      %v2297 = vpop.f32.mrf.mxu0
      %2298 = vmatprep.mubr.bf16.mxu0 0
      %2299 = vmatmul.mubr.bf16.gmra.mxu0 %v2145
      %v2300 = vpop.f32.mrf.mxu0
      %v2301 = vadd.f32 0.0, %v2300
      %v2302 = vpop.f32.mrf.mxu0
      %v2303 = vpop.f32.mrf.mxu0
      %v2304 = vadd.f32 0.0, %v2303
      %v2305 = vpop.f32.mrf.mxu0
      %2306 = vmatprep.mubr.bf16.mxu0 0
      %2307 = vmatmul.mubr.bf16.gmra.mxu0 %v2148
      %v2308 = vpop.f32.mrf.mxu0
      %v2309 = vadd.f32 0.0, %v2308
      %v2310 = vpop.f32.mrf.mxu0
      %v2311 = vpop.f32.mrf.mxu0
      %v2312 = vadd.f32 0.0, %v2311
      %v2313 = vpop.f32.mrf.mxu0
      %2314 = vdwg.mxu0
      %2315 = vst.msk [vmem:[%s231] sm:$0xff] %vm395, %v2189
      %2316 = vst.msk [vmem:[%s231 + $0x8] sm:$0xff] %vm395, %v2192
      %2317 = vst.msk [vmem:[%s231 + $0x10] sm:$0xff] %vm395, %v2197
      %2318 = vst.msk [vmem:[%s231 + $0x18] sm:$0xff] %vm395, %v2200
      %2319 = vst.msk [vmem:[%s231 + $0x20] sm:$0xff] %vm395, %v2205
      %2320 = vst.msk [vmem:[%s231 + $0x28] sm:$0xff] %vm395, %v2208
      %2321 = vst.msk [vmem:[%s231 + $0x30] sm:$0xff] %vm395, %v2213
      %2322 = vst.msk [vmem:[%s231 + $0x38] sm:$0xff] %vm395, %v2216
      %2323 = vst.msk [vmem:[%s231 + $0x40] sm:$0xff] %vm395, %v2221
      %2324 = vst.msk [vmem:[%s231 + $0x48] sm:$0xff] %vm395, %v2224
      %2325 = vst.msk [vmem:[%s231 + $0x50] sm:$0xff] %vm395, %v2229
      %2326 = vst.msk [vmem:[%s231 + $0x58] sm:$0xff] %vm395, %v2232
      %2327 = vst.msk [vmem:[%s231 + $0x60] sm:$0xff] %vm395, %v2237
      %2328 = vst.msk [vmem:[%s231 + $0x68] sm:$0xff] %vm395, %v2240
      %2329 = vst.msk [vmem:[%s231 + $0x70] sm:$0xff] %vm395, %v2245
      %2330 = vst.msk [vmem:[%s231 + $0x78] sm:$0xff] %vm395, %v2248
      %2331 = vst.msk [vmem:[%s231 + $0x80] sm:$0xff] %vm395, %v2253
      %2332 = vst.msk [vmem:[%s231 + $0x88] sm:$0xff] %vm395, %v2256
      %2333 = vst.msk [vmem:[%s231 + $0x90] sm:$0xff] %vm395, %v2261
      %2334 = vst.msk [vmem:[%s231 + $0x98] sm:$0xff] %vm395, %v2264
      %2335 = vst.msk [vmem:[%s231 + $0xa0] sm:$0xff] %vm395, %v2269
      %2336 = vst.msk [vmem:[%s231 + $0xa8] sm:$0xff] %vm395, %v2272
      %2337 = vst.msk [vmem:[%s231 + $0xb0] sm:$0xff] %vm395, %v2277
      %2338 = vst.msk [vmem:[%s231 + $0xb8] sm:$0xff] %vm395, %v2280
      %2339 = vst.msk [vmem:[%s231 + $0xc0] sm:$0xff] %vm395, %v2285
      %2340 = vst.msk [vmem:[%s231 + $0xc8] sm:$0xff] %vm395, %v2288
      %2341 = vst.msk [vmem:[%s231 + $0xd0] sm:$0xff] %vm395, %v2293
      %2342 = vst.msk [vmem:[%s231 + $0xd8] sm:$0xff] %vm395, %v2296
      %2343 = vst.msk [vmem:[%s231 + $0xe0] sm:$0xff] %vm395, %v2301
      %2344 = vst.msk [vmem:[%s231 + $0xe8] sm:$0xff] %vm395, %v2304
      %2345 = vst.msk [vmem:[%s231 + $0xf0] sm:$0xff] %vm395, %v2309
      %2346 = vst.msk [vmem:[%s231 + $0xf8] sm:$0xff] %vm395, %v2312
      %v2347 = vsel %vm395, %v2189, 0.0
      %v2348 = vsel %vm395, %v2192, 0.0
      %v2349 = vadd.f32 %v2347, %v2348
      %v2350 = vsel %vm395, %v2197, 0.0
      %v2351 = vadd.f32 %v2349, %v2350
      %v2352 = vsel %vm395, %v2200, 0.0
      %v2353 = vadd.f32 %v2351, %v2352
      %v2354 = vsel %vm395, %v2205, 0.0
      %v2355 = vadd.f32 %v2353, %v2354
      %v2356 = vsel %vm395, %v2208, 0.0
      %v2357 = vadd.f32 %v2355, %v2356
      %v2358 = vsel %vm395, %v2213, 0.0
      %v2359 = vadd.f32 %v2357, %v2358
      %v2360 = vsel %vm395, %v2216, 0.0
      %v2361 = vadd.f32 %v2359, %v2360
      %v2362 = vsel %vm395, %v2221, 0.0
      %v2363 = vadd.f32 %v2361, %v2362
      %v2364 = vsel %vm395, %v2224, 0.0
      %v2365 = vadd.f32 %v2363, %v2364
      %v2366 = vsel %vm395, %v2229, 0.0
      %v2367 = vadd.f32 %v2365, %v2366
      %v2368 = vsel %vm395, %v2232, 0.0
      %v2369 = vadd.f32 %v2367, %v2368
      %v2370 = vsel %vm395, %v2237, 0.0
      %v2371 = vadd.f32 %v2369, %v2370
      %v2372 = vsel %vm395, %v2240, 0.0
      %v2373 = vadd.f32 %v2371, %v2372
      %v2374 = vsel %vm395, %v2245, 0.0
      %v2375 = vadd.f32 %v2373, %v2374
      %v2376 = vsel %vm395, %v2248, 0.0
      %v2377 = vadd.f32 %v2375, %v2376
      %v2378 = vsel %vm395, %v2253, 0.0
      %v2379 = vadd.f32 %v2377, %v2378
      %v2380 = vsel %vm395, %v2256, 0.0
      %v2381 = vadd.f32 %v2379, %v2380
      %v2382 = vsel %vm395, %v2261, 0.0
      %v2383 = vadd.f32 %v2381, %v2382
      %v2384 = vsel %vm395, %v2264, 0.0
      %v2385 = vadd.f32 %v2383, %v2384
      %v2386 = vsel %vm395, %v2269, 0.0
      %v2387 = vadd.f32 %v2385, %v2386
      %v2388 = vsel %vm395, %v2272, 0.0
      %v2389 = vadd.f32 %v2387, %v2388
      %v2390 = vsel %vm395, %v2277, 0.0
      %v2391 = vadd.f32 %v2389, %v2390
      %v2392 = vsel %vm395, %v2280, 0.0
      %v2393 = vadd.f32 %v2391, %v2392
      %v2394 = vsel %vm395, %v2285, 0.0
      %v2395 = vadd.f32 %v2393, %v2394
      %v2396 = vsel %vm395, %v2288, 0.0
      %v2397 = vadd.f32 %v2395, %v2396
      %v2398 = vsel %vm395, %v2293, 0.0
      %v2399 = vadd.f32 %v2397, %v2398
      %v2400 = vsel %vm395, %v2296, 0.0
      %v2401 = vadd.f32 %v2399, %v2400
      %v2402 = vsel %vm395, %v2301, 0.0
      %v2403 = vadd.f32 %v2401, %v2402
      %v2404 = vsel %vm395, %v2304, 0.0
      %v2405 = vadd.f32 %v2403, %v2404
      %v2406 = vsel %vm395, %v2309, 0.0
      %v2407 = vadd.f32 %v2405, %v2406
      %v2408 = vsel %vm395, %v2312, 0.0
      %v2409 = vadd.f32 %v2407, %v2408
      %v2410 = vrot.slane %v2409, 4
      %v2411 = vadd.f32 %v2409, %v2410
      %v2412 = vrot.slane %v2411, 2
      %v2413 = vadd.f32 %v2411, %v2412
      %v2414 = vrot.slane %v2413, 1
      %v2415 = vadd.f32 %v2413, %v2414
      %v2416 = vmul.f32 %v2189, %v2189
      %v2417 = vmul.f32 %v2192, %v2192
      %v2418 = vmul.f32 %v2197, %v2197
      %v2419 = vmul.f32 %v2200, %v2200
      %v2420 = vmul.f32 %v2205, %v2205
      %v2421 = vmul.f32 %v2208, %v2208
      %v2422 = vmul.f32 %v2213, %v2213
      %v2423 = vmul.f32 %v2216, %v2216
      %v2424 = vmul.f32 %v2221, %v2221
      %v2425 = vmul.f32 %v2224, %v2224
      %v2426 = vmul.f32 %v2229, %v2229
      %v2427 = vmul.f32 %v2232, %v2232
      %v2428 = vmul.f32 %v2237, %v2237
      %v2429 = vmul.f32 %v2240, %v2240
      %v2430 = vmul.f32 %v2245, %v2245
      %v2431 = vmul.f32 %v2248, %v2248
      %v2432 = vmul.f32 %v2253, %v2253
      %v2433 = vmul.f32 %v2256, %v2256
      %v2434 = vmul.f32 %v2261, %v2261
      %v2435 = vmul.f32 %v2264, %v2264
      %v2436 = vmul.f32 %v2269, %v2269
      %v2437 = vmul.f32 %v2272, %v2272
      %v2438 = vmul.f32 %v2277, %v2277
      %v2439 = vmul.f32 %v2280, %v2280
      %v2440 = vmul.f32 %v2285, %v2285
      %v2441 = vmul.f32 %v2288, %v2288
      %v2442 = vmul.f32 %v2293, %v2293
      %v2443 = vmul.f32 %v2296, %v2296
      %v2444 = vmul.f32 %v2301, %v2301
      %v2445 = vmul.f32 %v2304, %v2304
      %v2446 = vmul.f32 %v2309, %v2309
      %v2447 = vmul.f32 %v2312, %v2312
      %v2448 = vsel %vm395, %v2416, 0.0
      %v2449 = vsel %vm395, %v2417, 0.0
      %v2450 = vadd.f32 %v2448, %v2449
      %v2451 = vsel %vm395, %v2418, 0.0
      %v2452 = vadd.f32 %v2450, %v2451
      %v2453 = vsel %vm395, %v2419, 0.0
      %v2454 = vadd.f32 %v2452, %v2453
      %v2455 = vsel %vm395, %v2420, 0.0
      %v2456 = vadd.f32 %v2454, %v2455
      %v2457 = vsel %vm395, %v2421, 0.0
      %v2458 = vadd.f32 %v2456, %v2457
      %v2459 = vsel %vm395, %v2422, 0.0
      %v2460 = vadd.f32 %v2458, %v2459
      %v2461 = vsel %vm395, %v2423, 0.0
      %v2462 = vadd.f32 %v2460, %v2461
      %v2463 = vsel %vm395, %v2424, 0.0
      %v2464 = vadd.f32 %v2462, %v2463
      %v2465 = vsel %vm395, %v2425, 0.0
      %v2466 = vadd.f32 %v2464, %v2465
      %v2467 = vsel %vm395, %v2426, 0.0
      %v2468 = vadd.f32 %v2466, %v2467
      %v2469 = vsel %vm395, %v2427, 0.0
      %v2470 = vadd.f32 %v2468, %v2469
      %v2471 = vsel %vm395, %v2428, 0.0
      %v2472 = vadd.f32 %v2470, %v2471
      %v2473 = vsel %vm395, %v2429, 0.0
      %v2474 = vadd.f32 %v2472, %v2473
      %v2475 = vsel %vm395, %v2430, 0.0
      %v2476 = vadd.f32 %v2474, %v2475
      %v2477 = vsel %vm395, %v2431, 0.0
      %v2478 = vadd.f32 %v2476, %v2477
      %v2479 = vsel %vm395, %v2432, 0.0
      %v2480 = vadd.f32 %v2478, %v2479
      %v2481 = vsel %vm395, %v2433, 0.0
      %v2482 = vadd.f32 %v2480, %v2481
      %v2483 = vsel %vm395, %v2434, 0.0
      %v2484 = vadd.f32 %v2482, %v2483
      %v2485 = vsel %vm395, %v2435, 0.0
      %v2486 = vadd.f32 %v2484, %v2485
      %v2487 = vsel %vm395, %v2436, 0.0
      %v2488 = vadd.f32 %v2486, %v2487
      %v2489 = vsel %vm395, %v2437, 0.0
      %v2490 = vadd.f32 %v2488, %v2489
      %v2491 = vsel %vm395, %v2438, 0.0
      %v2492 = vadd.f32 %v2490, %v2491
      %v2493 = vsel %vm395, %v2439, 0.0
      %v2494 = vadd.f32 %v2492, %v2493
      %v2495 = vsel %vm395, %v2440, 0.0
      %v2496 = vadd.f32 %v2494, %v2495
      %v2497 = vsel %vm395, %v2441, 0.0
      %v2498 = vadd.f32 %v2496, %v2497
      %v2499 = vsel %vm395, %v2442, 0.0
      %v2500 = vadd.f32 %v2498, %v2499
      %v2501 = vsel %vm395, %v2443, 0.0
      %v2502 = vadd.f32 %v2500, %v2501
      %v2503 = vsel %vm395, %v2444, 0.0
      %v2504 = vadd.f32 %v2502, %v2503
      %v2505 = vsel %vm395, %v2445, 0.0
      %v2506 = vadd.f32 %v2504, %v2505
      %v2507 = vsel %vm395, %v2446, 0.0
      %v2508 = vadd.f32 %v2506, %v2507
      %v2509 = vsel %vm395, %v2447, 0.0
      %v2510 = vadd.f32 %v2508, %v2509
      %v2511 = vrot.slane %v2510, 4
      %v2512 = vadd.f32 %v2510, %v2511
      %v2513 = vrot.slane %v2512, 2
      %v2514 = vadd.f32 %v2512, %v2513
      %v2515 = vrot.slane %v2514, 1
      %v2516 = vadd.f32 %v2514, %v2515
      %2517 = vst.msk [vmem:[%s235] sm:$0x1] %vm403, %v2415
      %2518 = vst.msk [vmem:[%s235 + $0x1] sm:$0x1] %vm403, %v2516
      %p2519 = scmp.lt.s32.totalorder %s17, 1
      %s2520 = scalar_select %p2519, %s17, 1
      %s2521 = smul.addr %s2520, 32
      %s2522 = smul.addr %s2521, 8
      %s2523 = scalar_lea.vmem %s4, %s2522
      %p2524 = scmp.lt.s32.totalorder %s17, 1
      %s2525 = scalar_select %p2524, %s17, 1
      %s2526 = smul.addr %s2525, 2
      %s2527 = scalar_lea.vmem %s5, %s2526
      // Predicated region
      $region37: #{basic_block.4} parent=35 // pred_check
        %p2528 = pneg %p124
      $region38: #{basic_block.4} parent=35 // pred_check_branch
        %2530 = sbr.rel (%p2528) target = $region40
      $region39: #{basic_block.4} parent=35 // pred_region
        _
      $region40: #{basic_block.4} parent=35 // pred_fallthru
        _
      // Predicated region
      $region41: #{basic_block.4} parent=35 // pred_check
        %p2531 = pneg %p150
      $region42: #{basic_block.4} parent=35 // pred_check_branch
        %2533 = sbr.rel (%p2531) target = $region44
      $region43: #{basic_block.4} parent=35 // pred_region
        _
      $region44: #{basic_block.4} parent=35 // pred_fallthru
        _
    $region36: #{basic_block.4} parent=5 // pred_fallthru
      _
    %p2534 = scmp.le.s32.totalorder 2, %s12
    // Predicated region
    $region45: #{basic_block.4} parent=5 // pred_check
      %p2535 = pneg %p2534
    $region46: #{basic_block.4} parent=5 // pred_check_branch
      %2537 = sbr.rel (%p2535) target = $region48
    $region47: #{basic_block.4} parent=5 // pred_region
      %s2538 = ssub.s32 %s12, 2
      // Predicated region
      $region49: #{basic_block.4} parent=47 // pred_check
        %p2539 = pneg %p130
      $region50: #{basic_block.4} parent=47 // pred_check_branch
        %2541 = sbr.rel (%p2539) target = $region52
      $region51: #{basic_block.4} parent=47 // pred_region
        %p2542 = scmp.lt.s32.totalorder %s18, 1
        %s2543 = scalar_select %p2542, %s18, 1
        %s2544 = smul.addr %s2543, 32
        %s2545 = smul.addr %s2544, 8
        %s2546 = scalar_lea.vmem %s4, %s2545
      $region52: #{basic_block.4} parent=47 // pred_fallthru
        _
      // Predicated region
      $region53: #{basic_block.4} parent=47 // pred_check
        %p2547 = pneg %p156
      $region54: #{basic_block.4} parent=47 // pred_check_branch
        %2549 = sbr.rel (%p2547) target = $region56
      $region55: #{basic_block.4} parent=47 // pred_region
        %p2550 = scmp.lt.s32.totalorder %s18, 1
        %s2551 = scalar_select %p2550, %s18, 1
        %s2552 = smul.addr %s2551, 2
        %s2553 = scalar_lea.vmem %s5, %s2552
      $region56: #{basic_block.4} parent=47 // pred_fallthru
        _
    $region48: #{basic_block.4} parent=5 // pred_fallthru
      _
  $region6: #{basic_block.4} parent=0 // loop_footer
    %s16 = sadd.s32 1, %s12
  $region7: #{basic_block.4} parent=0 // loop_footer_branch
    %11 = sbr.rel target = $region3
  $region8: #{basic_block.4} parent=0 // loop_exit
    _

// kernel: basic_block.3
$region0: #{basic_block.3}
  #allocation0 [shape = 'u32[]', space=smem, size = 0x4, offset = 0x4, fixed_abs, tag = 'smem constant byte address 0x4 - core index']
  #allocation1 [shape = 'u32[144,128]{1,0:T(1,128)}', space=vmem, size = 0x12000, scoped, tag = 'internal scratch']
  #allocation2 [shape = 'f32[1,18,18,4]{3,2,1,0:T(8,128)}', space=vmem, size = 0x36000, scoped, tag = 'scratch operand']
  %s0 = inlined_call_operand.vmem [shape: f32[2,16,16,4], index: 0, kind: input, shape index: {}]
  %s1 = inlined_call_operand.vmem [shape: bf16[36,16], index: 1, kind: input, shape index: {}]
  %s2 = inlined_call_operand.vmem [shape: f32[2,16,16,8], index: 2, kind: output, shape index: {0}]
  %s3 = inlined_call_operand.vmem [shape: f32[2,16,16,8], index: 3, kind: output, shape index: {1}]
  %s4 = inlined_call_operand.vmem [shape: f32[2,2,8], index: 4, kind: output, shape index: {2}]
  %s5 = inlined_call_operand.vmem [shape: f32[2,2,8], index: 5, kind: output, shape index: {3}]
  %6 = xla_tuple %s2, %s3, %s4, %s5
  %s7 = sld [smem:[#allocation0]]
  $region65: #{basic_block.3} parent=0
    _
  %s9 = ssub.s32 1, %s7
  %s10 = scalar_select 0, %s9, %s7
  loop: start=0, step=1, limit=4
  $region2: #{basic_block.3} parent=0 // loop_pre_header
    _
  $region3: #{basic_block.3} parent=0 // loop_header
    %s12 = sphi 0, %s16
    %p13 = scmp.ge.s32.totalorder %s12, 4
    %s22 = sphi 0, %s24
    %s25 = sphi 0, %s22
    %s26 = sphi 0, %s25
    %s42 = sphi 0, %s26
    %s46 = sphi 0, %s46
    %s48 = sphi 0, %s46
    %s49 = sphi 0, %s48
    %s63 = sphi 0, %s49
    %s69 = sphi 0, %s71
    %s72 = sphi 0, %s69
    %s73 = sphi 0, %s72
    %s89 = sphi 0, %s73
    %s95 = sphi 0, %s97
    %s98 = sphi 0, %s95
    %s99 = sphi 0, %s98
    %s115 = sphi 0, %s99
    %s121 = sphi 0, %s123
    %s124 = sphi 0, %s121
    %s125 = sphi 0, %s124
    %s141 = sphi 0, %s125
    %s147 = sphi 0, %s149
    %s150 = sphi 0, %s147
    %s151 = sphi 0, %s150
    %s167 = sphi 0, %s151
  $region4: #{basic_block.3} parent=0 // loop_header_branch
    %15 = sbr.rel (%p13) target = $region8
  $region5: #{basic_block.3} parent=0 // loop_body
    %s17 = ssub.s32 %s12, 1
    %s18 = ssub.s32 %s12, 2
    %s19 = sadd.s32 %s12, 1
    %s20 = ssub.s32 %s12, %s19
    %p21 = scmp.eq.s32.totalorder %s20, 0
    %s23 = sadd.s32 %s22, 1
    %s24 = scalar_select %p21, %s22, %s23
    %p27 = pneg %p21
    %p28 = scmp.eq.s32.totalorder %s12, 1
    %p29 = por %p27, %p28
    %p30 = scmp.ne.s32.totalorder %s22, %s25
    %p31 = scmp.eq.s32.totalorder %s12, 0
    %p32 = por %p30, %p31
    %p33 = scmp.ne.s32.totalorder %s22, %s25
    %p34 = scmp.eq.s32.totalorder %s17, 1
    %p35 = por %p33, %p34
    %p36 = scmp.ne.s32.totalorder %s25, %s26
    %p37 = scmp.eq.s32.totalorder %s17, 0
    %p38 = por %p36, %p37
    %p39 = scmp.ne.s32.totalorder %s25, %s26
    %p40 = scmp.eq.s32.totalorder %s18, 1
    %p41 = por %p39, %p40
    %p43 = scmp.ne.s32.totalorder %s26, %s42
    %p44 = scmp.eq.s32.totalorder %s18, 0
    %p45 = por %p43, %p44
    %s47 = sadd.s32 %s46, 1
    %p50 = scmp.eq.s32.totalorder %s12, 1
    %p51 = scmp.ne.s32.totalorder %s46, %s48
    %p52 = scmp.eq.s32.totalorder %s12, 0
    %p53 = por %p51, %p52
    %p54 = scmp.ne.s32.totalorder %s46, %s48
    %p55 = scmp.eq.s32.totalorder %s17, 1
    %p56 = por %p54, %p55
    %p57 = scmp.ne.s32.totalorder %s48, %s49
    %p58 = scmp.eq.s32.totalorder %s17, 0
    %p59 = por %p57, %p58
    %p60 = scmp.ne.s32.totalorder %s48, %s49
    %p61 = scmp.eq.s32.totalorder %s18, 1
    %p62 = por %p60, %p61
    %p64 = scmp.ne.s32.totalorder %s49, %s63
    %p65 = scmp.eq.s32.totalorder %s18, 0
    %p66 = por %p64, %p65
    %s67 = ssub.s32 %s12, %s19
    %p68 = scmp.eq.s32.totalorder %s67, 0
    %s70 = sadd.s32 %s69, 1
    %s71 = scalar_select %p68, %s69, %s70
    %p74 = pneg %p68
    %p75 = scmp.eq.s32.totalorder %s12, 1
    %p76 = por %p74, %p75
    %p77 = scmp.ne.s32.totalorder %s69, %s72
    %p78 = scmp.eq.s32.totalorder %s12, 0
    %p79 = por %p77, %p78
    %p80 = scmp.ne.s32.totalorder %s69, %s72
    %p81 = scmp.eq.s32.totalorder %s17, 1
    %p82 = por %p80, %p81
    %p83 = scmp.ne.s32.totalorder %s72, %s73
    %p84 = scmp.eq.s32.totalorder %s17, 0
    %p85 = por %p83, %p84
    %p86 = scmp.ne.s32.totalorder %s72, %s73
    %p87 = scmp.eq.s32.totalorder %s18, 1
    %p88 = por %p86, %p87
    %p90 = scmp.ne.s32.totalorder %s73, %s89
    %p91 = scmp.eq.s32.totalorder %s18, 0
    %p92 = por %p90, %p91
    %s93 = ssub.s32 %s12, %s19
    %p94 = scmp.eq.s32.totalorder %s93, 0
    %s96 = sadd.s32 %s95, 1
    %s97 = scalar_select %p94, %s95, %s96
    %p100 = pneg %p94
    %p101 = scmp.eq.s32.totalorder %s12, 1
    %p102 = por %p100, %p101
    %p103 = scmp.ne.s32.totalorder %s95, %s98
    %p104 = scmp.eq.s32.totalorder %s12, 0
    %p105 = por %p103, %p104
    %p106 = scmp.ne.s32.totalorder %s95, %s98
    %p107 = scmp.eq.s32.totalorder %s17, 1
    %p108 = por %p106, %p107
    %p109 = scmp.ne.s32.totalorder %s98, %s99
    %p110 = scmp.eq.s32.totalorder %s17, 0
    %p111 = por %p109, %p110
    %p112 = scmp.ne.s32.totalorder %s98, %s99
    %p113 = scmp.eq.s32.totalorder %s18, 1
    %p114 = por %p112, %p113
    %p116 = scmp.ne.s32.totalorder %s99, %s115
    %p117 = scmp.eq.s32.totalorder %s18, 0
    %p118 = por %p116, %p117
    %s119 = ssub.s32 %s12, %s19
    %p120 = scmp.eq.s32.totalorder %s119, 0
    %s122 = sadd.s32 %s121, 1
    %s123 = scalar_select %p120, %s121, %s122
    %p126 = pneg %p120
    %p127 = scmp.eq.s32.totalorder %s12, 1
    %p128 = por %p126, %p127
    %p129 = scmp.ne.s32.totalorder %s121, %s124
    %p130 = scmp.eq.s32.totalorder %s12, 0
    %p131 = por %p129, %p130
    %p132 = scmp.ne.s32.totalorder %s121, %s124
    %p133 = scmp.eq.s32.totalorder %s17, 1
    %p134 = por %p132, %p133
    %p135 = scmp.ne.s32.totalorder %s124, %s125
    %p136 = scmp.eq.s32.totalorder %s17, 0
    %p137 = por %p135, %p136
    %p138 = scmp.ne.s32.totalorder %s124, %s125
    %p139 = scmp.eq.s32.totalorder %s18, 1
    %p140 = por %p138, %p139
    %p142 = scmp.ne.s32.totalorder %s125, %s141
    %p143 = scmp.eq.s32.totalorder %s18, 0
    %p144 = por %p142, %p143
    %s145 = ssub.s32 %s12, %s19
    %p146 = scmp.eq.s32.totalorder %s145, 0
    %s148 = sadd.s32 %s147, 1
    %s149 = scalar_select %p146, %s147, %s148
    %p152 = pneg %p146
    %p153 = scmp.eq.s32.totalorder %s12, 1
    %p154 = por %p152, %p153
    %p155 = scmp.ne.s32.totalorder %s147, %s150
    %p156 = scmp.eq.s32.totalorder %s12, 0
    %p157 = por %p155, %p156
    %p158 = scmp.ne.s32.totalorder %s147, %s150
    %p159 = scmp.eq.s32.totalorder %s17, 1
    %p160 = por %p158, %p159
    %p161 = scmp.ne.s32.totalorder %s150, %s151
    %p162 = scmp.eq.s32.totalorder %s17, 0
    %p163 = por %p161, %p162
    %p164 = scmp.ne.s32.totalorder %s150, %s151
    %p165 = scmp.eq.s32.totalorder %s18, 1
    %p166 = por %p164, %p165
    %p168 = scmp.ne.s32.totalorder %s151, %s167
    %p169 = scmp.eq.s32.totalorder %s18, 0
    %p170 = por %p168, %p169
    %p171 = scmp.le.s32.totalorder 1, %s12
    %p172 = scmp.lt.s32.totalorder %s12, 3
    %p173 = pnand %p171, %p172
    %p174 = pneg %p173
    // Predicated region
    $region9: #{basic_block.3} parent=5 // pred_check
      _
    $region10: #{basic_block.3} parent=5 // pred_check_branch
      %176 = sbr.rel (%p173) target = $region12
    $region11: #{basic_block.3} parent=5 // pred_region
      %s177 = ssub.s32 %s12, 1
      // Predicated region
      $region13: #{basic_block.3} parent=11 // pred_check
        %p178 = pneg %p59
      $region14: #{basic_block.3} parent=11 // pred_check_branch
        %180 = sbr.rel (%p178) target = $region16
      $region15: #{basic_block.3} parent=11 // pred_region
        _
      $region16: #{basic_block.3} parent=11 // pred_fallthru
        _
    $region12: #{basic_block.3} parent=5 // pred_fallthru
      _
    %p181 = scmp.lt.s32.totalorder %s12, 2
    // Predicated region
    $region17: #{basic_block.3} parent=5 // pred_check
      %p182 = pneg %p181
    $region18: #{basic_block.3} parent=5 // pred_check_branch
      %184 = sbr.rel (%p182) target = $region20
    $region19: #{basic_block.3} parent=5 // pred_region
      // Predicated region
      $region21: #{basic_block.3} parent=19 // pred_check
        %p185 = pneg %p32
      $region22: #{basic_block.3} parent=19 // pred_check_branch
        %187 = sbr.rel (%p185) target = $region24
      $region23: #{basic_block.3} parent=19 // pred_region
        %p188 = scmp.lt.s32.totalorder %s12, 1
        %s189 = scalar_select %p188, %s12, 1
        %s190 = smul.addr %s189, 32
        %s191 = smul.addr %s190, 8
        %s192 = scalar_lea.vmem %s0, %s191
      $region24: #{basic_block.3} parent=19 // pred_fallthru
        _
    $region20: #{basic_block.3} parent=5 // pred_fallthru
      _
    %p193 = scmp.le.s32.totalorder 1, %s12
    %p194 = scmp.lt.s32.totalorder %s12, 3
    %p195 = pnand %p193, %p194
    %p196 = pneg %p195
    // Predicated region
    $region25: #{basic_block.3} parent=5 // pred_check
      _
    $region26: #{basic_block.3} parent=5 // pred_check_branch
      %198 = sbr.rel (%p195) target = $region28
    $region27: #{basic_block.3} parent=5 // pred_region
      %s199 = ssub.s32 %s12, 1
      %p200 = scmp.lt.s32.totalorder %s17, 1
      %s201 = scalar_select %p200, %s17, 1
      %s202 = smul.addr %s201, 32
      %s203 = smul.addr %s202, 8
      %s204 = scalar_lea.vmem %s0, %s203
      %p205 = pneg %p38
      %p206 = pneg %p35
      %p207 = pneg %p59
      %p208 = pneg %p56
      %p209 = pneg %p85
      %p210 = pneg %p82
      %p211 = scmp.lt.s32.totalorder %s17, 1
      %s212 = scalar_select %p211, %s17, 1
      %s213 = smul.addr %s212, 32
      %s214 = smul.addr %s213, 8
      %s215 = scalar_lea.vmem %s2, %s214
      %p216 = pneg %p111
      %p217 = pneg %p108
      %p218 = scmp.lt.s32.totalorder %s17, 1
      %s219 = scalar_select %p218, %s17, 1
      %s220 = smul.addr %s219, 32
      %s221 = smul.addr %s220, 8
      %s222 = scalar_lea.vmem %s3, %s221
      %p223 = pneg %p137
      %p224 = pneg %p134
      %p225 = scmp.lt.s32.totalorder %s17, 1
      %s226 = scalar_select %p225, %s17, 1
      %s227 = smul.addr %s226, 2
      %s228 = scalar_lea.vmem %s4, %s227
      %p229 = pneg %p163
      %p230 = pneg %p160
      %p231 = scmp.lt.s32.totalorder %s17, 1
      %s232 = scalar_select %p231, %s17, 1
      %s233 = smul.addr %s232, 2
      %s234 = scalar_lea.vmem %s5, %s233
      %p235 = scmp.lt.s32.totalorder %s17, 1
      %s236 = scalar_select %p235, %s17, 1
      %s237 = smul.addr %s236, 32
      %s238 = smul.addr %s237, 8
      %s239 = scalar_lea.vmem %s0, %s238
      %p240 = scmp.lt.s32.totalorder %s17, 1
      %s241 = scalar_select %p240, %s17, 1
      %s242 = smul.addr %s241, 32
      %s243 = smul.addr %s242, 8
      %s244 = scalar_lea.vmem %s2, %s243
      %p245 = scmp.lt.s32.totalorder %s17, 1
      %s246 = scalar_select %p245, %s17, 1
      %s247 = smul.addr %s246, 32
      %s248 = smul.addr %s247, 8
      %s249 = scalar_lea.vmem %s3, %s248
      %p250 = scmp.lt.s32.totalorder %s17, 1
      %s251 = scalar_select %p250, %s17, 1
      %s252 = smul.addr %s251, 2
      %s253 = scalar_lea.vmem %s4, %s252
      %p254 = scmp.lt.s32.totalorder %s17, 1
      %s255 = scalar_select %p254, %s17, 1
      %s256 = smul.addr %s255, 2
      %s257 = scalar_lea.vmem %s5, %s256
      %v259 = vld [vmem:[%s239] sm:$0xff]
      %v260 = vld [vmem:[%s239 + $0x8] sm:$0xff]
      %v261 = vld [vmem:[%s239 + $0x10] sm:$0xff]
      %v262 = vld [vmem:[%s239 + $0x18] sm:$0xff]
      %v263 = vld [vmem:[%s239 + $0x20] sm:$0xff]
      %v264 = vld [vmem:[%s239 + $0x28] sm:$0xff]
      %v265 = vld [vmem:[%s239 + $0x30] sm:$0xff]
      %v266 = vld [vmem:[%s239 + $0x38] sm:$0xff]
      %v267 = vld [vmem:[%s239 + $0x40] sm:$0xff]
      %v268 = vld [vmem:[%s239 + $0x48] sm:$0xff]
      %v269 = vld [vmem:[%s239 + $0x50] sm:$0xff]
      %v270 = vld [vmem:[%s239 + $0x58] sm:$0xff]
      %v271 = vld [vmem:[%s239 + $0x60] sm:$0xff]
      %v272 = vld [vmem:[%s239 + $0x68] sm:$0xff]
      %v273 = vld [vmem:[%s239 + $0x70] sm:$0xff]
      %v274 = vld [vmem:[%s239 + $0x78] sm:$0xff]
      %v275 = vld [vmem:[%s239 + $0x80] sm:$0xff]
      %v276 = vld [vmem:[%s239 + $0x88] sm:$0xff]
      %v277 = vld [vmem:[%s239 + $0x90] sm:$0xff]
      %v278 = vld [vmem:[%s239 + $0x98] sm:$0xff]
      %v279 = vld [vmem:[%s239 + $0xa0] sm:$0xff]
      %v280 = vld [vmem:[%s239 + $0xa8] sm:$0xff]
      %v281 = vld [vmem:[%s239 + $0xb0] sm:$0xff]
      %v282 = vld [vmem:[%s239 + $0xb8] sm:$0xff]
      %v283 = vld [vmem:[%s239 + $0xc0] sm:$0xff]
      %v284 = vld [vmem:[%s239 + $0xc8] sm:$0xff]
      %v285 = vld [vmem:[%s239 + $0xd0] sm:$0xff]
      %v286 = vld [vmem:[%s239 + $0xd8] sm:$0xff]
      %v287 = vld [vmem:[%s239 + $0xe0] sm:$0xff]
      %v288 = vld [vmem:[%s239 + $0xe8] sm:$0xff]
      %v289 = vld [vmem:[%s239 + $0xf0] sm:$0xff]
      %v290 = vld [vmem:[%s239 + $0xf8] sm:$0xff]
      %vm291 = vcmask 31744
      %292 = vst.msk [vmem:[#allocation2] sm:$0xff] %vm291, 0.0
      %293 = vst.msk [vmem:[#allocation2 + $0x8] sm:$0xff] %vm291, 0.0
      %vm294 = vcmask 25600
      %295 = vst.msk [vmem:[#allocation2 + $0x10] sm:$0x3] %vm294, 0.0
      %s296 = scalar_lea.vmem [#allocation2], 408
      %297 = vst.msk [vmem:[%s296] sm:$0xff] %vm291, 0.0
      %298 = vst.msk [vmem:[%s296 + $0x8] sm:$0xff] %vm291, 0.0
      %299 = vst.msk [vmem:[%s296 + $0x10] sm:$0x3] %vm294, 0.0
      %vm300 = vcmask 24576
      %301 = vst.msk [vmem:[#allocation2] sm:$0x1] %vm300, 0.0
      %302 = vst.msk [vmem:[#allocation2 + $0x18] sm:$0x1] %vm300, 0.0
      %303 = vst.msk [vmem:[#allocation2 + $0x30] sm:$0x1] %vm300, 0.0
      %304 = vst.msk [vmem:[#allocation2 + $0x48] sm:$0x1] %vm300, 0.0
      %305 = vst.msk [vmem:[#allocation2 + $0x60] sm:$0x1] %vm300, 0.0
      %306 = vst.msk [vmem:[#allocation2 + $0x78] sm:$0x1] %vm300, 0.0
      %307 = vst.msk [vmem:[#allocation2 + $0x90] sm:$0x1] %vm300, 0.0
      %308 = vst.msk [vmem:[#allocation2 + $0xa8] sm:$0x1] %vm300, 0.0
      %309 = vst.msk [vmem:[#allocation2 + $0xc0] sm:$0x1] %vm300, 0.0
      %310 = vst.msk [vmem:[#allocation2 + $0xd8] sm:$0x1] %vm300, 0.0
      %311 = vst.msk [vmem:[#allocation2 + $0xf0] sm:$0x1] %vm300, 0.0
      %312 = vst.msk [vmem:[#allocation2 + $0x108] sm:$0x1] %vm300, 0.0
      %313 = vst.msk [vmem:[#allocation2 + $0x120] sm:$0x1] %vm300, 0.0
      %314 = vst.msk [vmem:[#allocation2 + $0x138] sm:$0x1] %vm300, 0.0
      %315 = vst.msk [vmem:[#allocation2 + $0x150] sm:$0x1] %vm300, 0.0
      %316 = vst.msk [vmem:[#allocation2 + $0x168] sm:$0x1] %vm300, 0.0
      %317 = vst.msk [vmem:[#allocation2 + $0x180] sm:$0x1] %vm300, 0.0
      %318 = vst.msk [vmem:[#allocation2 + $0x198] sm:$0x1] %vm300, 0.0
      %319 = vst.msk [vmem:[#allocation2 + $0x11] sm:$0x1] %vm300, 0.0
      %320 = vst.msk [vmem:[#allocation2 + $0x29] sm:$0x1] %vm300, 0.0
      %321 = vst.msk [vmem:[#allocation2 + $0x41] sm:$0x1] %vm300, 0.0
      %322 = vst.msk [vmem:[#allocation2 + $0x59] sm:$0x1] %vm300, 0.0
      %323 = vst.msk [vmem:[#allocation2 + $0x71] sm:$0x1] %vm300, 0.0
      %324 = vst.msk [vmem:[#allocation2 + $0x89] sm:$0x1] %vm300, 0.0
      %325 = vst.msk [vmem:[#allocation2 + $0xa1] sm:$0x1] %vm300, 0.0
      %326 = vst.msk [vmem:[#allocation2 + $0xb9] sm:$0x1] %vm300, 0.0
      %327 = vst.msk [vmem:[#allocation2 + $0xd1] sm:$0x1] %vm300, 0.0
      %328 = vst.msk [vmem:[#allocation2 + $0xe9] sm:$0x1] %vm300, 0.0
      %329 = vst.msk [vmem:[#allocation2 + $0x101] sm:$0x1] %vm300, 0.0
      %330 = vst.msk [vmem:[#allocation2 + $0x119] sm:$0x1] %vm300, 0.0
      %331 = vst.msk [vmem:[#allocation2 + $0x131] sm:$0x1] %vm300, 0.0
      %332 = vst.msk [vmem:[#allocation2 + $0x149] sm:$0x1] %vm300, 0.0
      %333 = vst.msk [vmem:[#allocation2 + $0x161] sm:$0x1] %vm300, 0.0
      %334 = vst.msk [vmem:[#allocation2 + $0x179] sm:$0x1] %vm300, 0.0
      %335 = vst.msk [vmem:[#allocation2 + $0x191] sm:$0x1] %vm300, 0.0
      %336 = vst.msk [vmem:[#allocation2 + $0x1a9] sm:$0x1] %vm300, 0.0
      %s337 = scalar_lea.vmem [#allocation2], 24
      %338 = vst.msk [vmem:[%s337 + $0x1] sm:$0xff] %vm291, %v259
      %339 = vst.msk [vmem:[%s337 + $0x9] sm:$0xff] %vm291, %v260
      %340 = vst.msk [vmem:[%s337 + $0x19] sm:$0xff] %vm291, %v261
      %341 = vst.msk [vmem:[%s337 + $0x21] sm:$0xff] %vm291, %v262
      %342 = vst.msk [vmem:[%s337 + $0x31] sm:$0xff] %vm291, %v263
      %343 = vst.msk [vmem:[%s337 + $0x39] sm:$0xff] %vm291, %v264
      %344 = vst.msk [vmem:[%s337 + $0x49] sm:$0xff] %vm291, %v265
      %345 = vst.msk [vmem:[%s337 + $0x51] sm:$0xff] %vm291, %v266
      %346 = vst.msk [vmem:[%s337 + $0x61] sm:$0xff] %vm291, %v267
      %347 = vst.msk [vmem:[%s337 + $0x69] sm:$0xff] %vm291, %v268
      %348 = vst.msk [vmem:[%s337 + $0x79] sm:$0xff] %vm291, %v269
      %349 = vst.msk [vmem:[%s337 + $0x81] sm:$0xff] %vm291, %v270
      %350 = vst.msk [vmem:[%s337 + $0x91] sm:$0xff] %vm291, %v271
      %351 = vst.msk [vmem:[%s337 + $0x99] sm:$0xff] %vm291, %v272
      %352 = vst.msk [vmem:[%s337 + $0xa9] sm:$0xff] %vm291, %v273
      %353 = vst.msk [vmem:[%s337 + $0xb1] sm:$0xff] %vm291, %v274
      %354 = vst.msk [vmem:[%s337 + $0xc1] sm:$0xff] %vm291, %v275
      %355 = vst.msk [vmem:[%s337 + $0xc9] sm:$0xff] %vm291, %v276
      %356 = vst.msk [vmem:[%s337 + $0xd9] sm:$0xff] %vm291, %v277
      %357 = vst.msk [vmem:[%s337 + $0xe1] sm:$0xff] %vm291, %v278
      %358 = vst.msk [vmem:[%s337 + $0xf1] sm:$0xff] %vm291, %v279
      %359 = vst.msk [vmem:[%s337 + $0xf9] sm:$0xff] %vm291, %v280
      %360 = vst.msk [vmem:[%s337 + $0x109] sm:$0xff] %vm291, %v281
      %361 = vst.msk [vmem:[%s337 + $0x111] sm:$0xff] %vm291, %v282
      %362 = vst.msk [vmem:[%s337 + $0x121] sm:$0xff] %vm291, %v283
      %363 = vst.msk [vmem:[%s337 + $0x129] sm:$0xff] %vm291, %v284
      %364 = vst.msk [vmem:[%s337 + $0x139] sm:$0xff] %vm291, %v285
      %365 = vst.msk [vmem:[%s337 + $0x141] sm:$0xff] %vm291, %v286
      %366 = vst.msk [vmem:[%s337 + $0x151] sm:$0xff] %vm291, %v287
      %367 = vst.msk [vmem:[%s337 + $0x159] sm:$0xff] %vm291, %v288
      %368 = vst.msk [vmem:[%s337 + $0x169] sm:$0xff] %vm291, %v289
      %369 = vst.msk [vmem:[%s337 + $0x171] sm:$0xff] %vm291, %v290
      %v370 = vld [vmem:[#allocation2] sm:$0xff]
      %v371 = vld [vmem:[#allocation2 + $0x8] sm:$0xff]
      %v372 = vld [vmem:[#allocation2 + $0x18] sm:$0xff]
      %v373 = vld [vmem:[#allocation2 + $0x20] sm:$0xff]
      %v374 = vld [vmem:[#allocation2 + $0x30] sm:$0xff]
      %v375 = vld [vmem:[#allocation2 + $0x38] sm:$0xff]
      %v376 = vld [vmem:[#allocation2 + $0x48] sm:$0xff]
      %v377 = vld [vmem:[#allocation2 + $0x50] sm:$0xff]
      %v378 = vld [vmem:[#allocation2 + $0x60] sm:$0xff]
      %v379 = vld [vmem:[#allocation2 + $0x68] sm:$0xff]
      %v380 = vld [vmem:[#allocation2 + $0x78] sm:$0xff]
      %v381 = vld [vmem:[#allocation2 + $0x80] sm:$0xff]
      %v382 = vld [vmem:[#allocation2 + $0x90] sm:$0xff]
      %v383 = vld [vmem:[#allocation2 + $0x98] sm:$0xff]
      %v384 = vld [vmem:[#allocation2 + $0xa8] sm:$0xff]
      %v385 = vld [vmem:[#allocation2 + $0xb0] sm:$0xff]
      %v386 = vld [vmem:[#allocation2 + $0xc0] sm:$0xff]
      %v387 = vld [vmem:[#allocation2 + $0xc8] sm:$0xff]
      %v388 = vld [vmem:[#allocation2 + $0xd8] sm:$0xff]
      %v389 = vld [vmem:[#allocation2 + $0xe0] sm:$0xff]
      %v390 = vld [vmem:[#allocation2 + $0xf0] sm:$0xff]
      %v391 = vld [vmem:[#allocation2 + $0xf8] sm:$0xff]
      %v392 = vld [vmem:[#allocation2 + $0x108] sm:$0xff]
      %v393 = vld [vmem:[#allocation2 + $0x110] sm:$0xff]
      %v394 = vld [vmem:[#allocation2 + $0x120] sm:$0xff]
      %v395 = vld [vmem:[#allocation2 + $0x128] sm:$0xff]
      %v396 = vld [vmem:[#allocation2 + $0x138] sm:$0xff]
      %v397 = vld [vmem:[#allocation2 + $0x140] sm:$0xff]
      %v398 = vld [vmem:[#allocation2 + $0x150] sm:$0xff]
      %v399 = vld [vmem:[#allocation2 + $0x158] sm:$0xff]
      %v400 = vld [vmem:[#allocation2 + $0x168] sm:$0xff]
      %v401 = vld [vmem:[#allocation2 + $0x170] sm:$0xff]
      %v402 = vld [vmem:[#allocation2 + $0x1] sm:$0xff]
      %v403 = vld [vmem:[#allocation2 + $0x9] sm:$0xff]
      %v404 = vld [vmem:[#allocation2 + $0x19] sm:$0xff]
      %v405 = vld [vmem:[#allocation2 + $0x21] sm:$0xff]
      %v406 = vld [vmem:[#allocation2 + $0x31] sm:$0xff]
      %v407 = vld [vmem:[#allocation2 + $0x39] sm:$0xff]
      %v408 = vld [vmem:[#allocation2 + $0x49] sm:$0xff]
      %v409 = vld [vmem:[#allocation2 + $0x51] sm:$0xff]
      %v410 = vld [vmem:[#allocation2 + $0x61] sm:$0xff]
      %v411 = vld [vmem:[#allocation2 + $0x69] sm:$0xff]
      %v412 = vld [vmem:[#allocation2 + $0x79] sm:$0xff]
      %v413 = vld [vmem:[#allocation2 + $0x81] sm:$0xff]
      %v414 = vld [vmem:[#allocation2 + $0x91] sm:$0xff]
      %v415 = vld [vmem:[#allocation2 + $0x99] sm:$0xff]
      %v416 = vld [vmem:[#allocation2 + $0xa9] sm:$0xff]
      %v417 = vld [vmem:[#allocation2 + $0xb1] sm:$0xff]
      %v418 = vld [vmem:[#allocation2 + $0xc1] sm:$0xff]
      %v419 = vld [vmem:[#allocation2 + $0xc9] sm:$0xff]
      %v420 = vld [vmem:[#allocation2 + $0xd9] sm:$0xff]
      %v421 = vld [vmem:[#allocation2 + $0xe1] sm:$0xff]
      %v422 = vld [vmem:[#allocation2 + $0xf1] sm:$0xff]
      %v423 = vld [vmem:[#allocation2 + $0xf9] sm:$0xff]
      %v424 = vld [vmem:[#allocation2 + $0x109] sm:$0xff]
      %v425 = vld [vmem:[#allocation2 + $0x111] sm:$0xff]
      %v426 = vld [vmem:[#allocation2 + $0x121] sm:$0xff]
      %v427 = vld [vmem:[#allocation2 + $0x129] sm:$0xff]
      %v428 = vld [vmem:[#allocation2 + $0x139] sm:$0xff]
      %v429 = vld [vmem:[#allocation2 + $0x141] sm:$0xff]
      %v430 = vld [vmem:[#allocation2 + $0x151] sm:$0xff]
      %v431 = vld [vmem:[#allocation2 + $0x159] sm:$0xff]
      %v432 = vld [vmem:[#allocation2 + $0x169] sm:$0xff]
      %v433 = vld [vmem:[#allocation2 + $0x171] sm:$0xff]
      %v434 = vld [vmem:[#allocation2 + $0x2] sm:$0xff]
      %v435 = vld [vmem:[#allocation2 + $0xa] sm:$0xff]
      %v436 = vld [vmem:[#allocation2 + $0x1a] sm:$0xff]
      %v437 = vld [vmem:[#allocation2 + $0x22] sm:$0xff]
      %v438 = vld [vmem:[#allocation2 + $0x32] sm:$0xff]
      %v439 = vld [vmem:[#allocation2 + $0x3a] sm:$0xff]
      %v440 = vld [vmem:[#allocation2 + $0x4a] sm:$0xff]
      %v441 = vld [vmem:[#allocation2 + $0x52] sm:$0xff]
      %v442 = vld [vmem:[#allocation2 + $0x62] sm:$0xff]
      %v443 = vld [vmem:[#allocation2 + $0x6a] sm:$0xff]
      %v444 = vld [vmem:[#allocation2 + $0x7a] sm:$0xff]
      %v445 = vld [vmem:[#allocation2 + $0x82] sm:$0xff]
      %v446 = vld [vmem:[#allocation2 + $0x92] sm:$0xff]
      %v447 = vld [vmem:[#allocation2 + $0x9a] sm:$0xff]
      %v448 = vld [vmem:[#allocation2 + $0xaa] sm:$0xff]
      %v449 = vld [vmem:[#allocation2 + $0xb2] sm:$0xff]
      %v450 = vld [vmem:[#allocation2 + $0xc2] sm:$0xff]
      %v451 = vld [vmem:[#allocation2 + $0xca] sm:$0xff]
      %v452 = vld [vmem:[#allocation2 + $0xda] sm:$0xff]
      %v453 = vld [vmem:[#allocation2 + $0xe2] sm:$0xff]
      %v454 = vld [vmem:[#allocation2 + $0xf2] sm:$0xff]
      %v455 = vld [vmem:[#allocation2 + $0xfa] sm:$0xff]
      %v456 = vld [vmem:[#allocation2 + $0x10a] sm:$0xff]
      %v457 = vld [vmem:[#allocation2 + $0x112] sm:$0xff]
      %v458 = vld [vmem:[#allocation2 + $0x122] sm:$0xff]
      %v459 = vld [vmem:[#allocation2 + $0x12a] sm:$0xff]
      %v460 = vld [vmem:[#allocation2 + $0x13a] sm:$0xff]
      %v461 = vld [vmem:[#allocation2 + $0x142] sm:$0xff]
      %v462 = vld [vmem:[#allocation2 + $0x152] sm:$0xff]
      %v463 = vld [vmem:[#allocation2 + $0x15a] sm:$0xff]
      %v464 = vld [vmem:[#allocation2 + $0x16a] sm:$0xff]
      %v465 = vld [vmem:[#allocation2 + $0x172] sm:$0xff]
      %v466 = vld [vmem:[%s337] sm:$0xff]
      %v467 = vld [vmem:[%s337 + $0x8] sm:$0xff]
      %v468 = vld [vmem:[%s337 + $0x18] sm:$0xff]
      %v469 = vld [vmem:[%s337 + $0x20] sm:$0xff]
      %v470 = vld [vmem:[%s337 + $0x30] sm:$0xff]
      %v471 = vld [vmem:[%s337 + $0x38] sm:$0xff]
      %v472 = vld [vmem:[%s337 + $0x48] sm:$0xff]
      %v473 = vld [vmem:[%s337 + $0x50] sm:$0xff]
      %v474 = vld [vmem:[%s337 + $0x60] sm:$0xff]
      %v475 = vld [vmem:[%s337 + $0x68] sm:$0xff]
      %v476 = vld [vmem:[%s337 + $0x78] sm:$0xff]
      %v477 = vld [vmem:[%s337 + $0x80] sm:$0xff]
      %v478 = vld [vmem:[%s337 + $0x90] sm:$0xff]
      %v479 = vld [vmem:[%s337 + $0x98] sm:$0xff]
      %v480 = vld [vmem:[%s337 + $0xa8] sm:$0xff]
      %v481 = vld [vmem:[%s337 + $0xb0] sm:$0xff]
      %v482 = vld [vmem:[%s337 + $0xc0] sm:$0xff]
      %v483 = vld [vmem:[%s337 + $0xc8] sm:$0xff]
      %v484 = vld [vmem:[%s337 + $0xd8] sm:$0xff]
      %v485 = vld [vmem:[%s337 + $0xe0] sm:$0xff]
      %v486 = vld [vmem:[%s337 + $0xf0] sm:$0xff]
      %v487 = vld [vmem:[%s337 + $0xf8] sm:$0xff]
      %v488 = vld [vmem:[%s337 + $0x108] sm:$0xff]
      %v489 = vld [vmem:[%s337 + $0x110] sm:$0xff]
      %v490 = vld [vmem:[%s337 + $0x120] sm:$0xff]
      %v491 = vld [vmem:[%s337 + $0x128] sm:$0xff]
      %v492 = vld [vmem:[%s337 + $0x138] sm:$0xff]
      %v493 = vld [vmem:[%s337 + $0x140] sm:$0xff]
      %v494 = vld [vmem:[%s337 + $0x150] sm:$0xff]
      %v495 = vld [vmem:[%s337 + $0x158] sm:$0xff]
      %v496 = vld [vmem:[%s337 + $0x168] sm:$0xff]
      %v497 = vld [vmem:[%s337 + $0x170] sm:$0xff]
      %v498 = vld [vmem:[%s337 + $0x1] sm:$0xff]
      %v499 = vld [vmem:[%s337 + $0x9] sm:$0xff]
      %v500 = vld [vmem:[%s337 + $0x19] sm:$0xff]
      %v501 = vld [vmem:[%s337 + $0x21] sm:$0xff]
      %v502 = vld [vmem:[%s337 + $0x31] sm:$0xff]
      %v503 = vld [vmem:[%s337 + $0x39] sm:$0xff]
      %v504 = vld [vmem:[%s337 + $0x49] sm:$0xff]
      %v505 = vld [vmem:[%s337 + $0x51] sm:$0xff]
      %v506 = vld [vmem:[%s337 + $0x61] sm:$0xff]
      %v507 = vld [vmem:[%s337 + $0x69] sm:$0xff]
      %v508 = vld [vmem:[%s337 + $0x79] sm:$0xff]
      %v509 = vld [vmem:[%s337 + $0x81] sm:$0xff]
      %v510 = vld [vmem:[%s337 + $0x91] sm:$0xff]
      %v511 = vld [vmem:[%s337 + $0x99] sm:$0xff]
      %v512 = vld [vmem:[%s337 + $0xa9] sm:$0xff]
      %v513 = vld [vmem:[%s337 + $0xb1] sm:$0xff]
      %v514 = vld [vmem:[%s337 + $0xc1] sm:$0xff]
      %v515 = vld [vmem:[%s337 + $0xc9] sm:$0xff]
      %v516 = vld [vmem:[%s337 + $0xd9] sm:$0xff]
      %v517 = vld [vmem:[%s337 + $0xe1] sm:$0xff]
      %v518 = vld [vmem:[%s337 + $0xf1] sm:$0xff]
      %v519 = vld [vmem:[%s337 + $0xf9] sm:$0xff]
      %v520 = vld [vmem:[%s337 + $0x109] sm:$0xff]
      %v521 = vld [vmem:[%s337 + $0x111] sm:$0xff]
      %v522 = vld [vmem:[%s337 + $0x121] sm:$0xff]
      %v523 = vld [vmem:[%s337 + $0x129] sm:$0xff]
      %v524 = vld [vmem:[%s337 + $0x139] sm:$0xff]
      %v525 = vld [vmem:[%s337 + $0x141] sm:$0xff]
      %v526 = vld [vmem:[%s337 + $0x151] sm:$0xff]
      %v527 = vld [vmem:[%s337 + $0x159] sm:$0xff]
      %v528 = vld [vmem:[%s337 + $0x169] sm:$0xff]
      %v529 = vld [vmem:[%s337 + $0x171] sm:$0xff]
      %v530 = vld [vmem:[%s337 + $0x2] sm:$0xff]
      %v531 = vld [vmem:[%s337 + $0xa] sm:$0xff]
      %v532 = vld [vmem:[%s337 + $0x1a] sm:$0xff]
      %v533 = vld [vmem:[%s337 + $0x22] sm:$0xff]
      %v534 = vld [vmem:[%s337 + $0x32] sm:$0xff]
      %v535 = vld [vmem:[%s337 + $0x3a] sm:$0xff]
      %v536 = vld [vmem:[%s337 + $0x4a] sm:$0xff]
      %v537 = vld [vmem:[%s337 + $0x52] sm:$0xff]
      %v538 = vld [vmem:[%s337 + $0x62] sm:$0xff]
      %v539 = vld [vmem:[%s337 + $0x6a] sm:$0xff]
      %v540 = vld [vmem:[%s337 + $0x7a] sm:$0xff]
      %v541 = vld [vmem:[%s337 + $0x82] sm:$0xff]
      %v542 = vld [vmem:[%s337 + $0x92] sm:$0xff]
      %v543 = vld [vmem:[%s337 + $0x9a] sm:$0xff]
      %v544 = vld [vmem:[%s337 + $0xaa] sm:$0xff]
      %v545 = vld [vmem:[%s337 + $0xb2] sm:$0xff]
      %v546 = vld [vmem:[%s337 + $0xc2] sm:$0xff]
      %v547 = vld [vmem:[%s337 + $0xca] sm:$0xff]
      %v548 = vld [vmem:[%s337 + $0xda] sm:$0xff]
      %v549 = vld [vmem:[%s337 + $0xe2] sm:$0xff]
      %v550 = vld [vmem:[%s337 + $0xf2] sm:$0xff]
      %v551 = vld [vmem:[%s337 + $0xfa] sm:$0xff]
      %v552 = vld [vmem:[%s337 + $0x10a] sm:$0xff]
      %v553 = vld [vmem:[%s337 + $0x112] sm:$0xff]
      %v554 = vld [vmem:[%s337 + $0x122] sm:$0xff]
      %v555 = vld [vmem:[%s337 + $0x12a] sm:$0xff]
      %v556 = vld [vmem:[%s337 + $0x13a] sm:$0xff]
      %v557 = vld [vmem:[%s337 + $0x142] sm:$0xff]
      %v558 = vld [vmem:[%s337 + $0x152] sm:$0xff]
      %v559 = vld [vmem:[%s337 + $0x15a] sm:$0xff]
      %v560 = vld [vmem:[%s337 + $0x16a] sm:$0xff]
      %v561 = vld [vmem:[%s337 + $0x172] sm:$0xff]
      %s562 = scalar_lea.vmem [#allocation2], 48
      %v563 = vld [vmem:[%s562] sm:$0xff]
      %v564 = vld [vmem:[%s562 + $0x8] sm:$0xff]
      %v565 = vld [vmem:[%s562 + $0x18] sm:$0xff]
      %v566 = vld [vmem:[%s562 + $0x20] sm:$0xff]
      %v567 = vld [vmem:[%s562 + $0x30] sm:$0xff]
      %v568 = vld [vmem:[%s562 + $0x38] sm:$0xff]
      %v569 = vld [vmem:[%s562 + $0x48] sm:$0xff]
      %v570 = vld [vmem:[%s562 + $0x50] sm:$0xff]
      %v571 = vld [vmem:[%s562 + $0x60] sm:$0xff]
      %v572 = vld [vmem:[%s562 + $0x68] sm:$0xff]
      %v573 = vld [vmem:[%s562 + $0x78] sm:$0xff]
      %v574 = vld [vmem:[%s562 + $0x80] sm:$0xff]
      %v575 = vld [vmem:[%s562 + $0x90] sm:$0xff]
      %v576 = vld [vmem:[%s562 + $0x98] sm:$0xff]
      %v577 = vld [vmem:[%s562 + $0xa8] sm:$0xff]
      %v578 = vld [vmem:[%s562 + $0xb0] sm:$0xff]
      %v579 = vld [vmem:[%s562 + $0xc0] sm:$0xff]
      %v580 = vld [vmem:[%s562 + $0xc8] sm:$0xff]
      %v581 = vld [vmem:[%s562 + $0xd8] sm:$0xff]
      %v582 = vld [vmem:[%s562 + $0xe0] sm:$0xff]
      %v583 = vld [vmem:[%s562 + $0xf0] sm:$0xff]
      %v584 = vld [vmem:[%s562 + $0xf8] sm:$0xff]
      %v585 = vld [vmem:[%s562 + $0x108] sm:$0xff]
      %v586 = vld [vmem:[%s562 + $0x110] sm:$0xff]
      %v587 = vld [vmem:[%s562 + $0x120] sm:$0xff]
      %v588 = vld [vmem:[%s562 + $0x128] sm:$0xff]
      %v589 = vld [vmem:[%s562 + $0x138] sm:$0xff]
      %v590 = vld [vmem:[%s562 + $0x140] sm:$0xff]
      %v591 = vld [vmem:[%s562 + $0x150] sm:$0xff]
      %v592 = vld [vmem:[%s562 + $0x158] sm:$0xff]
      %v593 = vld [vmem:[%s562 + $0x168] sm:$0xff]
      %v594 = vld [vmem:[%s562 + $0x170] sm:$0xff]
      %v595 = vld [vmem:[%s562 + $0x1] sm:$0xff]
      %v596 = vld [vmem:[%s562 + $0x9] sm:$0xff]
      %v597 = vld [vmem:[%s562 + $0x19] sm:$0xff]
      %v598 = vld [vmem:[%s562 + $0x21] sm:$0xff]
      %v599 = vld [vmem:[%s562 + $0x31] sm:$0xff]
      %v600 = vld [vmem:[%s562 + $0x39] sm:$0xff]
      %v601 = vld [vmem:[%s562 + $0x49] sm:$0xff]
      %v602 = vld [vmem:[%s562 + $0x51] sm:$0xff]
      %v603 = vld [vmem:[%s562 + $0x61] sm:$0xff]
      %v604 = vld [vmem:[%s562 + $0x69] sm:$0xff]
      %v605 = vld [vmem:[%s562 + $0x79] sm:$0xff]
      %v606 = vld [vmem:[%s562 + $0x81] sm:$0xff]
      %v607 = vld [vmem:[%s562 + $0x91] sm:$0xff]
      %v608 = vld [vmem:[%s562 + $0x99] sm:$0xff]
      %v609 = vld [vmem:[%s562 + $0xa9] sm:$0xff]
      %v610 = vld [vmem:[%s562 + $0xb1] sm:$0xff]
      %v611 = vld [vmem:[%s562 + $0xc1] sm:$0xff]
      %v612 = vld [vmem:[%s562 + $0xc9] sm:$0xff]
      %v613 = vld [vmem:[%s562 + $0xd9] sm:$0xff]
      %v614 = vld [vmem:[%s562 + $0xe1] sm:$0xff]
      %v615 = vld [vmem:[%s562 + $0xf1] sm:$0xff]
      %v616 = vld [vmem:[%s562 + $0xf9] sm:$0xff]
      %v617 = vld [vmem:[%s562 + $0x109] sm:$0xff]
      %v618 = vld [vmem:[%s562 + $0x111] sm:$0xff]
      %v619 = vld [vmem:[%s562 + $0x121] sm:$0xff]
      %v620 = vld [vmem:[%s562 + $0x129] sm:$0xff]
      %v621 = vld [vmem:[%s562 + $0x139] sm:$0xff]
      %v622 = vld [vmem:[%s562 + $0x141] sm:$0xff]
      %v623 = vld [vmem:[%s562 + $0x151] sm:$0xff]
      %v624 = vld [vmem:[%s562 + $0x159] sm:$0xff]
      %v625 = vld [vmem:[%s562 + $0x169] sm:$0xff]
      %v626 = vld [vmem:[%s562 + $0x171] sm:$0xff]
      %v627 = vld [vmem:[%s562 + $0x2] sm:$0xff]
      %v628 = vld [vmem:[%s562 + $0xa] sm:$0xff]
      %v629 = vld [vmem:[%s562 + $0x1a] sm:$0xff]
      %v630 = vld [vmem:[%s562 + $0x22] sm:$0xff]
      %v631 = vld [vmem:[%s562 + $0x32] sm:$0xff]
      %v632 = vld [vmem:[%s562 + $0x3a] sm:$0xff]
      %v633 = vld [vmem:[%s562 + $0x4a] sm:$0xff]
      %v634 = vld [vmem:[%s562 + $0x52] sm:$0xff]
      %v635 = vld [vmem:[%s562 + $0x62] sm:$0xff]
      %v636 = vld [vmem:[%s562 + $0x6a] sm:$0xff]
      %v637 = vld [vmem:[%s562 + $0x7a] sm:$0xff]
      %v638 = vld [vmem:[%s562 + $0x82] sm:$0xff]
      %v639 = vld [vmem:[%s562 + $0x92] sm:$0xff]
      %v640 = vld [vmem:[%s562 + $0x9a] sm:$0xff]
      %v641 = vld [vmem:[%s562 + $0xaa] sm:$0xff]
      %v642 = vld [vmem:[%s562 + $0xb2] sm:$0xff]
      %v643 = vld [vmem:[%s562 + $0xc2] sm:$0xff]
      %v644 = vld [vmem:[%s562 + $0xca] sm:$0xff]
      %v645 = vld [vmem:[%s562 + $0xda] sm:$0xff]
      %v646 = vld [vmem:[%s562 + $0xe2] sm:$0xff]
      %v647 = vld [vmem:[%s562 + $0xf2] sm:$0xff]
      %v648 = vld [vmem:[%s562 + $0xfa] sm:$0xff]
      %v649 = vld [vmem:[%s562 + $0x10a] sm:$0xff]
      %v650 = vld [vmem:[%s562 + $0x112] sm:$0xff]
      %v651 = vld [vmem:[%s562 + $0x122] sm:$0xff]
      %v652 = vld [vmem:[%s562 + $0x12a] sm:$0xff]
      %v653 = vld [vmem:[%s562 + $0x13a] sm:$0xff]
      %v654 = vld [vmem:[%s562 + $0x142] sm:$0xff]
      %v655 = vld [vmem:[%s562 + $0x152] sm:$0xff]
      %v656 = vld [vmem:[%s562 + $0x15a] sm:$0xff]
      %v657 = vld [vmem:[%s562 + $0x16a] sm:$0xff]
      %v658 = vld [vmem:[%s562 + $0x172] sm:$0xff]
      %691 = vrot.lane.b32.xlu0 %v402, 4
      %v692 = vpop.permute.xlu0 %691
      %693 = vrot.lane.b32.xlu0 %v403, 4
      %v694 = vpop.permute.xlu0 %693
      %695 = vrot.lane.b32.xlu0 %v404, 4
      %v696 = vpop.permute.xlu0 %695
      %697 = vrot.lane.b32.xlu0 %v405, 4
      %v698 = vpop.permute.xlu0 %697
      %699 = vrot.lane.b32.xlu0 %v406, 4
      %v700 = vpop.permute.xlu0 %699
      %701 = vrot.lane.b32.xlu0 %v407, 4
      %v702 = vpop.permute.xlu0 %701
      %703 = vrot.lane.b32.xlu0 %v408, 4
      %v704 = vpop.permute.xlu0 %703
      %705 = vrot.lane.b32.xlu0 %v409, 4
      %v706 = vpop.permute.xlu0 %705
      %707 = vrot.lane.b32.xlu0 %v410, 4
      %v708 = vpop.permute.xlu0 %707
      %709 = vrot.lane.b32.xlu0 %v411, 4
      %v710 = vpop.permute.xlu0 %709
      %711 = vrot.lane.b32.xlu0 %v412, 4
      %v712 = vpop.permute.xlu0 %711
      %713 = vrot.lane.b32.xlu0 %v413, 4
      %v714 = vpop.permute.xlu0 %713
      %715 = vrot.lane.b32.xlu0 %v414, 4
      %v716 = vpop.permute.xlu0 %715
      %717 = vrot.lane.b32.xlu0 %v415, 4
      %v718 = vpop.permute.xlu0 %717
      %719 = vrot.lane.b32.xlu0 %v416, 4
      %v720 = vpop.permute.xlu0 %719
      %721 = vrot.lane.b32.xlu0 %v417, 4
      %v722 = vpop.permute.xlu0 %721
      %723 = vrot.lane.b32.xlu0 %v418, 4
      %v724 = vpop.permute.xlu0 %723
      %725 = vrot.lane.b32.xlu0 %v419, 4
      %v726 = vpop.permute.xlu0 %725
      %727 = vrot.lane.b32.xlu0 %v420, 4
      %v728 = vpop.permute.xlu0 %727
      %729 = vrot.lane.b32.xlu0 %v421, 4
      %v730 = vpop.permute.xlu0 %729
      %731 = vrot.lane.b32.xlu0 %v422, 4
      %v732 = vpop.permute.xlu0 %731
      %733 = vrot.lane.b32.xlu0 %v423, 4
      %v734 = vpop.permute.xlu0 %733
      %735 = vrot.lane.b32.xlu0 %v424, 4
      %v736 = vpop.permute.xlu0 %735
      %737 = vrot.lane.b32.xlu0 %v425, 4
      %v738 = vpop.permute.xlu0 %737
      %739 = vrot.lane.b32.xlu0 %v426, 4
      %v740 = vpop.permute.xlu0 %739
      %741 = vrot.lane.b32.xlu0 %v427, 4
      %v742 = vpop.permute.xlu0 %741
      %743 = vrot.lane.b32.xlu0 %v428, 4
      %v744 = vpop.permute.xlu0 %743
      %745 = vrot.lane.b32.xlu0 %v429, 4
      %v746 = vpop.permute.xlu0 %745
      %747 = vrot.lane.b32.xlu0 %v430, 4
      %v748 = vpop.permute.xlu0 %747
      %749 = vrot.lane.b32.xlu0 %v431, 4
      %v750 = vpop.permute.xlu0 %749
      %751 = vrot.lane.b32.xlu0 %v432, 4
      %v752 = vpop.permute.xlu0 %751
      %753 = vrot.lane.b32.xlu0 %v433, 4
      %v754 = vpop.permute.xlu0 %753
      %819 = vrot.lane.b32.xlu0 %v434, 8
      %v820 = vpop.permute.xlu0 %819
      %821 = vrot.lane.b32.xlu0 %v435, 8
      %v822 = vpop.permute.xlu0 %821
      %823 = vrot.lane.b32.xlu0 %v436, 8
      %v824 = vpop.permute.xlu0 %823
      %825 = vrot.lane.b32.xlu0 %v437, 8
      %v826 = vpop.permute.xlu0 %825
      %827 = vrot.lane.b32.xlu0 %v438, 8
      %v828 = vpop.permute.xlu0 %827
      %829 = vrot.lane.b32.xlu0 %v439, 8
      %v830 = vpop.permute.xlu0 %829
      %831 = vrot.lane.b32.xlu0 %v440, 8
      %v832 = vpop.permute.xlu0 %831
      %833 = vrot.lane.b32.xlu0 %v441, 8
      %v834 = vpop.permute.xlu0 %833
      %835 = vrot.lane.b32.xlu0 %v442, 8
      %v836 = vpop.permute.xlu0 %835
      %837 = vrot.lane.b32.xlu0 %v443, 8
      %v838 = vpop.permute.xlu0 %837
      %839 = vrot.lane.b32.xlu0 %v444, 8
      %v840 = vpop.permute.xlu0 %839
      %841 = vrot.lane.b32.xlu0 %v445, 8
      %v842 = vpop.permute.xlu0 %841
      %843 = vrot.lane.b32.xlu0 %v446, 8
      %v844 = vpop.permute.xlu0 %843
      %845 = vrot.lane.b32.xlu0 %v447, 8
      %v846 = vpop.permute.xlu0 %845
      %847 = vrot.lane.b32.xlu0 %v448, 8
      %v848 = vpop.permute.xlu0 %847
      %849 = vrot.lane.b32.xlu0 %v449, 8
      %v850 = vpop.permute.xlu0 %849
      %851 = vrot.lane.b32.xlu0 %v450, 8
      %v852 = vpop.permute.xlu0 %851
      %853 = vrot.lane.b32.xlu0 %v451, 8
      %v854 = vpop.permute.xlu0 %853
      %855 = vrot.lane.b32.xlu0 %v452, 8
      %v856 = vpop.permute.xlu0 %855
      %857 = vrot.lane.b32.xlu0 %v453, 8
      %v858 = vpop.permute.xlu0 %857
      %859 = vrot.lane.b32.xlu0 %v454, 8
      %v860 = vpop.permute.xlu0 %859
      %861 = vrot.lane.b32.xlu0 %v455, 8
      %v862 = vpop.permute.xlu0 %861
      %863 = vrot.lane.b32.xlu0 %v456, 8
      %v864 = vpop.permute.xlu0 %863
      %865 = vrot.lane.b32.xlu0 %v457, 8
      %v866 = vpop.permute.xlu0 %865
      %867 = vrot.lane.b32.xlu0 %v458, 8
      %v868 = vpop.permute.xlu0 %867
      %869 = vrot.lane.b32.xlu0 %v459, 8
      %v870 = vpop.permute.xlu0 %869
      %871 = vrot.lane.b32.xlu0 %v460, 8
      %v872 = vpop.permute.xlu0 %871
      %873 = vrot.lane.b32.xlu0 %v461, 8
      %v874 = vpop.permute.xlu0 %873
      %875 = vrot.lane.b32.xlu0 %v462, 8
      %v876 = vpop.permute.xlu0 %875
      %877 = vrot.lane.b32.xlu0 %v463, 8
      %v878 = vpop.permute.xlu0 %877
      %879 = vrot.lane.b32.xlu0 %v464, 8
      %v880 = vpop.permute.xlu0 %879
      %881 = vrot.lane.b32.xlu0 %v465, 8
      %v882 = vpop.permute.xlu0 %881
      %947 = vrot.lane.b32.xlu0 %v466, 12
      %v948 = vpop.permute.xlu0 %947
      %949 = vrot.lane.b32.xlu0 %v467, 12
      %v950 = vpop.permute.xlu0 %949
      %951 = vrot.lane.b32.xlu0 %v468, 12
      %v952 = vpop.permute.xlu0 %951
      %953 = vrot.lane.b32.xlu0 %v469, 12
      %v954 = vpop.permute.xlu0 %953
      %955 = vrot.lane.b32.xlu0 %v470, 12
      %v956 = vpop.permute.xlu0 %955
      %957 = vrot.lane.b32.xlu0 %v471, 12
      %v958 = vpop.permute.xlu0 %957
      %959 = vrot.lane.b32.xlu0 %v472, 12
      %v960 = vpop.permute.xlu0 %959
      %961 = vrot.lane.b32.xlu0 %v473, 12
      %v962 = vpop.permute.xlu0 %961
      %963 = vrot.lane.b32.xlu0 %v474, 12
      %v964 = vpop.permute.xlu0 %963
      %965 = vrot.lane.b32.xlu0 %v475, 12
      %v966 = vpop.permute.xlu0 %965
      %967 = vrot.lane.b32.xlu0 %v476, 12
      %v968 = vpop.permute.xlu0 %967
      %969 = vrot.lane.b32.xlu0 %v477, 12
      %v970 = vpop.permute.xlu0 %969
      %971 = vrot.lane.b32.xlu0 %v478, 12
      %v972 = vpop.permute.xlu0 %971
      %973 = vrot.lane.b32.xlu0 %v479, 12
      %v974 = vpop.permute.xlu0 %973
      %975 = vrot.lane.b32.xlu0 %v480, 12
      %v976 = vpop.permute.xlu0 %975
      %977 = vrot.lane.b32.xlu0 %v481, 12
      %v978 = vpop.permute.xlu0 %977
      %979 = vrot.lane.b32.xlu0 %v482, 12
      %v980 = vpop.permute.xlu0 %979
      %981 = vrot.lane.b32.xlu0 %v483, 12
      %v982 = vpop.permute.xlu0 %981
      %983 = vrot.lane.b32.xlu0 %v484, 12
      %v984 = vpop.permute.xlu0 %983
      %985 = vrot.lane.b32.xlu0 %v485, 12
      %v986 = vpop.permute.xlu0 %985
      %987 = vrot.lane.b32.xlu0 %v486, 12
      %v988 = vpop.permute.xlu0 %987
      %989 = vrot.lane.b32.xlu0 %v487, 12
      %v990 = vpop.permute.xlu0 %989
      %991 = vrot.lane.b32.xlu0 %v488, 12
      %v992 = vpop.permute.xlu0 %991
      %993 = vrot.lane.b32.xlu0 %v489, 12
      %v994 = vpop.permute.xlu0 %993
      %995 = vrot.lane.b32.xlu0 %v490, 12
      %v996 = vpop.permute.xlu0 %995
      %997 = vrot.lane.b32.xlu0 %v491, 12
      %v998 = vpop.permute.xlu0 %997
      %999 = vrot.lane.b32.xlu0 %v492, 12
      %v1000 = vpop.permute.xlu0 %999
      %1001 = vrot.lane.b32.xlu0 %v493, 12
      %v1002 = vpop.permute.xlu0 %1001
      %1003 = vrot.lane.b32.xlu0 %v494, 12
      %v1004 = vpop.permute.xlu0 %1003
      %1005 = vrot.lane.b32.xlu0 %v495, 12
      %v1006 = vpop.permute.xlu0 %1005
      %1007 = vrot.lane.b32.xlu0 %v496, 12
      %v1008 = vpop.permute.xlu0 %1007
      %1009 = vrot.lane.b32.xlu0 %v497, 12
      %v1010 = vpop.permute.xlu0 %1009
      %1075 = vrot.lane.b32.xlu0 %v498, 16
      %v1076 = vpop.permute.xlu0 %1075
      %1077 = vrot.lane.b32.xlu0 %v499, 16
      %v1078 = vpop.permute.xlu0 %1077
      %1079 = vrot.lane.b32.xlu0 %v500, 16
      %v1080 = vpop.permute.xlu0 %1079
      %1081 = vrot.lane.b32.xlu0 %v501, 16
      %v1082 = vpop.permute.xlu0 %1081
      %1083 = vrot.lane.b32.xlu0 %v502, 16
      %v1084 = vpop.permute.xlu0 %1083
      %1085 = vrot.lane.b32.xlu0 %v503, 16
      %v1086 = vpop.permute.xlu0 %1085
      %1087 = vrot.lane.b32.xlu0 %v504, 16
      %v1088 = vpop.permute.xlu0 %1087
      %1089 = vrot.lane.b32.xlu0 %v505, 16
      %v1090 = vpop.permute.xlu0 %1089
      %1091 = vrot.lane.b32.xlu0 %v506, 16
      %v1092 = vpop.permute.xlu0 %1091
      %1093 = vrot.lane.b32.xlu0 %v507, 16
      %v1094 = vpop.permute.xlu0 %1093
      %1095 = vrot.lane.b32.xlu0 %v508, 16
      %v1096 = vpop.permute.xlu0 %1095
      %1097 = vrot.lane.b32.xlu0 %v509, 16
      %v1098 = vpop.permute.xlu0 %1097
      %1099 = vrot.lane.b32.xlu0 %v510, 16
      %v1100 = vpop.permute.xlu0 %1099
      %1101 = vrot.lane.b32.xlu0 %v511, 16
      %v1102 = vpop.permute.xlu0 %1101
      %1103 = vrot.lane.b32.xlu0 %v512, 16
      %v1104 = vpop.permute.xlu0 %1103
      %1105 = vrot.lane.b32.xlu0 %v513, 16
      %v1106 = vpop.permute.xlu0 %1105
      %1107 = vrot.lane.b32.xlu0 %v514, 16
      %v1108 = vpop.permute.xlu0 %1107
      %1109 = vrot.lane.b32.xlu0 %v515, 16
      %v1110 = vpop.permute.xlu0 %1109
      %1111 = vrot.lane.b32.xlu0 %v516, 16
      %v1112 = vpop.permute.xlu0 %1111
      %1113 = vrot.lane.b32.xlu0 %v517, 16
      %v1114 = vpop.permute.xlu0 %1113
      %1115 = vrot.lane.b32.xlu0 %v518, 16
      %v1116 = vpop.permute.xlu0 %1115
      %1117 = vrot.lane.b32.xlu0 %v519, 16
      %v1118 = vpop.permute.xlu0 %1117
      %1119 = vrot.lane.b32.xlu0 %v520, 16
      %v1120 = vpop.permute.xlu0 %1119
      %1121 = vrot.lane.b32.xlu0 %v521, 16
      %v1122 = vpop.permute.xlu0 %1121
      %1123 = vrot.lane.b32.xlu0 %v522, 16
      %v1124 = vpop.permute.xlu0 %1123
      %1125 = vrot.lane.b32.xlu0 %v523, 16
      %v1126 = vpop.permute.xlu0 %1125
      %1127 = vrot.lane.b32.xlu0 %v524, 16
      %v1128 = vpop.permute.xlu0 %1127
      %1129 = vrot.lane.b32.xlu0 %v525, 16
      %v1130 = vpop.permute.xlu0 %1129
      %1131 = vrot.lane.b32.xlu0 %v526, 16
      %v1132 = vpop.permute.xlu0 %1131
      %1133 = vrot.lane.b32.xlu0 %v527, 16
      %v1134 = vpop.permute.xlu0 %1133
      %1135 = vrot.lane.b32.xlu0 %v528, 16
      %v1136 = vpop.permute.xlu0 %1135
      %1137 = vrot.lane.b32.xlu0 %v529, 16
      %v1138 = vpop.permute.xlu0 %1137
      %1203 = vrot.lane.b32.xlu0 %v530, 20
      %v1204 = vpop.permute.xlu0 %1203
      %1205 = vrot.lane.b32.xlu0 %v531, 20
      %v1206 = vpop.permute.xlu0 %1205
      %1207 = vrot.lane.b32.xlu0 %v532, 20
      %v1208 = vpop.permute.xlu0 %1207
      %1209 = vrot.lane.b32.xlu0 %v533, 20
      %v1210 = vpop.permute.xlu0 %1209
      %1211 = vrot.lane.b32.xlu0 %v534, 20
      %v1212 = vpop.permute.xlu0 %1211
      %1213 = vrot.lane.b32.xlu0 %v535, 20
      %v1214 = vpop.permute.xlu0 %1213
      %1215 = vrot.lane.b32.xlu0 %v536, 20
      %v1216 = vpop.permute.xlu0 %1215
      %1217 = vrot.lane.b32.xlu0 %v537, 20
      %v1218 = vpop.permute.xlu0 %1217
      %1219 = vrot.lane.b32.xlu0 %v538, 20
      %v1220 = vpop.permute.xlu0 %1219
      %1221 = vrot.lane.b32.xlu0 %v539, 20
      %v1222 = vpop.permute.xlu0 %1221
      %1223 = vrot.lane.b32.xlu0 %v540, 20
      %v1224 = vpop.permute.xlu0 %1223
      %1225 = vrot.lane.b32.xlu0 %v541, 20
      %v1226 = vpop.permute.xlu0 %1225
      %1227 = vrot.lane.b32.xlu0 %v542, 20
      %v1228 = vpop.permute.xlu0 %1227
      %1229 = vrot.lane.b32.xlu0 %v543, 20
      %v1230 = vpop.permute.xlu0 %1229
      %1231 = vrot.lane.b32.xlu0 %v544, 20
      %v1232 = vpop.permute.xlu0 %1231
      %1233 = vrot.lane.b32.xlu0 %v545, 20
      %v1234 = vpop.permute.xlu0 %1233
      %1235 = vrot.lane.b32.xlu0 %v546, 20
      %v1236 = vpop.permute.xlu0 %1235
      %1237 = vrot.lane.b32.xlu0 %v547, 20
      %v1238 = vpop.permute.xlu0 %1237
      %1239 = vrot.lane.b32.xlu0 %v548, 20
      %v1240 = vpop.permute.xlu0 %1239
      %1241 = vrot.lane.b32.xlu0 %v549, 20
      %v1242 = vpop.permute.xlu0 %1241
      %1243 = vrot.lane.b32.xlu0 %v550, 20
      %v1244 = vpop.permute.xlu0 %1243
      %1245 = vrot.lane.b32.xlu0 %v551, 20
      %v1246 = vpop.permute.xlu0 %1245
      %1247 = vrot.lane.b32.xlu0 %v552, 20
      %v1248 = vpop.permute.xlu0 %1247
      %1249 = vrot.lane.b32.xlu0 %v553, 20
      %v1250 = vpop.permute.xlu0 %1249
      %1251 = vrot.lane.b32.xlu0 %v554, 20
      %v1252 = vpop.permute.xlu0 %1251
      %1253 = vrot.lane.b32.xlu0 %v555, 20
      %v1254 = vpop.permute.xlu0 %1253
      %1255 = vrot.lane.b32.xlu0 %v556, 20
      %v1256 = vpop.permute.xlu0 %1255
      %1257 = vrot.lane.b32.xlu0 %v557, 20
      %v1258 = vpop.permute.xlu0 %1257
      %1259 = vrot.lane.b32.xlu0 %v558, 20
      %v1260 = vpop.permute.xlu0 %1259
      %1261 = vrot.lane.b32.xlu0 %v559, 20
      %v1262 = vpop.permute.xlu0 %1261
      %1263 = vrot.lane.b32.xlu0 %v560, 20
      %v1264 = vpop.permute.xlu0 %1263
      %1265 = vrot.lane.b32.xlu0 %v561, 20
      %v1266 = vpop.permute.xlu0 %1265
      %1331 = vrot.lane.b32.xlu0 %v563, 24
      %v1332 = vpop.permute.xlu0 %1331
      %1333 = vrot.lane.b32.xlu0 %v564, 24
      %v1334 = vpop.permute.xlu0 %1333
      %1335 = vrot.lane.b32.xlu0 %v565, 24
      %v1336 = vpop.permute.xlu0 %1335
      %1337 = vrot.lane.b32.xlu0 %v566, 24
      %v1338 = vpop.permute.xlu0 %1337
      %1339 = vrot.lane.b32.xlu0 %v567, 24
      %v1340 = vpop.permute.xlu0 %1339
      %1341 = vrot.lane.b32.xlu0 %v568, 24
      %v1342 = vpop.permute.xlu0 %1341
      %1343 = vrot.lane.b32.xlu0 %v569, 24
      %v1344 = vpop.permute.xlu0 %1343
      %1345 = vrot.lane.b32.xlu0 %v570, 24
      %v1346 = vpop.permute.xlu0 %1345
      %1347 = vrot.lane.b32.xlu0 %v571, 24
      %v1348 = vpop.permute.xlu0 %1347
      %1349 = vrot.lane.b32.xlu0 %v572, 24
      %v1350 = vpop.permute.xlu0 %1349
      %1351 = vrot.lane.b32.xlu0 %v573, 24
      %v1352 = vpop.permute.xlu0 %1351
      %1353 = vrot.lane.b32.xlu0 %v574, 24
      %v1354 = vpop.permute.xlu0 %1353
      %1355 = vrot.lane.b32.xlu0 %v575, 24
      %v1356 = vpop.permute.xlu0 %1355
      %1357 = vrot.lane.b32.xlu0 %v576, 24
      %v1358 = vpop.permute.xlu0 %1357
      %1359 = vrot.lane.b32.xlu0 %v577, 24
      %v1360 = vpop.permute.xlu0 %1359
      %1361 = vrot.lane.b32.xlu0 %v578, 24
      %v1362 = vpop.permute.xlu0 %1361
      %1363 = vrot.lane.b32.xlu0 %v579, 24
      %v1364 = vpop.permute.xlu0 %1363
      %1365 = vrot.lane.b32.xlu0 %v580, 24
      %v1366 = vpop.permute.xlu0 %1365
      %1367 = vrot.lane.b32.xlu0 %v581, 24
      %v1368 = vpop.permute.xlu0 %1367
      %1369 = vrot.lane.b32.xlu0 %v582, 24
      %v1370 = vpop.permute.xlu0 %1369
      %1371 = vrot.lane.b32.xlu0 %v583, 24
      %v1372 = vpop.permute.xlu0 %1371
      %1373 = vrot.lane.b32.xlu0 %v584, 24
      %v1374 = vpop.permute.xlu0 %1373
      %1375 = vrot.lane.b32.xlu0 %v585, 24
      %v1376 = vpop.permute.xlu0 %1375
      %1377 = vrot.lane.b32.xlu0 %v586, 24
      %v1378 = vpop.permute.xlu0 %1377
      %1379 = vrot.lane.b32.xlu0 %v587, 24
      %v1380 = vpop.permute.xlu0 %1379
      %1381 = vrot.lane.b32.xlu0 %v588, 24
      %v1382 = vpop.permute.xlu0 %1381
      %1383 = vrot.lane.b32.xlu0 %v589, 24
      %v1384 = vpop.permute.xlu0 %1383
      %1385 = vrot.lane.b32.xlu0 %v590, 24
      %v1386 = vpop.permute.xlu0 %1385
      %1387 = vrot.lane.b32.xlu0 %v591, 24
      %v1388 = vpop.permute.xlu0 %1387
      %1389 = vrot.lane.b32.xlu0 %v592, 24
      %v1390 = vpop.permute.xlu0 %1389
      %1391 = vrot.lane.b32.xlu0 %v593, 24
      %v1392 = vpop.permute.xlu0 %1391
      %1393 = vrot.lane.b32.xlu0 %v594, 24
      %v1394 = vpop.permute.xlu0 %1393
      %1459 = vrot.lane.b32.xlu0 %v595, 28
      %v1460 = vpop.permute.xlu0 %1459
      %1461 = vrot.lane.b32.xlu0 %v596, 28
      %v1462 = vpop.permute.xlu0 %1461
      %1463 = vrot.lane.b32.xlu0 %v597, 28
      %v1464 = vpop.permute.xlu0 %1463
      %1465 = vrot.lane.b32.xlu0 %v598, 28
      %v1466 = vpop.permute.xlu0 %1465
      %1467 = vrot.lane.b32.xlu0 %v599, 28
      %v1468 = vpop.permute.xlu0 %1467
      %1469 = vrot.lane.b32.xlu0 %v600, 28
      %v1470 = vpop.permute.xlu0 %1469
      %1471 = vrot.lane.b32.xlu0 %v601, 28
      %v1472 = vpop.permute.xlu0 %1471
      %1473 = vrot.lane.b32.xlu0 %v602, 28
      %v1474 = vpop.permute.xlu0 %1473
      %1475 = vrot.lane.b32.xlu0 %v603, 28
      %v1476 = vpop.permute.xlu0 %1475
      %1477 = vrot.lane.b32.xlu0 %v604, 28
      %v1478 = vpop.permute.xlu0 %1477
      %1479 = vrot.lane.b32.xlu0 %v605, 28
      %v1480 = vpop.permute.xlu0 %1479
      %1481 = vrot.lane.b32.xlu0 %v606, 28
      %v1482 = vpop.permute.xlu0 %1481
      %1483 = vrot.lane.b32.xlu0 %v607, 28
      %v1484 = vpop.permute.xlu0 %1483
      %1485 = vrot.lane.b32.xlu0 %v608, 28
      %v1486 = vpop.permute.xlu0 %1485
      %1487 = vrot.lane.b32.xlu0 %v609, 28
      %v1488 = vpop.permute.xlu0 %1487
      %1489 = vrot.lane.b32.xlu0 %v610, 28
      %v1490 = vpop.permute.xlu0 %1489
      %1491 = vrot.lane.b32.xlu0 %v611, 28
      %v1492 = vpop.permute.xlu0 %1491
      %1493 = vrot.lane.b32.xlu0 %v612, 28
      %v1494 = vpop.permute.xlu0 %1493
      %1495 = vrot.lane.b32.xlu0 %v613, 28
      %v1496 = vpop.permute.xlu0 %1495
      %1497 = vrot.lane.b32.xlu0 %v614, 28
      %v1498 = vpop.permute.xlu0 %1497
      %1499 = vrot.lane.b32.xlu0 %v615, 28
      %v1500 = vpop.permute.xlu0 %1499
      %1501 = vrot.lane.b32.xlu0 %v616, 28
      %v1502 = vpop.permute.xlu0 %1501
      %1503 = vrot.lane.b32.xlu0 %v617, 28
      %v1504 = vpop.permute.xlu0 %1503
      %1505 = vrot.lane.b32.xlu0 %v618, 28
      %v1506 = vpop.permute.xlu0 %1505
      %1507 = vrot.lane.b32.xlu0 %v619, 28
      %v1508 = vpop.permute.xlu0 %1507
      %1509 = vrot.lane.b32.xlu0 %v620, 28
      %v1510 = vpop.permute.xlu0 %1509
      %1511 = vrot.lane.b32.xlu0 %v621, 28
      %v1512 = vpop.permute.xlu0 %1511
      %1513 = vrot.lane.b32.xlu0 %v622, 28
      %v1514 = vpop.permute.xlu0 %1513
      %1515 = vrot.lane.b32.xlu0 %v623, 28
      %v1516 = vpop.permute.xlu0 %1515
      %1517 = vrot.lane.b32.xlu0 %v624, 28
      %v1518 = vpop.permute.xlu0 %1517
      %1519 = vrot.lane.b32.xlu0 %v625, 28
      %v1520 = vpop.permute.xlu0 %1519
      %1521 = vrot.lane.b32.xlu0 %v626, 28
      %v1522 = vpop.permute.xlu0 %1521
      %1587 = vrot.lane.b32.xlu0 %v627, 32
      %v1588 = vpop.permute.xlu0 %1587
      %1589 = vrot.lane.b32.xlu0 %v628, 32
      %v1590 = vpop.permute.xlu0 %1589
      %1591 = vrot.lane.b32.xlu0 %v629, 32
      %v1592 = vpop.permute.xlu0 %1591
      %1593 = vrot.lane.b32.xlu0 %v630, 32
      %v1594 = vpop.permute.xlu0 %1593
      %1595 = vrot.lane.b32.xlu0 %v631, 32
      %v1596 = vpop.permute.xlu0 %1595
      %1597 = vrot.lane.b32.xlu0 %v632, 32
      %v1598 = vpop.permute.xlu0 %1597
      %1599 = vrot.lane.b32.xlu0 %v633, 32
      %v1600 = vpop.permute.xlu0 %1599
      %1601 = vrot.lane.b32.xlu0 %v634, 32
      %v1602 = vpop.permute.xlu0 %1601
      %1603 = vrot.lane.b32.xlu0 %v635, 32
      %v1604 = vpop.permute.xlu0 %1603
      %1605 = vrot.lane.b32.xlu0 %v636, 32
      %v1606 = vpop.permute.xlu0 %1605
      %1607 = vrot.lane.b32.xlu0 %v637, 32
      %v1608 = vpop.permute.xlu0 %1607
      %1609 = vrot.lane.b32.xlu0 %v638, 32
      %v1610 = vpop.permute.xlu0 %1609
      %1611 = vrot.lane.b32.xlu0 %v639, 32
      %v1612 = vpop.permute.xlu0 %1611
      %1613 = vrot.lane.b32.xlu0 %v640, 32
      %v1614 = vpop.permute.xlu0 %1613
      %1615 = vrot.lane.b32.xlu0 %v641, 32
      %v1616 = vpop.permute.xlu0 %1615
      %1617 = vrot.lane.b32.xlu0 %v642, 32
      %v1618 = vpop.permute.xlu0 %1617
      %1619 = vrot.lane.b32.xlu0 %v643, 32
      %v1620 = vpop.permute.xlu0 %1619
      %1621 = vrot.lane.b32.xlu0 %v644, 32
      %v1622 = vpop.permute.xlu0 %1621
      %1623 = vrot.lane.b32.xlu0 %v645, 32
      %v1624 = vpop.permute.xlu0 %1623
      %1625 = vrot.lane.b32.xlu0 %v646, 32
      %v1626 = vpop.permute.xlu0 %1625
      %1627 = vrot.lane.b32.xlu0 %v647, 32
      %v1628 = vpop.permute.xlu0 %1627
      %1629 = vrot.lane.b32.xlu0 %v648, 32
      %v1630 = vpop.permute.xlu0 %1629
      %1631 = vrot.lane.b32.xlu0 %v649, 32
      %v1632 = vpop.permute.xlu0 %1631
      %1633 = vrot.lane.b32.xlu0 %v650, 32
      %v1634 = vpop.permute.xlu0 %1633
      %1635 = vrot.lane.b32.xlu0 %v651, 32
      %v1636 = vpop.permute.xlu0 %1635
      %1637 = vrot.lane.b32.xlu0 %v652, 32
      %v1638 = vpop.permute.xlu0 %1637
      %1639 = vrot.lane.b32.xlu0 %v653, 32
      %v1640 = vpop.permute.xlu0 %1639
      %1641 = vrot.lane.b32.xlu0 %v654, 32
      %v1642 = vpop.permute.xlu0 %1641
      %1643 = vrot.lane.b32.xlu0 %v655, 32
      %v1644 = vpop.permute.xlu0 %1643
      %1645 = vrot.lane.b32.xlu0 %v656, 32
      %v1646 = vpop.permute.xlu0 %1645
      %1647 = vrot.lane.b32.xlu0 %v657, 32
      %v1648 = vpop.permute.xlu0 %1647
      %1649 = vrot.lane.b32.xlu0 %v658, 32
      %v1650 = vpop.permute.xlu0 %1649
      %v1683 = vsel %vm291, %v370, %v692
      %v1684 = vsel %vm291, %v371, %v694
      %v1685 = vsel %vm291, %v372, %v696
      %v1686 = vsel %vm291, %v373, %v698
      %v1687 = vsel %vm291, %v374, %v700
      %v1688 = vsel %vm291, %v375, %v702
      %v1689 = vsel %vm291, %v376, %v704
      %v1690 = vsel %vm291, %v377, %v706
      %v1691 = vsel %vm291, %v378, %v708
      %v1692 = vsel %vm291, %v379, %v710
      %v1693 = vsel %vm291, %v380, %v712
      %v1694 = vsel %vm291, %v381, %v714
      %v1695 = vsel %vm291, %v382, %v716
      %v1696 = vsel %vm291, %v383, %v718
      %v1697 = vsel %vm291, %v384, %v720
      %v1698 = vsel %vm291, %v385, %v722
      %v1699 = vsel %vm291, %v386, %v724
      %v1700 = vsel %vm291, %v387, %v726
      %v1701 = vsel %vm291, %v388, %v728
      %v1702 = vsel %vm291, %v389, %v730
      %v1703 = vsel %vm291, %v390, %v732
      %v1704 = vsel %vm291, %v391, %v734
      %v1705 = vsel %vm291, %v392, %v736
      %v1706 = vsel %vm291, %v393, %v738
      %v1707 = vsel %vm291, %v394, %v740
      %v1708 = vsel %vm291, %v395, %v742
      %v1709 = vsel %vm291, %v396, %v744
      %v1710 = vsel %vm291, %v397, %v746
      %v1711 = vsel %vm291, %v398, %v748
      %v1712 = vsel %vm291, %v399, %v750
      %v1713 = vsel %vm291, %v400, %v752
      %v1714 = vsel %vm291, %v401, %v754
      %vm1715 = vcmask 64512
      %v1716 = vsel %vm1715, %v1683, %v820
      %v1717 = vsel %vm1715, %v1684, %v822
      %v1718 = vsel %vm1715, %v1685, %v824
      %v1719 = vsel %vm1715, %v1686, %v826
      %v1720 = vsel %vm1715, %v1687, %v828
      %v1721 = vsel %vm1715, %v1688, %v830
      %v1722 = vsel %vm1715, %v1689, %v832
      %v1723 = vsel %vm1715, %v1690, %v834
      %v1724 = vsel %vm1715, %v1691, %v836
      %v1725 = vsel %vm1715, %v1692, %v838
      %v1726 = vsel %vm1715, %v1693, %v840
      %v1727 = vsel %vm1715, %v1694, %v842
      %v1728 = vsel %vm1715, %v1695, %v844
      %v1729 = vsel %vm1715, %v1696, %v846
      %v1730 = vsel %vm1715, %v1697, %v848
      %v1731 = vsel %vm1715, %v1698, %v850
      %v1732 = vsel %vm1715, %v1699, %v852
      %v1733 = vsel %vm1715, %v1700, %v854
      %v1734 = vsel %vm1715, %v1701, %v856
      %v1735 = vsel %vm1715, %v1702, %v858
      %v1736 = vsel %vm1715, %v1703, %v860
      %v1737 = vsel %vm1715, %v1704, %v862
      %v1738 = vsel %vm1715, %v1705, %v864
      %v1739 = vsel %vm1715, %v1706, %v866
      %v1740 = vsel %vm1715, %v1707, %v868
      %v1741 = vsel %vm1715, %v1708, %v870
      %v1742 = vsel %vm1715, %v1709, %v872
      %v1743 = vsel %vm1715, %v1710, %v874
      %v1744 = vsel %vm1715, %v1711, %v876
      %v1745 = vsel %vm1715, %v1712, %v878
      %v1746 = vsel %vm1715, %v1713, %v880
      %v1747 = vsel %vm1715, %v1714, %v882
      %vm1748 = vcmask 97280
      %v1749 = vsel %vm1748, %v1716, %v948
      %v1750 = vsel %vm1748, %v1717, %v950
      %v1751 = vsel %vm1748, %v1718, %v952
      %v1752 = vsel %vm1748, %v1719, %v954
      %v1753 = vsel %vm1748, %v1720, %v956
      %v1754 = vsel %vm1748, %v1721, %v958
      %v1755 = vsel %vm1748, %v1722, %v960
      %v1756 = vsel %vm1748, %v1723, %v962
      %v1757 = vsel %vm1748, %v1724, %v964
      %v1758 = vsel %vm1748, %v1725, %v966
      %v1759 = vsel %vm1748, %v1726, %v968
      %v1760 = vsel %vm1748, %v1727, %v970
      %v1761 = vsel %vm1748, %v1728, %v972
      %v1762 = vsel %vm1748, %v1729, %v974
      %v1763 = vsel %vm1748, %v1730, %v976
      %v1764 = vsel %vm1748, %v1731, %v978
      %v1765 = vsel %vm1748, %v1732, %v980
      %v1766 = vsel %vm1748, %v1733, %v982
      %v1767 = vsel %vm1748, %v1734, %v984
      %v1768 = vsel %vm1748, %v1735, %v986
      %v1769 = vsel %vm1748, %v1736, %v988
      %v1770 = vsel %vm1748, %v1737, %v990
      %v1771 = vsel %vm1748, %v1738, %v992
      %v1772 = vsel %vm1748, %v1739, %v994
      %v1773 = vsel %vm1748, %v1740, %v996
      %v1774 = vsel %vm1748, %v1741, %v998
      %v1775 = vsel %vm1748, %v1742, %v1000
      %v1776 = vsel %vm1748, %v1743, %v1002
      %v1777 = vsel %vm1748, %v1744, %v1004
      %v1778 = vsel %vm1748, %v1745, %v1006
      %v1779 = vsel %vm1748, %v1746, %v1008
      %v1780 = vsel %vm1748, %v1747, %v1010
      %vm1781 = vcmask 130048
      %v1782 = vsel %vm1781, %v1749, %v1076
      %v1783 = vsel %vm1781, %v1750, %v1078
      %v1784 = vsel %vm1781, %v1751, %v1080
      %v1785 = vsel %vm1781, %v1752, %v1082
      %v1786 = vsel %vm1781, %v1753, %v1084
      %v1787 = vsel %vm1781, %v1754, %v1086
      %v1788 = vsel %vm1781, %v1755, %v1088
      %v1789 = vsel %vm1781, %v1756, %v1090
      %v1790 = vsel %vm1781, %v1757, %v1092
      %v1791 = vsel %vm1781, %v1758, %v1094
      %v1792 = vsel %vm1781, %v1759, %v1096
      %v1793 = vsel %vm1781, %v1760, %v1098
      %v1794 = vsel %vm1781, %v1761, %v1100
      %v1795 = vsel %vm1781, %v1762, %v1102
      %v1796 = vsel %vm1781, %v1763, %v1104
      %v1797 = vsel %vm1781, %v1764, %v1106
      %v1798 = vsel %vm1781, %v1765, %v1108
      %v1799 = vsel %vm1781, %v1766, %v1110
      %v1800 = vsel %vm1781, %v1767, %v1112
      %v1801 = vsel %vm1781, %v1768, %v1114
      %v1802 = vsel %vm1781, %v1769, %v1116
      %v1803 = vsel %vm1781, %v1770, %v1118
      %v1804 = vsel %vm1781, %v1771, %v1120
      %v1805 = vsel %vm1781, %v1772, %v1122
      %v1806 = vsel %vm1781, %v1773, %v1124
      %v1807 = vsel %vm1781, %v1774, %v1126
      %v1808 = vsel %vm1781, %v1775, %v1128
      %v1809 = vsel %vm1781, %v1776, %v1130
      %v1810 = vsel %vm1781, %v1777, %v1132
      %v1811 = vsel %vm1781, %v1778, %v1134
      %v1812 = vsel %vm1781, %v1779, %v1136
      %v1813 = vsel %vm1781, %v1780, %v1138
      %vm1814 = vcmask 162816
      %v1815 = vsel %vm1814, %v1782, %v1204
      %v1816 = vsel %vm1814, %v1783, %v1206
      %v1817 = vsel %vm1814, %v1784, %v1208
      %v1818 = vsel %vm1814, %v1785, %v1210
      %v1819 = vsel %vm1814, %v1786, %v1212
      %v1820 = vsel %vm1814, %v1787, %v1214
      %v1821 = vsel %vm1814, %v1788, %v1216
      %v1822 = vsel %vm1814, %v1789, %v1218
      %v1823 = vsel %vm1814, %v1790, %v1220
      %v1824 = vsel %vm1814, %v1791, %v1222
      %v1825 = vsel %vm1814, %v1792, %v1224
      %v1826 = vsel %vm1814, %v1793, %v1226
      %v1827 = vsel %vm1814, %v1794, %v1228
      %v1828 = vsel %vm1814, %v1795, %v1230
      %v1829 = vsel %vm1814, %v1796, %v1232
      %v1830 = vsel %vm1814, %v1797, %v1234
      %v1831 = vsel %vm1814, %v1798, %v1236
      %v1832 = vsel %vm1814, %v1799, %v1238
      %v1833 = vsel %vm1814, %v1800, %v1240
      %v1834 = vsel %vm1814, %v1801, %v1242
      %v1835 = vsel %vm1814, %v1802, %v1244
      %v1836 = vsel %vm1814, %v1803, %v1246
      %v1837 = vsel %vm1814, %v1804, %v1248
      %v1838 = vsel %vm1814, %v1805, %v1250
      %v1839 = vsel %vm1814, %v1806, %v1252
      %v1840 = vsel %vm1814, %v1807, %v1254
      %v1841 = vsel %vm1814, %v1808, %v1256
      %v1842 = vsel %vm1814, %v1809, %v1258
      %v1843 = vsel %vm1814, %v1810, %v1260
      %v1844 = vsel %vm1814, %v1811, %v1262
      %v1845 = vsel %vm1814, %v1812, %v1264
      %v1846 = vsel %vm1814, %v1813, %v1266
      %vm1847 = vcmask 195584
      %v1848 = vsel %vm1847, %v1815, %v1332
      %v1849 = vsel %vm1847, %v1816, %v1334
      %v1850 = vsel %vm1847, %v1817, %v1336
      %v1851 = vsel %vm1847, %v1818, %v1338
      %v1852 = vsel %vm1847, %v1819, %v1340
      %v1853 = vsel %vm1847, %v1820, %v1342
      %v1854 = vsel %vm1847, %v1821, %v1344
      %v1855 = vsel %vm1847, %v1822, %v1346
      %v1856 = vsel %vm1847, %v1823, %v1348
      %v1857 = vsel %vm1847, %v1824, %v1350
      %v1858 = vsel %vm1847, %v1825, %v1352
      %v1859 = vsel %vm1847, %v1826, %v1354
      %v1860 = vsel %vm1847, %v1827, %v1356
      %v1861 = vsel %vm1847, %v1828, %v1358
      %v1862 = vsel %vm1847, %v1829, %v1360
      %v1863 = vsel %vm1847, %v1830, %v1362
      %v1864 = vsel %vm1847, %v1831, %v1364
      %v1865 = vsel %vm1847, %v1832, %v1366
      %v1866 = vsel %vm1847, %v1833, %v1368
      %v1867 = vsel %vm1847, %v1834, %v1370
      %v1868 = vsel %vm1847, %v1835, %v1372
      %v1869 = vsel %vm1847, %v1836, %v1374
      %v1870 = vsel %vm1847, %v1837, %v1376
      %v1871 = vsel %vm1847, %v1838, %v1378
      %v1872 = vsel %vm1847, %v1839, %v1380
      %v1873 = vsel %vm1847, %v1840, %v1382
      %v1874 = vsel %vm1847, %v1841, %v1384
      %v1875 = vsel %vm1847, %v1842, %v1386
      %v1876 = vsel %vm1847, %v1843, %v1388
      %v1877 = vsel %vm1847, %v1844, %v1390
      %v1878 = vsel %vm1847, %v1845, %v1392
      %v1879 = vsel %vm1847, %v1846, %v1394
      %vm1880 = vcmask 228352
      %v1881 = vsel %vm1880, %v1848, %v1460
      %v1882 = vsel %vm1880, %v1849, %v1462
      %v1883 = vsel %vm1880, %v1850, %v1464
      %v1884 = vsel %vm1880, %v1851, %v1466
      %v1885 = vsel %vm1880, %v1852, %v1468
      %v1886 = vsel %vm1880, %v1853, %v1470
      %v1887 = vsel %vm1880, %v1854, %v1472
      %v1888 = vsel %vm1880, %v1855, %v1474
      %v1889 = vsel %vm1880, %v1856, %v1476
      %v1890 = vsel %vm1880, %v1857, %v1478
      %v1891 = vsel %vm1880, %v1858, %v1480
      %v1892 = vsel %vm1880, %v1859, %v1482
      %v1893 = vsel %vm1880, %v1860, %v1484
      %v1894 = vsel %vm1880, %v1861, %v1486
      %v1895 = vsel %vm1880, %v1862, %v1488
      %v1896 = vsel %vm1880, %v1863, %v1490
      %v1897 = vsel %vm1880, %v1864, %v1492
      %v1898 = vsel %vm1880, %v1865, %v1494
      %v1899 = vsel %vm1880, %v1866, %v1496
      %v1900 = vsel %vm1880, %v1867, %v1498
      %v1901 = vsel %vm1880, %v1868, %v1500
      %v1902 = vsel %vm1880, %v1869, %v1502
      %v1903 = vsel %vm1880, %v1870, %v1504
      %v1904 = vsel %vm1880, %v1871, %v1506
      %v1905 = vsel %vm1880, %v1872, %v1508
      %v1906 = vsel %vm1880, %v1873, %v1510
      %v1907 = vsel %vm1880, %v1874, %v1512
      %v1908 = vsel %vm1880, %v1875, %v1514
      %v1909 = vsel %vm1880, %v1876, %v1516
      %v1910 = vsel %vm1880, %v1877, %v1518
      %v1911 = vsel %vm1880, %v1878, %v1520
      %v1912 = vsel %vm1880, %v1879, %v1522
      %vm1913 = vcmask 261120
      %v1914 = vsel %vm1913, %v1881, %v1588
      %v1915 = vsel %vm1913, %v1882, %v1590
      %v1916 = vsel %vm1913, %v1883, %v1592
      %v1917 = vsel %vm1913, %v1884, %v1594
      %v1918 = vsel %vm1913, %v1885, %v1596
      %v1919 = vsel %vm1913, %v1886, %v1598
      %v1920 = vsel %vm1913, %v1887, %v1600
      %v1921 = vsel %vm1913, %v1888, %v1602
      %v1922 = vsel %vm1913, %v1889, %v1604
      %v1923 = vsel %vm1913, %v1890, %v1606
      %v1924 = vsel %vm1913, %v1891, %v1608
      %v1925 = vsel %vm1913, %v1892, %v1610
      %v1926 = vsel %vm1913, %v1893, %v1612
      %v1927 = vsel %vm1913, %v1894, %v1614
      %v1928 = vsel %vm1913, %v1895, %v1616
      %v1929 = vsel %vm1913, %v1896, %v1618
      %v1930 = vsel %vm1913, %v1897, %v1620
      %v1931 = vsel %vm1913, %v1898, %v1622
      %v1932 = vsel %vm1913, %v1899, %v1624
      %v1933 = vsel %vm1913, %v1900, %v1626
      %v1934 = vsel %vm1913, %v1901, %v1628
      %v1935 = vsel %vm1913, %v1902, %v1630
      %v1936 = vsel %vm1913, %v1903, %v1632
      %v1937 = vsel %vm1913, %v1904, %v1634
      %v1938 = vsel %vm1913, %v1905, %v1636
      %v1939 = vsel %vm1913, %v1906, %v1638
      %v1940 = vsel %vm1913, %v1907, %v1640
      %v1941 = vsel %vm1913, %v1908, %v1642
      %v1942 = vsel %vm1913, %v1909, %v1644
      %v1943 = vsel %vm1913, %v1910, %v1646
      %v1944 = vsel %vm1913, %v1911, %v1648
      %v1945 = vsel %vm1913, %v1912, %v1650
      %v1946 = vpack.c.bf16 %v1915, %v1914
      %v1947 = vpack.c.bf16 %v1917, %v1916
      %v1948 = vpack.c.bf16 %v1919, %v1918
      %v1949 = vpack.c.bf16 %v1921, %v1920
      %v1950 = vpack.c.bf16 %v1923, %v1922
      %v1951 = vpack.c.bf16 %v1925, %v1924
      %v1952 = vpack.c.bf16 %v1927, %v1926
      %v1953 = vpack.c.bf16 %v1929, %v1928
      %v1954 = vpack.c.bf16 %v1931, %v1930
      %v1955 = vpack.c.bf16 %v1933, %v1932
      %v1956 = vpack.c.bf16 %v1935, %v1934
      %v1957 = vpack.c.bf16 %v1937, %v1936
      %v1958 = vpack.c.bf16 %v1939, %v1938
      %v1959 = vpack.c.bf16 %v1941, %v1940
      %v1960 = vpack.c.bf16 %v1943, %v1942
      %v1961 = vpack.c.bf16 %v1945, %v1944
      %v1962 = vld [vmem:[%s1] sm:$0xf]
      %v1963 = vld [vmem:[%s1 + $0x4] sm:$0xf]
      %v1964 = vld [vmem:[%s1 + $0x8] sm:$0xf]
      %v1965 = vld [vmem:[%s1 + $0xc] sm:$0xf]
      %v1966 = vld [vmem:[%s1 + $0x10] sm:$0x3]
      %v1972 = vunpack.c.l.b16 %v1962
      %v1973 = vunpack.c.l.b16 %v1963
      %v1974 = vunpack.c.l.b16 %v1964
      %v1975 = vunpack.c.l.b16 %v1965
      %v1976 = vunpack.c.l.b16 %v1966
      %v1977 = vpack.c.b16 %v1973, %v1972
      %v1978 = vpack.c.b16 %v1975, %v1974
      %v1979 = vpack.c.b16 %v1976, %v1976
      %vm1982 = vcmask 293888
      %v1984 = vsel %vm1982, %v1946, 0
      %v1987 = vsel %vm1982, %v1947, 0
      %v1990 = vsel %vm1982, %v1948, 0
      %v1993 = vsel %vm1982, %v1949, 0
      %v1996 = vsel %vm1982, %v1950, 0
      %v1999 = vsel %vm1982, %v1951, 0
      %v2002 = vsel %vm1982, %v1952, 0
      %v2005 = vsel %vm1982, %v1953, 0
      %v2008 = vsel %vm1982, %v1954, 0
      %v2011 = vsel %vm1982, %v1955, 0
      %v2014 = vsel %vm1982, %v1956, 0
      %v2017 = vsel %vm1982, %v1957, 0
      %v2020 = vsel %vm1982, %v1958, 0
      %v2023 = vsel %vm1982, %v1959, 0
      %v2026 = vsel %vm1982, %v1960, 0
      %v2029 = vsel %vm1982, %v1961, 0
      %vm2031 = vcmask 1041408
      %v2033 = vsel %vm2031, %v1979, 0
      %2035 = vmatprep.subr.bf16.mxu0 0
      %2036 = vmatpush1.bf16.msra.mxu0 0
      %2037 = vmatprep.subr.bf16.mxu0 0
      %2038 = vmatpush1.bf16.msra.mxu0 0
      %2039 = vmatprep.subr.bf16.mxu0 0
      %2040 = vmatpush1.bf16.msra.mxu0 0
      %2041 = vmatprep.subr.bf16.mxu0 0
      %2042 = vmatpush1.bf16.msra.mxu0 0
      %2043 = vmatprep.subr.bf16.mxu0 0
      %2044 = vmatpush1.bf16.msra.mxu0 0
      %2045 = vmatprep.subr.bf16.mxu0 0
      %2046 = vmatpush1.bf16.msra.mxu0 %v2033
      %2047 = vmatprep.subr.bf16.mxu0 0
      %2048 = vmatpush1.bf16.msra.mxu0 %v1978
      %2049 = vmatprep.subr.bf16.mxu0 0
      %2050 = vmatpush1.bf16.msra.mxu0 %v1977
      %2051 = vmatprep.subr.bf16.mxu0 0
      %2052 = vmatpush2.bf16.msra.mxu0 0
      %2053 = vmatprep.subr.bf16.mxu0 0
      %2054 = vmatpush2.bf16.msra.mxu0 0
      %2055 = vmatprep.subr.bf16.mxu0 0
      %2056 = vmatpush2.bf16.msra.mxu0 0
      %2057 = vmatprep.subr.bf16.mxu0 0
      %2058 = vmatpush2.bf16.msra.mxu0 0
      %2059 = vmatprep.subr.bf16.mxu0 0
      %2060 = vmatpush2.bf16.msra.mxu0 0
      %2061 = vmatprep.subr.bf16.mxu0 0
      %2062 = vmatpush2.bf16.msra.mxu0 0
      %2063 = vmatprep.subr.bf16.mxu0 0
      %2064 = vmatpush2.bf16.msra.mxu0 0
      %2065 = vmatprep.subr.bf16.mxu0 0
      %2066 = vmatpush2.bf16.msra.mxu0 0
      %2067 = vmatprep.mubr.bf16.mxu0 0
      %2068 = vmatmul.mubr.bf16.gmra.mxu0 %v1984
      %v2069 = vpop.f32.mrf.mxu0
      %v2070 = vadd.f32 0.0, %v2069
      %v2071 = vpop.f32.mrf.mxu0
      %v2072 = vpop.f32.mrf.mxu0
      %v2073 = vadd.f32 0.0, %v2072
      %v2074 = vpop.f32.mrf.mxu0
      %2075 = vmatprep.mubr.bf16.mxu0 0
      %2076 = vmatmul.mubr.bf16.gmra.mxu0 %v1987
      %v2077 = vpop.f32.mrf.mxu0
      %v2078 = vadd.f32 0.0, %v2077
      %v2079 = vpop.f32.mrf.mxu0
      %v2080 = vpop.f32.mrf.mxu0
      %v2081 = vadd.f32 0.0, %v2080
      %v2082 = vpop.f32.mrf.mxu0
      %2083 = vmatprep.mubr.bf16.mxu0 0
      %2084 = vmatmul.mubr.bf16.gmra.mxu0 %v1990
      %v2085 = vpop.f32.mrf.mxu0
      %v2086 = vadd.f32 0.0, %v2085
      %v2087 = vpop.f32.mrf.mxu0
      %v2088 = vpop.f32.mrf.mxu0
      %v2089 = vadd.f32 0.0, %v2088
      %v2090 = vpop.f32.mrf.mxu0
      %2091 = vmatprep.mubr.bf16.mxu0 0
      %2092 = vmatmul.mubr.bf16.gmra.mxu0 %v1993
      %v2093 = vpop.f32.mrf.mxu0
      %v2094 = vadd.f32 0.0, %v2093
      %v2095 = vpop.f32.mrf.mxu0
      %v2096 = vpop.f32.mrf.mxu0
      %v2097 = vadd.f32 0.0, %v2096
      %v2098 = vpop.f32.mrf.mxu0
      %2099 = vmatprep.mubr.bf16.mxu0 0
      %2100 = vmatmul.mubr.bf16.gmra.mxu0 %v1996
      %v2101 = vpop.f32.mrf.mxu0
      %v2102 = vadd.f32 0.0, %v2101
      %v2103 = vpop.f32.mrf.mxu0
      %v2104 = vpop.f32.mrf.mxu0
      %v2105 = vadd.f32 0.0, %v2104
      %v2106 = vpop.f32.mrf.mxu0
      %2107 = vmatprep.mubr.bf16.mxu0 0
      %2108 = vmatmul.mubr.bf16.gmra.mxu0 %v1999
      %v2109 = vpop.f32.mrf.mxu0
      %v2110 = vadd.f32 0.0, %v2109
      %v2111 = vpop.f32.mrf.mxu0
      %v2112 = vpop.f32.mrf.mxu0
      %v2113 = vadd.f32 0.0, %v2112
      %v2114 = vpop.f32.mrf.mxu0
      %2115 = vmatprep.mubr.bf16.mxu0 0
      %2116 = vmatmul.mubr.bf16.gmra.mxu0 %v2002
      %v2117 = vpop.f32.mrf.mxu0
      %v2118 = vadd.f32 0.0, %v2117
      %v2119 = vpop.f32.mrf.mxu0
      %v2120 = vpop.f32.mrf.mxu0
      %v2121 = vadd.f32 0.0, %v2120
      %v2122 = vpop.f32.mrf.mxu0
      %2123 = vmatprep.mubr.bf16.mxu0 0
      %2124 = vmatmul.mubr.bf16.gmra.mxu0 %v2005
      %v2125 = vpop.f32.mrf.mxu0
      %v2126 = vadd.f32 0.0, %v2125
      %v2127 = vpop.f32.mrf.mxu0
      %v2128 = vpop.f32.mrf.mxu0
      %v2129 = vadd.f32 0.0, %v2128
      %v2130 = vpop.f32.mrf.mxu0
      %2131 = vmatprep.mubr.bf16.mxu0 0
      %2132 = vmatmul.mubr.bf16.gmra.mxu0 %v2008
      %v2133 = vpop.f32.mrf.mxu0
      %v2134 = vadd.f32 0.0, %v2133
      %v2135 = vpop.f32.mrf.mxu0
      %v2136 = vpop.f32.mrf.mxu0
      %v2137 = vadd.f32 0.0, %v2136
      %v2138 = vpop.f32.mrf.mxu0
      %2139 = vmatprep.mubr.bf16.mxu0 0
      %2140 = vmatmul.mubr.bf16.gmra.mxu0 %v2011
      %v2141 = vpop.f32.mrf.mxu0
      %v2142 = vadd.f32 0.0, %v2141
      %v2143 = vpop.f32.mrf.mxu0
      %v2144 = vpop.f32.mrf.mxu0
      %v2145 = vadd.f32 0.0, %v2144
      %v2146 = vpop.f32.mrf.mxu0
      %2147 = vmatprep.mubr.bf16.mxu0 0
      %2148 = vmatmul.mubr.bf16.gmra.mxu0 %v2014
      %v2149 = vpop.f32.mrf.mxu0
      %v2150 = vadd.f32 0.0, %v2149
      %v2151 = vpop.f32.mrf.mxu0
      %v2152 = vpop.f32.mrf.mxu0
      %v2153 = vadd.f32 0.0, %v2152
      %v2154 = vpop.f32.mrf.mxu0
      %2155 = vmatprep.mubr.bf16.mxu0 0
      %2156 = vmatmul.mubr.bf16.gmra.mxu0 %v2017
      %v2157 = vpop.f32.mrf.mxu0
      %v2158 = vadd.f32 0.0, %v2157
      %v2159 = vpop.f32.mrf.mxu0
      %v2160 = vpop.f32.mrf.mxu0
      %v2161 = vadd.f32 0.0, %v2160
      %v2162 = vpop.f32.mrf.mxu0
      %2163 = vmatprep.mubr.bf16.mxu0 0
      %2164 = vmatmul.mubr.bf16.gmra.mxu0 %v2020
      %v2165 = vpop.f32.mrf.mxu0
      %v2166 = vadd.f32 0.0, %v2165
      %v2167 = vpop.f32.mrf.mxu0
      %v2168 = vpop.f32.mrf.mxu0
      %v2169 = vadd.f32 0.0, %v2168
      %v2170 = vpop.f32.mrf.mxu0
      %2171 = vmatprep.mubr.bf16.mxu0 0
      %2172 = vmatmul.mubr.bf16.gmra.mxu0 %v2023
      %v2173 = vpop.f32.mrf.mxu0
      %v2174 = vadd.f32 0.0, %v2173
      %v2175 = vpop.f32.mrf.mxu0
      %v2176 = vpop.f32.mrf.mxu0
      %v2177 = vadd.f32 0.0, %v2176
      %v2178 = vpop.f32.mrf.mxu0
      %2179 = vmatprep.mubr.bf16.mxu0 0
      %2180 = vmatmul.mubr.bf16.gmra.mxu0 %v2026
      %v2181 = vpop.f32.mrf.mxu0
      %v2182 = vadd.f32 0.0, %v2181
      %v2183 = vpop.f32.mrf.mxu0
      %v2184 = vpop.f32.mrf.mxu0
      %v2185 = vadd.f32 0.0, %v2184
      %v2186 = vpop.f32.mrf.mxu0
      %2187 = vmatprep.mubr.bf16.mxu0 0
      %2188 = vmatmul.mubr.bf16.gmra.mxu0 %v2029
      %v2189 = vpop.f32.mrf.mxu0
      %v2190 = vadd.f32 0.0, %v2189
      %v2191 = vpop.f32.mrf.mxu0
      %v2192 = vpop.f32.mrf.mxu0
      %v2193 = vadd.f32 0.0, %v2192
      %v2194 = vpop.f32.mrf.mxu0
      %2195 = vdwg.mxu0
      %2196 = vst.msk [vmem:[%s244] sm:$0xff] %vm1715, %v2070
      %2197 = vst.msk [vmem:[%s244 + $0x8] sm:$0xff] %vm1715, %v2073
      %2198 = vst.msk [vmem:[%s244 + $0x10] sm:$0xff] %vm1715, %v2078
      %2199 = vst.msk [vmem:[%s244 + $0x18] sm:$0xff] %vm1715, %v2081
      %2200 = vst.msk [vmem:[%s244 + $0x20] sm:$0xff] %vm1715, %v2086
      %2201 = vst.msk [vmem:[%s244 + $0x28] sm:$0xff] %vm1715, %v2089
      %2202 = vst.msk [vmem:[%s244 + $0x30] sm:$0xff] %vm1715, %v2094
      %2203 = vst.msk [vmem:[%s244 + $0x38] sm:$0xff] %vm1715, %v2097
      %2204 = vst.msk [vmem:[%s244 + $0x40] sm:$0xff] %vm1715, %v2102
      %2205 = vst.msk [vmem:[%s244 + $0x48] sm:$0xff] %vm1715, %v2105
      %2206 = vst.msk [vmem:[%s244 + $0x50] sm:$0xff] %vm1715, %v2110
      %2207 = vst.msk [vmem:[%s244 + $0x58] sm:$0xff] %vm1715, %v2113
      %2208 = vst.msk [vmem:[%s244 + $0x60] sm:$0xff] %vm1715, %v2118
      %2209 = vst.msk [vmem:[%s244 + $0x68] sm:$0xff] %vm1715, %v2121
      %2210 = vst.msk [vmem:[%s244 + $0x70] sm:$0xff] %vm1715, %v2126
      %2211 = vst.msk [vmem:[%s244 + $0x78] sm:$0xff] %vm1715, %v2129
      %2212 = vst.msk [vmem:[%s244 + $0x80] sm:$0xff] %vm1715, %v2134
      %2213 = vst.msk [vmem:[%s244 + $0x88] sm:$0xff] %vm1715, %v2137
      %2214 = vst.msk [vmem:[%s244 + $0x90] sm:$0xff] %vm1715, %v2142
      %2215 = vst.msk [vmem:[%s244 + $0x98] sm:$0xff] %vm1715, %v2145
      %2216 = vst.msk [vmem:[%s244 + $0xa0] sm:$0xff] %vm1715, %v2150
      %2217 = vst.msk [vmem:[%s244 + $0xa8] sm:$0xff] %vm1715, %v2153
      %2218 = vst.msk [vmem:[%s244 + $0xb0] sm:$0xff] %vm1715, %v2158
      %2219 = vst.msk [vmem:[%s244 + $0xb8] sm:$0xff] %vm1715, %v2161
      %2220 = vst.msk [vmem:[%s244 + $0xc0] sm:$0xff] %vm1715, %v2166
      %2221 = vst.msk [vmem:[%s244 + $0xc8] sm:$0xff] %vm1715, %v2169
      %2222 = vst.msk [vmem:[%s244 + $0xd0] sm:$0xff] %vm1715, %v2174
      %2223 = vst.msk [vmem:[%s244 + $0xd8] sm:$0xff] %vm1715, %v2177
      %2224 = vst.msk [vmem:[%s244 + $0xe0] sm:$0xff] %vm1715, %v2182
      %2225 = vst.msk [vmem:[%s244 + $0xe8] sm:$0xff] %vm1715, %v2185
      %2226 = vst.msk [vmem:[%s244 + $0xf0] sm:$0xff] %vm1715, %v2190
      %2227 = vst.msk [vmem:[%s244 + $0xf8] sm:$0xff] %vm1715, %v2193
      %v2228 = vsel %vm1715, %v2070, 0.0
      %v2229 = vsel %vm1715, %v2073, 0.0
      %v2230 = vadd.f32 %v2228, %v2229
      %v2231 = vsel %vm1715, %v2078, 0.0
      %v2232 = vadd.f32 %v2230, %v2231
      %v2233 = vsel %vm1715, %v2081, 0.0
      %v2234 = vadd.f32 %v2232, %v2233
      %v2235 = vsel %vm1715, %v2086, 0.0
      %v2236 = vadd.f32 %v2234, %v2235
      %v2237 = vsel %vm1715, %v2089, 0.0
      %v2238 = vadd.f32 %v2236, %v2237
      %v2239 = vsel %vm1715, %v2094, 0.0
      %v2240 = vadd.f32 %v2238, %v2239
      %v2241 = vsel %vm1715, %v2097, 0.0
      %v2242 = vadd.f32 %v2240, %v2241
      %v2243 = vsel %vm1715, %v2102, 0.0
      %v2244 = vadd.f32 %v2242, %v2243
      %v2245 = vsel %vm1715, %v2105, 0.0
      %v2246 = vadd.f32 %v2244, %v2245
      %v2247 = vsel %vm1715, %v2110, 0.0
      %v2248 = vadd.f32 %v2246, %v2247
      %v2249 = vsel %vm1715, %v2113, 0.0
      %v2250 = vadd.f32 %v2248, %v2249
      %v2251 = vsel %vm1715, %v2118, 0.0
      %v2252 = vadd.f32 %v2250, %v2251
      %v2253 = vsel %vm1715, %v2121, 0.0
      %v2254 = vadd.f32 %v2252, %v2253
      %v2255 = vsel %vm1715, %v2126, 0.0
      %v2256 = vadd.f32 %v2254, %v2255
      %v2257 = vsel %vm1715, %v2129, 0.0
      %v2258 = vadd.f32 %v2256, %v2257
      %v2259 = vsel %vm1715, %v2134, 0.0
      %v2260 = vadd.f32 %v2258, %v2259
      %v2261 = vsel %vm1715, %v2137, 0.0
      %v2262 = vadd.f32 %v2260, %v2261
      %v2263 = vsel %vm1715, %v2142, 0.0
      %v2264 = vadd.f32 %v2262, %v2263
      %v2265 = vsel %vm1715, %v2145, 0.0
      %v2266 = vadd.f32 %v2264, %v2265
      %v2267 = vsel %vm1715, %v2150, 0.0
      %v2268 = vadd.f32 %v2266, %v2267
      %v2269 = vsel %vm1715, %v2153, 0.0
      %v2270 = vadd.f32 %v2268, %v2269
      %v2271 = vsel %vm1715, %v2158, 0.0
      %v2272 = vadd.f32 %v2270, %v2271
      %v2273 = vsel %vm1715, %v2161, 0.0
      %v2274 = vadd.f32 %v2272, %v2273
      %v2275 = vsel %vm1715, %v2166, 0.0
      %v2276 = vadd.f32 %v2274, %v2275
      %v2277 = vsel %vm1715, %v2169, 0.0
      %v2278 = vadd.f32 %v2276, %v2277
      %v2279 = vsel %vm1715, %v2174, 0.0
      %v2280 = vadd.f32 %v2278, %v2279
      %v2281 = vsel %vm1715, %v2177, 0.0
      %v2282 = vadd.f32 %v2280, %v2281
      %v2283 = vsel %vm1715, %v2182, 0.0
      %v2284 = vadd.f32 %v2282, %v2283
      %v2285 = vsel %vm1715, %v2185, 0.0
      %v2286 = vadd.f32 %v2284, %v2285
      %v2287 = vsel %vm1715, %v2190, 0.0
      %v2288 = vadd.f32 %v2286, %v2287
      %v2289 = vsel %vm1715, %v2193, 0.0
      %v2290 = vadd.f32 %v2288, %v2289
      %v2291 = vrot.slane %v2290, 4
      %v2292 = vadd.f32 %v2290, %v2291
      %v2293 = vrot.slane %v2292, 2
      %v2294 = vadd.f32 %v2292, %v2293
      %v2295 = vrot.slane %v2294, 1
      %v2296 = vadd.f32 %v2294, %v2295
      %v2297 = vmul.f32 %v2070, %v2070
      %v2298 = vmul.f32 %v2073, %v2073
      %v2299 = vmul.f32 %v2078, %v2078
      %v2300 = vmul.f32 %v2081, %v2081
      %v2301 = vmul.f32 %v2086, %v2086
      %v2302 = vmul.f32 %v2089, %v2089
      %v2303 = vmul.f32 %v2094, %v2094
      %v2304 = vmul.f32 %v2097, %v2097
      %v2305 = vmul.f32 %v2102, %v2102
      %v2306 = vmul.f32 %v2105, %v2105
      %v2307 = vmul.f32 %v2110, %v2110
      %v2308 = vmul.f32 %v2113, %v2113
      %v2309 = vmul.f32 %v2118, %v2118
      %v2310 = vmul.f32 %v2121, %v2121
      %v2311 = vmul.f32 %v2126, %v2126
      %v2312 = vmul.f32 %v2129, %v2129
      %v2313 = vmul.f32 %v2134, %v2134
      %v2314 = vmul.f32 %v2137, %v2137
      %v2315 = vmul.f32 %v2142, %v2142
      %v2316 = vmul.f32 %v2145, %v2145
      %v2317 = vmul.f32 %v2150, %v2150
      %v2318 = vmul.f32 %v2153, %v2153
      %v2319 = vmul.f32 %v2158, %v2158
      %v2320 = vmul.f32 %v2161, %v2161
      %v2321 = vmul.f32 %v2166, %v2166
      %v2322 = vmul.f32 %v2169, %v2169
      %v2323 = vmul.f32 %v2174, %v2174
      %v2324 = vmul.f32 %v2177, %v2177
      %v2325 = vmul.f32 %v2182, %v2182
      %v2326 = vmul.f32 %v2185, %v2185
      %v2327 = vmul.f32 %v2190, %v2190
      %v2328 = vmul.f32 %v2193, %v2193
      %v2329 = vsel %vm1715, %v2297, 0.0
      %v2330 = vsel %vm1715, %v2298, 0.0
      %v2331 = vadd.f32 %v2329, %v2330
      %v2332 = vsel %vm1715, %v2299, 0.0
      %v2333 = vadd.f32 %v2331, %v2332
      %v2334 = vsel %vm1715, %v2300, 0.0
      %v2335 = vadd.f32 %v2333, %v2334
      %v2336 = vsel %vm1715, %v2301, 0.0
      %v2337 = vadd.f32 %v2335, %v2336
      %v2338 = vsel %vm1715, %v2302, 0.0
      %v2339 = vadd.f32 %v2337, %v2338
      %v2340 = vsel %vm1715, %v2303, 0.0
      %v2341 = vadd.f32 %v2339, %v2340
      %v2342 = vsel %vm1715, %v2304, 0.0
      %v2343 = vadd.f32 %v2341, %v2342
      %v2344 = vsel %vm1715, %v2305, 0.0
      %v2345 = vadd.f32 %v2343, %v2344
      %v2346 = vsel %vm1715, %v2306, 0.0
      %v2347 = vadd.f32 %v2345, %v2346
      %v2348 = vsel %vm1715, %v2307, 0.0
      %v2349 = vadd.f32 %v2347, %v2348
      %v2350 = vsel %vm1715, %v2308, 0.0
      %v2351 = vadd.f32 %v2349, %v2350
      %v2352 = vsel %vm1715, %v2309, 0.0
      %v2353 = vadd.f32 %v2351, %v2352
      %v2354 = vsel %vm1715, %v2310, 0.0
      %v2355 = vadd.f32 %v2353, %v2354
      %v2356 = vsel %vm1715, %v2311, 0.0
      %v2357 = vadd.f32 %v2355, %v2356
      %v2358 = vsel %vm1715, %v2312, 0.0
      %v2359 = vadd.f32 %v2357, %v2358
      %v2360 = vsel %vm1715, %v2313, 0.0
      %v2361 = vadd.f32 %v2359, %v2360
      %v2362 = vsel %vm1715, %v2314, 0.0
      %v2363 = vadd.f32 %v2361, %v2362
      %v2364 = vsel %vm1715, %v2315, 0.0
      %v2365 = vadd.f32 %v2363, %v2364
      %v2366 = vsel %vm1715, %v2316, 0.0
      %v2367 = vadd.f32 %v2365, %v2366
      %v2368 = vsel %vm1715, %v2317, 0.0
      %v2369 = vadd.f32 %v2367, %v2368
      %v2370 = vsel %vm1715, %v2318, 0.0
      %v2371 = vadd.f32 %v2369, %v2370
      %v2372 = vsel %vm1715, %v2319, 0.0
      %v2373 = vadd.f32 %v2371, %v2372
      %v2374 = vsel %vm1715, %v2320, 0.0
      %v2375 = vadd.f32 %v2373, %v2374
      %v2376 = vsel %vm1715, %v2321, 0.0
      %v2377 = vadd.f32 %v2375, %v2376
      %v2378 = vsel %vm1715, %v2322, 0.0
      %v2379 = vadd.f32 %v2377, %v2378
      %v2380 = vsel %vm1715, %v2323, 0.0
      %v2381 = vadd.f32 %v2379, %v2380
      %v2382 = vsel %vm1715, %v2324, 0.0
      %v2383 = vadd.f32 %v2381, %v2382
      %v2384 = vsel %vm1715, %v2325, 0.0
      %v2385 = vadd.f32 %v2383, %v2384
      %v2386 = vsel %vm1715, %v2326, 0.0
      %v2387 = vadd.f32 %v2385, %v2386
      %v2388 = vsel %vm1715, %v2327, 0.0
      %v2389 = vadd.f32 %v2387, %v2388
      %v2390 = vsel %vm1715, %v2328, 0.0
      %v2391 = vadd.f32 %v2389, %v2390
      %v2392 = vrot.slane %v2391, 4
      %v2393 = vadd.f32 %v2391, %v2392
      %v2394 = vrot.slane %v2393, 2
      %v2395 = vadd.f32 %v2393, %v2394
      %v2396 = vrot.slane %v2395, 1
      %v2397 = vadd.f32 %v2395, %v2396
      %vm2398 = vcmask 57344
      %2399 = vst.msk [vmem:[%s253] sm:$0x1] %vm2398, %v2296
      %2400 = vst.msk [vmem:[%s253 + $0x1] sm:$0x1] %vm2398, %v2397
      %2433 = vrot.lane.b32.xlu0 %v2070, 120
      %v2434 = vpop.permute.xlu0 %2433
      %2435 = vrot.lane.b32.xlu0 %v2073, 120
      %v2436 = vpop.permute.xlu0 %2435
      %2437 = vrot.lane.b32.xlu0 %v2078, 120
      %v2438 = vpop.permute.xlu0 %2437
      %2439 = vrot.lane.b32.xlu0 %v2081, 120
      %v2440 = vpop.permute.xlu0 %2439
      %2441 = vrot.lane.b32.xlu0 %v2086, 120
      %v2442 = vpop.permute.xlu0 %2441
      %2443 = vrot.lane.b32.xlu0 %v2089, 120
      %v2444 = vpop.permute.xlu0 %2443
      %2445 = vrot.lane.b32.xlu0 %v2094, 120
      %v2446 = vpop.permute.xlu0 %2445
      %2447 = vrot.lane.b32.xlu0 %v2097, 120
      %v2448 = vpop.permute.xlu0 %2447
      %2449 = vrot.lane.b32.xlu0 %v2102, 120
      %v2450 = vpop.permute.xlu0 %2449
      %2451 = vrot.lane.b32.xlu0 %v2105, 120
      %v2452 = vpop.permute.xlu0 %2451
      %2453 = vrot.lane.b32.xlu0 %v2110, 120
      %v2454 = vpop.permute.xlu0 %2453
      %2455 = vrot.lane.b32.xlu0 %v2113, 120
      %v2456 = vpop.permute.xlu0 %2455
      %2457 = vrot.lane.b32.xlu0 %v2118, 120
      %v2458 = vpop.permute.xlu0 %2457
      %2459 = vrot.lane.b32.xlu0 %v2121, 120
      %v2460 = vpop.permute.xlu0 %2459
      %2461 = vrot.lane.b32.xlu0 %v2126, 120
      %v2462 = vpop.permute.xlu0 %2461
      %2463 = vrot.lane.b32.xlu0 %v2129, 120
      %v2464 = vpop.permute.xlu0 %2463
      %2465 = vrot.lane.b32.xlu0 %v2134, 120
      %v2466 = vpop.permute.xlu0 %2465
      %2467 = vrot.lane.b32.xlu0 %v2137, 120
      %v2468 = vpop.permute.xlu0 %2467
      %2469 = vrot.lane.b32.xlu0 %v2142, 120
      %v2470 = vpop.permute.xlu0 %2469
      %2471 = vrot.lane.b32.xlu0 %v2145, 120
      %v2472 = vpop.permute.xlu0 %2471
      %2473 = vrot.lane.b32.xlu0 %v2150, 120
      %v2474 = vpop.permute.xlu0 %2473
      %2475 = vrot.lane.b32.xlu0 %v2153, 120
      %v2476 = vpop.permute.xlu0 %2475
      %2477 = vrot.lane.b32.xlu0 %v2158, 120
      %v2478 = vpop.permute.xlu0 %2477
      %2479 = vrot.lane.b32.xlu0 %v2161, 120
      %v2480 = vpop.permute.xlu0 %2479
      %2481 = vrot.lane.b32.xlu0 %v2166, 120
      %v2482 = vpop.permute.xlu0 %2481
      %2483 = vrot.lane.b32.xlu0 %v2169, 120
      %v2484 = vpop.permute.xlu0 %2483
      %2485 = vrot.lane.b32.xlu0 %v2174, 120
      %v2486 = vpop.permute.xlu0 %2485
      %2487 = vrot.lane.b32.xlu0 %v2177, 120
      %v2488 = vpop.permute.xlu0 %2487
      %2489 = vrot.lane.b32.xlu0 %v2182, 120
      %v2490 = vpop.permute.xlu0 %2489
      %2491 = vrot.lane.b32.xlu0 %v2185, 120
      %v2492 = vpop.permute.xlu0 %2491
      %2493 = vrot.lane.b32.xlu0 %v2190, 120
      %v2494 = vpop.permute.xlu0 %2493
      %2495 = vrot.lane.b32.xlu0 %v2193, 120
      %v2496 = vpop.permute.xlu0 %2495
      %2529 = vst.msk [vmem:[%s249] sm:$0xff] %vm1715, %v2434
      %2530 = vst.msk [vmem:[%s249 + $0x8] sm:$0xff] %vm1715, %v2436
      %2531 = vst.msk [vmem:[%s249 + $0x10] sm:$0xff] %vm1715, %v2438
      %2532 = vst.msk [vmem:[%s249 + $0x18] sm:$0xff] %vm1715, %v2440
      %2533 = vst.msk [vmem:[%s249 + $0x20] sm:$0xff] %vm1715, %v2442
      %2534 = vst.msk [vmem:[%s249 + $0x28] sm:$0xff] %vm1715, %v2444
      %2535 = vst.msk [vmem:[%s249 + $0x30] sm:$0xff] %vm1715, %v2446
      %2536 = vst.msk [vmem:[%s249 + $0x38] sm:$0xff] %vm1715, %v2448
      %2537 = vst.msk [vmem:[%s249 + $0x40] sm:$0xff] %vm1715, %v2450
      %2538 = vst.msk [vmem:[%s249 + $0x48] sm:$0xff] %vm1715, %v2452
      %2539 = vst.msk [vmem:[%s249 + $0x50] sm:$0xff] %vm1715, %v2454
      %2540 = vst.msk [vmem:[%s249 + $0x58] sm:$0xff] %vm1715, %v2456
      %2541 = vst.msk [vmem:[%s249 + $0x60] sm:$0xff] %vm1715, %v2458
      %2542 = vst.msk [vmem:[%s249 + $0x68] sm:$0xff] %vm1715, %v2460
      %2543 = vst.msk [vmem:[%s249 + $0x70] sm:$0xff] %vm1715, %v2462
      %2544 = vst.msk [vmem:[%s249 + $0x78] sm:$0xff] %vm1715, %v2464
      %2545 = vst.msk [vmem:[%s249 + $0x80] sm:$0xff] %vm1715, %v2466
      %2546 = vst.msk [vmem:[%s249 + $0x88] sm:$0xff] %vm1715, %v2468
      %2547 = vst.msk [vmem:[%s249 + $0x90] sm:$0xff] %vm1715, %v2470
      %2548 = vst.msk [vmem:[%s249 + $0x98] sm:$0xff] %vm1715, %v2472
      %2549 = vst.msk [vmem:[%s249 + $0xa0] sm:$0xff] %vm1715, %v2474
      %2550 = vst.msk [vmem:[%s249 + $0xa8] sm:$0xff] %vm1715, %v2476
      %2551 = vst.msk [vmem:[%s249 + $0xb0] sm:$0xff] %vm1715, %v2478
      %2552 = vst.msk [vmem:[%s249 + $0xb8] sm:$0xff] %vm1715, %v2480
      %2553 = vst.msk [vmem:[%s249 + $0xc0] sm:$0xff] %vm1715, %v2482
      %2554 = vst.msk [vmem:[%s249 + $0xc8] sm:$0xff] %vm1715, %v2484
      %2555 = vst.msk [vmem:[%s249 + $0xd0] sm:$0xff] %vm1715, %v2486
      %2556 = vst.msk [vmem:[%s249 + $0xd8] sm:$0xff] %vm1715, %v2488
      %2557 = vst.msk [vmem:[%s249 + $0xe0] sm:$0xff] %vm1715, %v2490
      %2558 = vst.msk [vmem:[%s249 + $0xe8] sm:$0xff] %vm1715, %v2492
      %2559 = vst.msk [vmem:[%s249 + $0xf0] sm:$0xff] %vm1715, %v2494
      %2560 = vst.msk [vmem:[%s249 + $0xf8] sm:$0xff] %vm1715, %v2496
      %vm2561 = vcmask 130112
      %v2562 = vsel %vm2561, %v2070, 0.0
      %v2563 = vsel %vm2561, %v2073, 0.0
      %v2564 = vadd.f32 %v2562, %v2563
      %v2565 = vsel %vm2561, %v2078, 0.0
      %v2566 = vadd.f32 %v2564, %v2565
      %v2567 = vsel %vm2561, %v2081, 0.0
      %v2568 = vadd.f32 %v2566, %v2567
      %v2569 = vsel %vm2561, %v2086, 0.0
      %v2570 = vadd.f32 %v2568, %v2569
      %v2571 = vsel %vm2561, %v2089, 0.0
      %v2572 = vadd.f32 %v2570, %v2571
      %v2573 = vsel %vm2561, %v2094, 0.0
      %v2574 = vadd.f32 %v2572, %v2573
      %v2575 = vsel %vm2561, %v2097, 0.0
      %v2576 = vadd.f32 %v2574, %v2575
      %v2577 = vsel %vm2561, %v2102, 0.0
      %v2578 = vadd.f32 %v2576, %v2577
      %v2579 = vsel %vm2561, %v2105, 0.0
      %v2580 = vadd.f32 %v2578, %v2579
      %v2581 = vsel %vm2561, %v2110, 0.0
      %v2582 = vadd.f32 %v2580, %v2581
      %v2583 = vsel %vm2561, %v2113, 0.0
      %v2584 = vadd.f32 %v2582, %v2583
      %v2585 = vsel %vm2561, %v2118, 0.0
      %v2586 = vadd.f32 %v2584, %v2585
      %v2587 = vsel %vm2561, %v2121, 0.0
      %v2588 = vadd.f32 %v2586, %v2587
      %v2589 = vsel %vm2561, %v2126, 0.0
      %v2590 = vadd.f32 %v2588, %v2589
      %v2591 = vsel %vm2561, %v2129, 0.0
      %v2592 = vadd.f32 %v2590, %v2591
      %v2593 = vsel %vm2561, %v2134, 0.0
      %v2594 = vadd.f32 %v2592, %v2593
      %v2595 = vsel %vm2561, %v2137, 0.0
      %v2596 = vadd.f32 %v2594, %v2595
      %v2597 = vsel %vm2561, %v2142, 0.0
      %v2598 = vadd.f32 %v2596, %v2597
      %v2599 = vsel %vm2561, %v2145, 0.0
      %v2600 = vadd.f32 %v2598, %v2599
      %v2601 = vsel %vm2561, %v2150, 0.0
      %v2602 = vadd.f32 %v2600, %v2601
      %v2603 = vsel %vm2561, %v2153, 0.0
      %v2604 = vadd.f32 %v2602, %v2603
      %v2605 = vsel %vm2561, %v2158, 0.0
      %v2606 = vadd.f32 %v2604, %v2605
      %v2607 = vsel %vm2561, %v2161, 0.0
      %v2608 = vadd.f32 %v2606, %v2607
      %v2609 = vsel %vm2561, %v2166, 0.0
      %v2610 = vadd.f32 %v2608, %v2609
      %v2611 = vsel %vm2561, %v2169, 0.0
      %v2612 = vadd.f32 %v2610, %v2611
      %v2613 = vsel %vm2561, %v2174, 0.0
      %v2614 = vadd.f32 %v2612, %v2613
      %v2615 = vsel %vm2561, %v2177, 0.0
      %v2616 = vadd.f32 %v2614, %v2615
      %v2617 = vsel %vm2561, %v2182, 0.0
      %v2618 = vadd.f32 %v2616, %v2617
      %v2619 = vsel %vm2561, %v2185, 0.0
      %v2620 = vadd.f32 %v2618, %v2619
      %v2621 = vsel %vm2561, %v2190, 0.0
      %v2622 = vadd.f32 %v2620, %v2621
      %v2623 = vsel %vm2561, %v2193, 0.0
      %v2624 = vadd.f32 %v2622, %v2623
      %v2625 = vrot.slane %v2624, 4
      %v2626 = vadd.f32 %v2624, %v2625
      %v2627 = vrot.slane %v2626, 2
      %v2628 = vadd.f32 %v2626, %v2627
      %v2629 = vrot.slane %v2628, 1
      %v2630 = vadd.f32 %v2628, %v2629
      %v2631 = vsel %vm2561, %v2297, 0.0
      %v2632 = vsel %vm2561, %v2298, 0.0
      %v2633 = vadd.f32 %v2631, %v2632
      %v2634 = vsel %vm2561, %v2299, 0.0
      %v2635 = vadd.f32 %v2633, %v2634
      %v2636 = vsel %vm2561, %v2300, 0.0
      %v2637 = vadd.f32 %v2635, %v2636
      %v2638 = vsel %vm2561, %v2301, 0.0
      %v2639 = vadd.f32 %v2637, %v2638
      %v2640 = vsel %vm2561, %v2302, 0.0
      %v2641 = vadd.f32 %v2639, %v2640
      %v2642 = vsel %vm2561, %v2303, 0.0
      %v2643 = vadd.f32 %v2641, %v2642
      %v2644 = vsel %vm2561, %v2304, 0.0
      %v2645 = vadd.f32 %v2643, %v2644
      %v2646 = vsel %vm2561, %v2305, 0.0
      %v2647 = vadd.f32 %v2645, %v2646
      %v2648 = vsel %vm2561, %v2306, 0.0
      %v2649 = vadd.f32 %v2647, %v2648
      %v2650 = vsel %vm2561, %v2307, 0.0
      %v2651 = vadd.f32 %v2649, %v2650
      %v2652 = vsel %vm2561, %v2308, 0.0
      %v2653 = vadd.f32 %v2651, %v2652
      %v2654 = vsel %vm2561, %v2309, 0.0
      %v2655 = vadd.f32 %v2653, %v2654
      %v2656 = vsel %vm2561, %v2310, 0.0
      %v2657 = vadd.f32 %v2655, %v2656
      %v2658 = vsel %vm2561, %v2311, 0.0
      %v2659 = vadd.f32 %v2657, %v2658
      %v2660 = vsel %vm2561, %v2312, 0.0
      %v2661 = vadd.f32 %v2659, %v2660
      %v2662 = vsel %vm2561, %v2313, 0.0
      %v2663 = vadd.f32 %v2661, %v2662
      %v2664 = vsel %vm2561, %v2314, 0.0
      %v2665 = vadd.f32 %v2663, %v2664
      %v2666 = vsel %vm2561, %v2315, 0.0
      %v2667 = vadd.f32 %v2665, %v2666
      %v2668 = vsel %vm2561, %v2316, 0.0
      %v2669 = vadd.f32 %v2667, %v2668
      %v2670 = vsel %vm2561, %v2317, 0.0
      %v2671 = vadd.f32 %v2669, %v2670
      %v2672 = vsel %vm2561, %v2318, 0.0
      %v2673 = vadd.f32 %v2671, %v2672
      %v2674 = vsel %vm2561, %v2319, 0.0
      %v2675 = vadd.f32 %v2673, %v2674
      %v2676 = vsel %vm2561, %v2320, 0.0
      %v2677 = vadd.f32 %v2675, %v2676
      %v2678 = vsel %vm2561, %v2321, 0.0
      %v2679 = vadd.f32 %v2677, %v2678
      %v2680 = vsel %vm2561, %v2322, 0.0
      %v2681 = vadd.f32 %v2679, %v2680
      %v2682 = vsel %vm2561, %v2323, 0.0
      %v2683 = vadd.f32 %v2681, %v2682
      %v2684 = vsel %vm2561, %v2324, 0.0
      %v2685 = vadd.f32 %v2683, %v2684
      %v2686 = vsel %vm2561, %v2325, 0.0
      %v2687 = vadd.f32 %v2685, %v2686
      %v2688 = vsel %vm2561, %v2326, 0.0
      %v2689 = vadd.f32 %v2687, %v2688
      %v2690 = vsel %vm2561, %v2327, 0.0
      %v2691 = vadd.f32 %v2689, %v2690
      %v2692 = vsel %vm2561, %v2328, 0.0
      %v2693 = vadd.f32 %v2691, %v2692
      %v2694 = vrot.slane %v2693, 4
      %v2695 = vadd.f32 %v2693, %v2694
      %v2696 = vrot.slane %v2695, 2
      %v2697 = vadd.f32 %v2695, %v2696
      %v2698 = vrot.slane %v2697, 1
      %v2699 = vadd.f32 %v2697, %v2698
      %2701 = vrot.lane.b32.xlu0 %v2630, 120
      %v2702 = vpop.permute.xlu0 %2701
      %2704 = vst.msk [vmem:[%s257] sm:$0x1] %vm2398, %v2702
      %2706 = vrot.lane.b32.xlu0 %v2699, 120
      %v2707 = vpop.permute.xlu0 %2706
      %2709 = vst.msk [vmem:[%s257 + $0x1] sm:$0x1] %vm2398, %v2707
      %p2710 = scmp.lt.s32.totalorder %s17, 1
      %s2711 = scalar_select %p2710, %s17, 1
      %s2712 = smul.addr %s2711, 32
      %s2713 = smul.addr %s2712, 8
      %s2714 = scalar_lea.vmem %s2, %s2713
      %p2715 = scmp.lt.s32.totalorder %s17, 1
      %s2716 = scalar_select %p2715, %s17, 1
      %s2717 = smul.addr %s2716, 32
      %s2718 = smul.addr %s2717, 8
      %s2719 = scalar_lea.vmem %s3, %s2718
      %p2720 = scmp.lt.s32.totalorder %s17, 1
      %s2721 = scalar_select %p2720, %s17, 1
      %s2722 = smul.addr %s2721, 2
      %s2723 = scalar_lea.vmem %s4, %s2722
      %p2724 = scmp.lt.s32.totalorder %s17, 1
      %s2725 = scalar_select %p2724, %s17, 1
      %s2726 = smul.addr %s2725, 2
      %s2727 = scalar_lea.vmem %s5, %s2726
      // Predicated region
      $region29: #{basic_block.3} parent=27 // pred_check
        %p2728 = pneg %p82
      $region30: #{basic_block.3} parent=27 // pred_check_branch
        %2730 = sbr.rel (%p2728) target = $region32
      $region31: #{basic_block.3} parent=27 // pred_region
        _
      $region32: #{basic_block.3} parent=27 // pred_fallthru
        _
      // Predicated region
      $region33: #{basic_block.3} parent=27 // pred_check
        %p2731 = pneg %p108
      $region34: #{basic_block.3} parent=27 // pred_check_branch
        %2733 = sbr.rel (%p2731) target = $region36
      $region35: #{basic_block.3} parent=27 // pred_region
        _
      $region36: #{basic_block.3} parent=27 // pred_fallthru
        _
      // Predicated region
      $region37: #{basic_block.3} parent=27 // pred_check
        %p2734 = pneg %p134
      $region38: #{basic_block.3} parent=27 // pred_check_branch
        %2736 = sbr.rel (%p2734) target = $region40
      $region39: #{basic_block.3} parent=27 // pred_region
        _
      $region40: #{basic_block.3} parent=27 // pred_fallthru
        _
      // Predicated region
      $region41: #{basic_block.3} parent=27 // pred_check
        %p2737 = pneg %p160
      $region42: #{basic_block.3} parent=27 // pred_check_branch
        %2739 = sbr.rel (%p2737) target = $region44
      $region43: #{basic_block.3} parent=27 // pred_region
        _
      $region44: #{basic_block.3} parent=27 // pred_fallthru
        _
    $region28: #{basic_block.3} parent=5 // pred_fallthru
      _
    %p2740 = scmp.le.s32.totalorder 2, %s12
    // Predicated region
    $region45: #{basic_block.3} parent=5 // pred_check
      %p2741 = pneg %p2740
    $region46: #{basic_block.3} parent=5 // pred_check_branch
      %2743 = sbr.rel (%p2741) target = $region48
    $region47: #{basic_block.3} parent=5 // pred_region
      %s2744 = ssub.s32 %s12, 2
      // Predicated region
      $region49: #{basic_block.3} parent=47 // pred_check
        %p2745 = pneg %p88
      $region50: #{basic_block.3} parent=47 // pred_check_branch
        %2747 = sbr.rel (%p2745) target = $region52
      $region51: #{basic_block.3} parent=47 // pred_region
        %p2748 = scmp.lt.s32.totalorder %s18, 1
        %s2749 = scalar_select %p2748, %s18, 1
        %s2750 = smul.addr %s2749, 32
        %s2751 = smul.addr %s2750, 8
        %s2752 = scalar_lea.vmem %s2, %s2751
      $region52: #{basic_block.3} parent=47 // pred_fallthru
        _
      // Predicated region
      $region53: #{basic_block.3} parent=47 // pred_check
        %p2753 = pneg %p114
      $region54: #{basic_block.3} parent=47 // pred_check_branch
        %2755 = sbr.rel (%p2753) target = $region56
      $region55: #{basic_block.3} parent=47 // pred_region
        %p2756 = scmp.lt.s32.totalorder %s18, 1
        %s2757 = scalar_select %p2756, %s18, 1
        %s2758 = smul.addr %s2757, 32
        %s2759 = smul.addr %s2758, 8
        %s2760 = scalar_lea.vmem %s3, %s2759
      $region56: #{basic_block.3} parent=47 // pred_fallthru
        _
      // Predicated region
      $region57: #{basic_block.3} parent=47 // pred_check
        %p2761 = pneg %p140
      $region58: #{basic_block.3} parent=47 // pred_check_branch
        %2763 = sbr.rel (%p2761) target = $region60
      $region59: #{basic_block.3} parent=47 // pred_region
        %p2764 = scmp.lt.s32.totalorder %s18, 1
        %s2765 = scalar_select %p2764, %s18, 1
        %s2766 = smul.addr %s2765, 2
        %s2767 = scalar_lea.vmem %s4, %s2766
      $region60: #{basic_block.3} parent=47 // pred_fallthru
        _
      // Predicated region
      $region61: #{basic_block.3} parent=47 // pred_check
        %p2768 = pneg %p166
      $region62: #{basic_block.3} parent=47 // pred_check_branch
        %2770 = sbr.rel (%p2768) target = $region64
      $region63: #{basic_block.3} parent=47 // pred_region
        %p2771 = scmp.lt.s32.totalorder %s18, 1
        %s2772 = scalar_select %p2771, %s18, 1
        %s2773 = smul.addr %s2772, 2
        %s2774 = scalar_lea.vmem %s5, %s2773
      $region64: #{basic_block.3} parent=47 // pred_fallthru
        _
    $region48: #{basic_block.3} parent=5 // pred_fallthru
      _
  $region6: #{basic_block.3} parent=0 // loop_footer
    %s16 = sadd.s32 1, %s12
  $region7: #{basic_block.3} parent=0 // loop_footer_branch
    %11 = sbr.rel target = $region3
  $region8: #{basic_block.3} parent=0 // loop_exit
    _

</llo_original>
